<compile_context>
chip_gen: v7x
topology: tpu7x:2x2x1
jax: 0.10.0
libtpu: 0.0.40
codegen_flags: <defaults>
</compile_context>

<pallas_src>
import functools

import jax
import jax.numpy as jnp
from jax.experimental import pallas as pl
from jax.experimental.pallas import tpu as pltpu


def _round_up(n, m):
    return ((n + m - 1) // m) * m


def _fs_ae_kernel(x_ref, we_ref, wd_ref, bias_ref, o1_ref, o2_ref):
    """Fused two-branch linear autoencoder forward for one batch tile.

    x_ref    : [TB, F]        input tile (unpadded features)
    we_ref   : [F, 2*Kp]      [exp(w)*We.T | mask*exp(w)*We.T]
    wd_ref   : [2*Kp, 2*Fp]   block-diagonal [[Wd.T, 0], [0, Wd.T]]
    bias_ref : [1, 2*Fp]      (enc_b @ Wd.T + dec_b) replicated in both halves
    o1_ref   : [TB, F]        Decoder(Encoder(x * exp(w)))
    o2_ref   : [TB, F]        Decoder(Encoder(x * mask * exp(w)))
    """
    F = o1_ref.shape[1]
    Fp = wd_ref.shape[1] // 2

    x = x_ref[...]

    # Encoder for BOTH branches in a single MXU pass -> [TB, 2*Kp].
    y = jnp.dot(x, we_ref[...], preferred_element_type=jnp.float32)
    y = y.astype(wd_ref.dtype)

    # Decoder for BOTH branches in a single MXU pass -> [TB, 2*Fp];
    # folded (encoder-through-decoder) bias added once, in f32.
    out = jnp.dot(y, wd_ref[...], preferred_element_type=jnp.float32)
    out = out + bias_ref[...]

    o1_ref[...] = out[:, :F].astype(o1_ref.dtype)
    o2_ref[...] = out[:, Fp:Fp + F].astype(o2_ref.dtype)


def fs_autoencoder_forward(x, fs_weight, enc_w, enc_b, dec_w, dec_b, k_select,
                           *, tb=128, compute_dtype=jnp.float32,
                           out_dtype=None):
    """Pallas implementation of model.forward(x, k).

    x         : [B, F] float32
    fs_weight : [F]    feature_selection.weight
    enc_w     : [K, F] encoder.fc1.weight (PyTorch layout)
    enc_b     : [K]    encoder.fc1.bias
    dec_w     : [F, K] decoder.fc1.weight (PyTorch layout)
    dec_b     : [F]    decoder.fc1.bias
    k_select  : int    number of features kept by the top-k mask
    returns (out1, out2), each [B, F].
    """
    B, F = x.shape
    K = enc_w.shape[0]
    out_dtype = x.dtype if out_dtype is None else out_dtype

    # --- host-side weight folding (plain JAX, tiny arrays) -------------------
    w1 = jnp.exp(fs_weight)                                   # [F]
    _, top_idx = jax.lax.top_k(fs_weight, k_select)
    mask = jnp.zeros((F,), fs_weight.dtype).at[top_idx].set(1.0)

    # (x * w1)      @ We.T == x @ (w1[:,None]   * We.T)
    # (x * mask*w1) @ We.T == x @ ((mask*w1)[:,None] * We.T)
    we1 = w1[:, None] * enc_w.T                               # [F, K]
    we2 = (mask * w1)[:, None] * enc_w.T                      # [F, K]

    Kp = _round_up(K, 64)         # 2*Kp is a multiple of 128 -> lane dense
    Fp = _round_up(F, 128)        # out2 slice starts on a lane-tile boundary

    we_both = jnp.zeros((F, 2 * Kp), compute_dtype)
    we_both = we_both.at[:, :K].set(we1.astype(compute_dtype))
    we_both = we_both.at[:, Kp:Kp + K].set(we2.astype(compute_dtype))

    wd = dec_w.T                                              # [K, F]
    wd_bd = jnp.zeros((2 * Kp, 2 * Fp), compute_dtype)
    wd_bd = wd_bd.at[:K, :F].set(wd.astype(compute_dtype))
    wd_bd = wd_bd.at[Kp:Kp + K, Fp:Fp + F].set(wd.astype(compute_dtype))

    # Encoder bias folded through the decoder (exact for this linear stack):
    #   (x@We + be)@Wd + bd == x@We@Wd + (be@Wd + bd)
    bias_f = (enc_b.astype(jnp.float32) @ dec_w.T.astype(jnp.float32)
              + dec_b.astype(jnp.float32))                    # [F]
    bias_both = jnp.zeros((1, 2 * Fp), jnp.float32)
    bias_both = bias_both.at[0, :F].set(bias_f)
    bias_both = bias_both.at[0, Fp:Fp + F].set(bias_f)

    # --- batch tiling: no padding when tb | B (the common case) --------------
    tb = max(8, _round_up(min(tb, B), 8))
    Bp = _round_up(B, tb)
    x_c = x.astype(compute_dtype)
    if Bp != B:
        x_c = jnp.zeros((Bp, F), compute_dtype).at[:B].set(x_c)

    grid = (Bp // tb,)

    out1, out2 = pl.pallas_call(
        _fs_ae_kernel,
        out_shape=(jax.ShapeDtypeStruct((Bp, F), out_dtype),
                   jax.ShapeDtypeStruct((Bp, F), out_dtype)),
        grid_spec=pltpu.PrefetchScalarGridSpec(
            num_scalar_prefetch=0,
            grid=grid,
            in_specs=[
                pl.BlockSpec((tb, F), lambda i: (i, 0)),           # x tile
                pl.BlockSpec((F, 2 * Kp), lambda i: (0, 0)),       # enc (2 br)
                pl.BlockSpec((2 * Kp, 2 * Fp), lambda i: (0, 0)),  # dec blockdiag
                pl.BlockSpec((1, 2 * Fp), lambda i: (0, 0)),       # folded bias
            ],
            out_specs=[
                pl.BlockSpec((tb, F), lambda i: (i, 0)),
                pl.BlockSpec((tb, F), lambda i: (i, 0)),
            ],
        ),
        compiler_params=pltpu.CompilerParams(
            dimension_semantics=("parallel",),
            vmem_limit_bytes=32 * 1024 * 1024,
        ),
    )(x_c, we_both, wd_bd, bias_both)

    if Bp != B:
        out1, out2 = out1[:B], out2[:B]
    return out1, out2


def _xavier_uniform(key, fan_out, fan_in, dtype=jnp.float32):
    limit = jnp.sqrt(6.0 / (fan_in + fan_out))
    return jax.random.uniform(key, (fan_out, fan_in), dtype=dtype,
                              minval=-limit, maxval=limit)


def init_params(key, feature_num, k):
    """Deterministic parameter init matching the PyTorch module's shapes."""
    k_fs, k_ew, k_eb, k_dw, k_db = jax.random.split(key, 5)
    # feature_selection.weight = torch.rand(F) / 1e6
    fs_weight = jax.random.uniform(k_fs, (feature_num,), dtype=jnp.float32) / 1e6
    # encoder.fc1: Linear(F, K), xavier_uniform weight, default-uniform bias
    enc_w = _xavier_uniform(k_ew, k, feature_num)
    enc_b = jax.random.uniform(k_eb, (k,), dtype=jnp.float32,
                               minval=-1.0 / jnp.sqrt(feature_num),
                               maxval=1.0 / jnp.sqrt(feature_num))
    # decoder.fc1: Linear(K, F), xavier_uniform weight, default-uniform bias
    dec_w = _xavier_uniform(k_dw, feature_num, k)
    dec_b = jax.random.uniform(k_db, (feature_num,), dtype=jnp.float32,
                               minval=-1.0 / jnp.sqrt(k),
                               maxval=1.0 / jnp.sqrt(k))
    return fs_weight, enc_w, enc_b, dec_w, dec_b


def reference_forward(x, fs_weight, enc_w, enc_b, dec_w, dec_b, k_select):
    """Pure-JAX reference mirroring the PyTorch forward (linear-only)."""
    w1 = jnp.exp(fs_weight)
    _, top_idx = jax.lax.top_k(fs_weight, k_select)
    mask = jnp.zeros_like(fs_weight).at[top_idx].set(1.0)
    w2 = mask * w1
    x1 = x * w1
    x2 = x * w2
    y1 = x1 @ enc_w.T + enc_b
    y2 = x2 @ enc_w.T + enc_b
    out1 = y1 @ dec_w.T + dec_b
    out2 = y2 @ dec_w.T + dec_b
    return out1, out2


if __name__ == "__main__":
    # Shapes consistent with the module (MNIST: feature_num=784).
    # B=512 with tb=128 -> grid=(4,): >=2 pipelined steps per core on v7x.
    B, F, K, K_SELECT = 512, 784, 64, 50

    key = jax.random.PRNGKey(0)
    k_x, k_p = jax.random.split(key)
    x = jax.random.uniform(k_x, (B, F), dtype=jnp.float32)
    fs_weight, enc_w, enc_b, dec_w, dec_b = init_params(k_p, F, K)

    ref1, ref2 = reference_forward(x, fs_weight, enc_w, enc_b,
                                   dec_w, dec_b, K_SELECT)

    # f32 path (tight numerical check).
    fwd = jax.jit(functools.partial(fs_autoencoder_forward,
                                    k_select=K_SELECT, tb=128))
    out1, out2 = fwd(x, fs_weight, enc_w, enc_b, dec_w, dec_b)
    out1 = jax.block_until_ready(out1)
    out2 = jax.block_until_ready(out2)
    assert out1.shape == (B, F) and out2.shape == (B, F)
    assert jnp.allclose(out1, ref1, atol=2e-4, rtol=2e-4)
    assert jnp.allclose(out2, ref2, atol=2e-4, rtol=2e-4)

    # bf16 matmul path (MXU-native on v5e/v6e/v7x); loose tolerance vs f32 ref.
    fwd_bf16 = jax.jit(functools.partial(fs_autoencoder_forward,
                                         k_select=K_SELECT, tb=128,
                                         compute_dtype=jnp.bfloat16))
    b1, b2 = fwd_bf16(x, fs_weight, enc_w, enc_b, dec_w, dec_b)
    b1 = jax.block_until_ready(b1)
    b2 = jax.block_until_ready(b2)
    assert jnp.allclose(b1, ref1, atol=1e-1, rtol=1e-1)
    assert jnp.allclose(b2, ref2, atol=1e-1, rtol=1e-1)

    print("KERNEL_OK")
</pallas_src>

<mosaic_0001>
module attributes {stable_mosaic.version = 11 : i64} {
  func.func @_fs_ae_kernel(%arg0: i32, %arg1: memref<128x784xf32, #tpu.memory_space<vmem>>, %arg2: memref<784x128xf32, #tpu.memory_space<vmem>>, %arg3: memref<128x1792xf32, #tpu.memory_space<vmem>>, %arg4: memref<1x1792xf32, #tpu.memory_space<vmem>>, %arg5: memref<128x784xf32, #tpu.memory_space<vmem>>, %arg6: memref<128x784xf32, #tpu.memory_space<vmem>>) attributes {dimension_semantics = [#tpu.dimension_semantics<parallel>], iteration_bounds = array<i64: 4>, scalar_prefetch = 0 : i64, scratch_operands = 0 : i64, tpu.core_type = #tpu.core_type<tc>, window_params = [{transform_indices = @transform_0, window_bounds = array<i64: 128, 784>}, {pipeline_mode = #tpu.pipeline_mode<synchronous>, transform_indices = @transform_1, window_bounds = array<i64: 784, 128>}, {pipeline_mode = #tpu.pipeline_mode<synchronous>, transform_indices = @transform_2, window_bounds = array<i64: 128, 1792>}, {pipeline_mode = #tpu.pipeline_mode<synchronous>, transform_indices = @transform_3, window_bounds = array<i64: 1, 1792>}, {transform_indices = @transform_4, window_bounds = array<i64: 128, 784>}, {transform_indices = @transform_5, window_bounds = array<i64: 128, 784>}]} {
    %c0 = arith.constant 0 : index
    %c0_0 = arith.constant 0 : index
    %0 = vector.load %arg1[%c0, %c0_0] : memref<128x784xf32, #tpu.memory_space<vmem>>, vector<128x784xf32>
    %c0_1 = arith.constant 0 : index
    %c0_2 = arith.constant 0 : index
    %1 = vector.load %arg2[%c0_1, %c0_2] : memref<784x128xf32, #tpu.memory_space<vmem>>, vector<784x128xf32>
    %cst = arith.constant dense<0.000000e+00> : vector<128x128xf32>
    %2 = tpu.matmul %0, %1, %cst {dimension_numbers = #tpu.dot_dimension_numbers<[1], [0], [0], [1], [0, 0, 1, 1], [], []>} : vector<128x784xf32>, vector<784x128xf32>, vector<128x128xf32> -> vector<128x128xf32>
    %c0_3 = arith.constant 0 : index
    %c0_4 = arith.constant 0 : index
    %3 = vector.load %arg3[%c0_3, %c0_4] : memref<128x1792xf32, #tpu.memory_space<vmem>>, vector<128x1792xf32>
    %cst_5 = arith.constant dense<0.000000e+00> : vector<128x1792xf32>
    %4 = tpu.matmul %2, %3, %cst_5 {dimension_numbers = #tpu.dot_dimension_numbers<[1], [0], [0], [1], [0, 0, 1, 1], [], []>} : vector<128x128xf32>, vector<128x1792xf32>, vector<128x1792xf32> -> vector<128x1792xf32>
    %c0_6 = arith.constant 0 : index
    %c0_7 = arith.constant 0 : index
    %5 = vector.load %arg4[%c0_6, %c0_7] : memref<1x1792xf32, #tpu.memory_space<vmem>>, vector<1x1792xf32>
    %6 = vector.broadcast %5 : vector<1x1792xf32> to vector<128x1792xf32>
    %7 = arith.addf %4, %6 : vector<128x1792xf32>
    %8 = vector.extract_strided_slice %7 {offsets = [0, 0], sizes = [128, 784], strides = [1, 1]} : vector<128x1792xf32> to vector<128x784xf32>
    %c0_8 = arith.constant 0 : index
    %c0_9 = arith.constant 0 : index
    %9 = vector.load %arg5[%c0_8, %c0_9] : memref<128x784xf32, #tpu.memory_space<vmem>>, vector<128x784xf32>
    tpu.vector_store %arg5[%c0_8, %c0_9], %8 {strides = array<i32>} : memref<128x784xf32, #tpu.memory_space<vmem>>, vector<128x784xf32>,
    %10 = vector.extract_strided_slice %7 {offsets = [0, 896], sizes = [128, 784], strides = [1, 1]} : vector<128x1792xf32> to vector<128x784xf32>
    %c0_10 = arith.constant 0 : index
    %c0_11 = arith.constant 0 : index
    %11 = vector.load %arg6[%c0_10, %c0_11] : memref<128x784xf32, #tpu.memory_space<vmem>>, vector<128x784xf32>
    tpu.vector_store %arg6[%c0_10, %c0_11], %10 {strides = array<i32>} : memref<128x784xf32, #tpu.memory_space<vmem>>, vector<128x784xf32>,
    return
  }
  func.func @transform_0(%arg0: i32) -> (i32, i32) {
    %c0_i32 = arith.constant 0 : i32
    %c0_i32_0 = arith.constant 0 : i32
    return %arg0, %c0_i32 : i32, i32
  }
  func.func @transform_1(%arg0: i32) -> (i32, i32) {
    %c0_i32 = arith.constant 0 : i32
    %c0_i32_0 = arith.constant 0 : i32
    %c0_i32_1 = arith.constant 0 : i32
    return %c0_i32, %c0_i32_0 : i32, i32
  }
  func.func @transform_2(%arg0: i32) -> (i32, i32) {
    %c0_i32 = arith.constant 0 : i32
    %c0_i32_0 = arith.constant 0 : i32
    %c0_i32_1 = arith.constant 0 : i32
    return %c0_i32, %c0_i32_0 : i32, i32
  }
  func.func @transform_3(%arg0: i32) -> (i32, i32) {
    %c0_i32 = arith.constant 0 : i32
    %c0_i32_0 = arith.constant 0 : i32
    %c0_i32_1 = arith.constant 0 : i32
    return %c0_i32, %c0_i32_0 : i32, i32
  }
  func.func @transform_4(%arg0: i32) -> (i32, i32) {
    %c0_i32 = arith.constant 0 : i32
    %c0_i32_0 = arith.constant 0 : i32
    return %arg0, %c0_i32 : i32, i32
  }
  func.func @transform_5(%arg0: i32) -> (i32, i32) {
    %c0_i32 = arith.constant 0 : i32
    %c0_i32_0 = arith.constant 0 : i32
    return %arg0, %c0_i32 : i32, i32
  }
}

</mosaic_0001>

<llo_original>
// kernel: fs_autoencoder_forward.1
$region0: #{fs_autoencoder_forward.1}
  #allocation0 [shape = 'u32[]', space=smem, size = 0x4, offset = 0x4, fixed_abs, tag = 'smem constant byte address 0x4 - core index']
  #allocation1 [shape = 'u32[144,128]{1,0:T(1,128)}', space=vmem, size = 0x12000, scoped, tag = 'internal scratch']
  %s0 = inlined_call_operand.vmem [shape: f32[512,784], index: 0, kind: input, shape index: {}]
  %s1 = inlined_call_operand.vmem [shape: f32[784,128], index: 1, kind: input, shape index: {}]
  %s2 = inlined_call_operand.vmem [shape: f32[128,1792], index: 2, kind: input, shape index: {}]
  %s3 = inlined_call_operand.vmem [shape: f32[1,1792], index: 3, kind: input, shape index: {}]
  %s4 = inlined_call_operand.vmem [shape: f32[512,784], index: 4, kind: output, shape index: {0}]
  %s5 = inlined_call_operand.vmem [shape: f32[512,784], index: 5, kind: output, shape index: {1}]
  %6 = xla_tuple %s4, %s5
  %s7 = sld [smem:[#allocation0]]
  $region57: #{fs_autoencoder_forward.1} parent=0
    _
  %s9 = ssub.s32 1, %s7
  %s10 = scalar_select 0, %s9, %s7
  loop: start=0, step=1, limit=6
  $region2: #{fs_autoencoder_forward.1} parent=0 // loop_pre_header
    _
  $region3: #{fs_autoencoder_forward.1} parent=0 // loop_header
    %s12 = sphi 0, %s16
    %p13 = scmp.ge.s32.totalorder %s12, 6
    %s22 = sphi 0, %s24
    %s25 = sphi 0, %s22
    %s26 = sphi 0, %s25
    %s42 = sphi 0, %s26
    %s46 = sphi 0, %s46
    %s48 = sphi 0, %s46
    %s49 = sphi 0, %s48
    %s63 = sphi 0, %s49
    %s67 = sphi 0, %s67
    %s69 = sphi 0, %s67
    %s70 = sphi 0, %s69
    %s84 = sphi 0, %s70
    %s88 = sphi 0, %s88
    %s90 = sphi 0, %s88
    %s91 = sphi 0, %s90
    %s105 = sphi 0, %s91
    %s111 = sphi 0, %s113
    %s114 = sphi 0, %s111
    %s115 = sphi 0, %s114
    %s131 = sphi 0, %s115
    %s137 = sphi 0, %s139
    %s140 = sphi 0, %s137
    %s141 = sphi 0, %s140
    %s157 = sphi 0, %s141
  $region4: #{fs_autoencoder_forward.1} parent=0 // loop_header_branch
    %15 = sbr.rel (%p13) target = $region8
  $region5: #{fs_autoencoder_forward.1} parent=0 // loop_body
    %s17 = ssub.s32 %s12, 1
    %s18 = ssub.s32 %s12, 2
    %s19 = sadd.s32 %s12, 1
    %s20 = ssub.s32 %s12, %s19
    %p21 = scmp.eq.s32.totalorder %s20, 0
    %s23 = sadd.s32 %s22, 1
    %s24 = scalar_select %p21, %s22, %s23
    %p27 = pneg %p21
    %p28 = scmp.eq.s32.totalorder %s12, 3
    %p29 = por %p27, %p28
    %p30 = scmp.ne.s32.totalorder %s22, %s25
    %p31 = scmp.eq.s32.totalorder %s12, 0
    %p32 = por %p30, %p31
    %p33 = scmp.ne.s32.totalorder %s22, %s25
    %p34 = scmp.eq.s32.totalorder %s17, 3
    %p35 = por %p33, %p34
    %p36 = scmp.ne.s32.totalorder %s25, %s26
    %p37 = scmp.eq.s32.totalorder %s17, 0
    %p38 = por %p36, %p37
    %p39 = scmp.ne.s32.totalorder %s25, %s26
    %p40 = scmp.eq.s32.totalorder %s18, 3
    %p41 = por %p39, %p40
    %p43 = scmp.ne.s32.totalorder %s26, %s42
    %p44 = scmp.eq.s32.totalorder %s18, 0
    %p45 = por %p43, %p44
    %s47 = sadd.s32 %s46, 1
    %p50 = scmp.eq.s32.totalorder %s12, 3
    %p51 = scmp.ne.s32.totalorder %s46, %s48
    %p52 = scmp.eq.s32.totalorder %s12, 0
    %p53 = por %p51, %p52
    %p54 = scmp.ne.s32.totalorder %s46, %s48
    %p55 = scmp.eq.s32.totalorder %s17, 3
    %p56 = por %p54, %p55
    %p57 = scmp.ne.s32.totalorder %s48, %s49
    %p58 = scmp.eq.s32.totalorder %s17, 0
    %p59 = por %p57, %p58
    %p60 = scmp.ne.s32.totalorder %s48, %s49
    %p61 = scmp.eq.s32.totalorder %s18, 3
    %p62 = por %p60, %p61
    %p64 = scmp.ne.s32.totalorder %s49, %s63
    %p65 = scmp.eq.s32.totalorder %s18, 0
    %p66 = por %p64, %p65
    %s68 = sadd.s32 %s67, 1
    %p71 = scmp.eq.s32.totalorder %s12, 3
    %p72 = scmp.ne.s32.totalorder %s67, %s69
    %p73 = scmp.eq.s32.totalorder %s12, 0
    %p74 = por %p72, %p73
    %p75 = scmp.ne.s32.totalorder %s67, %s69
    %p76 = scmp.eq.s32.totalorder %s17, 3
    %p77 = por %p75, %p76
    %p78 = scmp.ne.s32.totalorder %s69, %s70
    %p79 = scmp.eq.s32.totalorder %s17, 0
    %p80 = por %p78, %p79
    %p81 = scmp.ne.s32.totalorder %s69, %s70
    %p82 = scmp.eq.s32.totalorder %s18, 3
    %p83 = por %p81, %p82
    %p85 = scmp.ne.s32.totalorder %s70, %s84
    %p86 = scmp.eq.s32.totalorder %s18, 0
    %p87 = por %p85, %p86
    %s89 = sadd.s32 %s88, 1
    %p92 = scmp.eq.s32.totalorder %s12, 3
    %p93 = scmp.ne.s32.totalorder %s88, %s90
    %p94 = scmp.eq.s32.totalorder %s12, 0
    %p95 = por %p93, %p94
    %p96 = scmp.ne.s32.totalorder %s88, %s90
    %p97 = scmp.eq.s32.totalorder %s17, 3
    %p98 = por %p96, %p97
    %p99 = scmp.ne.s32.totalorder %s90, %s91
    %p100 = scmp.eq.s32.totalorder %s17, 0
    %p101 = por %p99, %p100
    %p102 = scmp.ne.s32.totalorder %s90, %s91
    %p103 = scmp.eq.s32.totalorder %s18, 3
    %p104 = por %p102, %p103
    %p106 = scmp.ne.s32.totalorder %s91, %s105
    %p107 = scmp.eq.s32.totalorder %s18, 0
    %p108 = por %p106, %p107
    %s109 = ssub.s32 %s12, %s19
    %p110 = scmp.eq.s32.totalorder %s109, 0
    %s112 = sadd.s32 %s111, 1
    %s113 = scalar_select %p110, %s111, %s112
    %p116 = pneg %p110
    %p117 = scmp.eq.s32.totalorder %s12, 3
    %p118 = por %p116, %p117
    %p119 = scmp.ne.s32.totalorder %s111, %s114
    %p120 = scmp.eq.s32.totalorder %s12, 0
    %p121 = por %p119, %p120
    %p122 = scmp.ne.s32.totalorder %s111, %s114
    %p123 = scmp.eq.s32.totalorder %s17, 3
    %p124 = por %p122, %p123
    %p125 = scmp.ne.s32.totalorder %s114, %s115
    %p126 = scmp.eq.s32.totalorder %s17, 0
    %p127 = por %p125, %p126
    %p128 = scmp.ne.s32.totalorder %s114, %s115
    %p129 = scmp.eq.s32.totalorder %s18, 3
    %p130 = por %p128, %p129
    %p132 = scmp.ne.s32.totalorder %s115, %s131
    %p133 = scmp.eq.s32.totalorder %s18, 0
    %p134 = por %p132, %p133
    %s135 = ssub.s32 %s12, %s19
    %p136 = scmp.eq.s32.totalorder %s135, 0
    %s138 = sadd.s32 %s137, 1
    %s139 = scalar_select %p136, %s137, %s138
    %p142 = pneg %p136
    %p143 = scmp.eq.s32.totalorder %s12, 3
    %p144 = por %p142, %p143
    %p145 = scmp.ne.s32.totalorder %s137, %s140
    %p146 = scmp.eq.s32.totalorder %s12, 0
    %p147 = por %p145, %p146
    %p148 = scmp.ne.s32.totalorder %s137, %s140
    %p149 = scmp.eq.s32.totalorder %s17, 3
    %p150 = por %p148, %p149
    %p151 = scmp.ne.s32.totalorder %s140, %s141
    %p152 = scmp.eq.s32.totalorder %s17, 0
    %p153 = por %p151, %p152
    %p154 = scmp.ne.s32.totalorder %s140, %s141
    %p155 = scmp.eq.s32.totalorder %s18, 3
    %p156 = por %p154, %p155
    %p158 = scmp.ne.s32.totalorder %s141, %s157
    %p159 = scmp.eq.s32.totalorder %s18, 0
    %p160 = por %p158, %p159
    %p161 = scmp.le.s32.totalorder 1, %s12
    %p162 = scmp.lt.s32.totalorder %s12, 5
    %p163 = pnand %p161, %p162
    %p164 = pneg %p163
    // Predicated region
    $region9: #{fs_autoencoder_forward.1} parent=5 // pred_check
      _
    $region10: #{fs_autoencoder_forward.1} parent=5 // pred_check_branch
      %166 = sbr.rel (%p163) target = $region12
    $region11: #{fs_autoencoder_forward.1} parent=5 // pred_region
      %s167 = ssub.s32 %s12, 1
      // Predicated region
      $region13: #{fs_autoencoder_forward.1} parent=11 // pred_check
        %p168 = pneg %p59
      $region14: #{fs_autoencoder_forward.1} parent=11 // pred_check_branch
        %170 = sbr.rel (%p168) target = $region16
      $region15: #{fs_autoencoder_forward.1} parent=11 // pred_region
        _
      $region16: #{fs_autoencoder_forward.1} parent=11 // pred_fallthru
        _
      // Predicated region
      $region17: #{fs_autoencoder_forward.1} parent=11 // pred_check
        %p171 = pneg %p80
      $region18: #{fs_autoencoder_forward.1} parent=11 // pred_check_branch
        %173 = sbr.rel (%p171) target = $region20
      $region19: #{fs_autoencoder_forward.1} parent=11 // pred_region
        _
      $region20: #{fs_autoencoder_forward.1} parent=11 // pred_fallthru
        _
      // Predicated region
      $region21: #{fs_autoencoder_forward.1} parent=11 // pred_check
        %p174 = pneg %p101
      $region22: #{fs_autoencoder_forward.1} parent=11 // pred_check_branch
        %176 = sbr.rel (%p174) target = $region24
      $region23: #{fs_autoencoder_forward.1} parent=11 // pred_region
        _
      $region24: #{fs_autoencoder_forward.1} parent=11 // pred_fallthru
        _
    $region12: #{fs_autoencoder_forward.1} parent=5 // pred_fallthru
      _
    %p177 = scmp.lt.s32.totalorder %s12, 4
    // Predicated region
    $region25: #{fs_autoencoder_forward.1} parent=5 // pred_check
      %p178 = pneg %p177
    $region26: #{fs_autoencoder_forward.1} parent=5 // pred_check_branch
      %180 = sbr.rel (%p178) target = $region28
    $region27: #{fs_autoencoder_forward.1} parent=5 // pred_region
      // Predicated region
      $region29: #{fs_autoencoder_forward.1} parent=27 // pred_check
        %p181 = pneg %p32
      $region30: #{fs_autoencoder_forward.1} parent=27 // pred_check_branch
        %183 = sbr.rel (%p181) target = $region32
      $region31: #{fs_autoencoder_forward.1} parent=27 // pred_region
        %s184 = smul.u32 16, %s12
        %p185 = scmp.lt.s32.totalorder %s184, 63
        %s186 = scalar_select %p185, %s184, 63
        %s187 = smul.addr %s186, 7
        %s188 = smul.addr %s187, 8
        %s189 = scalar_lea.vmem %s0, %s188
        %s190 = smul.u32 16, %s12
      $region32: #{fs_autoencoder_forward.1} parent=27 // pred_fallthru
        _
    $region28: #{fs_autoencoder_forward.1} parent=5 // pred_fallthru
      _
    %p191 = scmp.le.s32.totalorder 1, %s12
    %p192 = scmp.lt.s32.totalorder %s12, 5
    %p193 = pnand %p191, %p192
    %p194 = pneg %p193
    // Predicated region
    $region33: #{fs_autoencoder_forward.1} parent=5 // pred_check
      _
    $region34: #{fs_autoencoder_forward.1} parent=5 // pred_check_branch
      %196 = sbr.rel (%p193) target = $region36
    $region35: #{fs_autoencoder_forward.1} parent=5 // pred_region
      %s197 = ssub.s32 %s12, 1
      %s198 = smul.u32 16, %s17
      %p199 = scmp.lt.s32.totalorder %s198, 63
      %s200 = scalar_select %p199, %s198, 63
      %s201 = smul.addr %s200, 7
      %s202 = smul.addr %s201, 8
      %s203 = scalar_lea.vmem %s0, %s202
      %p204 = pneg %p38
      %p205 = pneg %p35
      %p206 = pneg %p59
      %p207 = pneg %p56
      %p208 = pneg %p80
      %p209 = pneg %p77
      %p210 = pneg %p101
      %p211 = pneg %p98
      %p212 = pneg %p127
      %p213 = pneg %p124
      %s214 = smul.u32 16, %s17
      %p215 = scmp.lt.s32.totalorder %s214, 63
      %s216 = scalar_select %p215, %s214, 63
      %s217 = smul.addr %s216, 7
      %s218 = smul.addr %s217, 8
      %s219 = scalar_lea.vmem %s4, %s218
      %p220 = pneg %p153
      %p221 = pneg %p150
      %s222 = smul.u32 16, %s17
      %p223 = scmp.lt.s32.totalorder %s222, 63
      %s224 = scalar_select %p223, %s222, 63
      %s225 = smul.addr %s224, 7
      %s226 = smul.addr %s225, 8
      %s227 = scalar_lea.vmem %s5, %s226
      %s228 = smul.u32 16, %s17
      %p229 = scmp.lt.s32.totalorder %s228, 63
      %s230 = scalar_select %p229, %s228, 63
      %s231 = smul.addr %s230, 7
      %s232 = smul.addr %s231, 8
      %s233 = scalar_lea.vmem %s0, %s232
      %s234 = smul.u32 16, %s17
      %s235 = smul.u32 16, %s17
      %p236 = scmp.lt.s32.totalorder %s235, 63
      %s237 = scalar_select %p236, %s235, 63
      %s238 = smul.addr %s237, 7
      %s239 = smul.addr %s238, 8
      %s240 = scalar_lea.vmem %s4, %s239
      %s241 = smul.u32 16, %s17
      %s242 = smul.u32 16, %s17
      %p243 = scmp.lt.s32.totalorder %s242, 63
      %s244 = scalar_select %p243, %s242, 63
      %s245 = smul.addr %s244, 7
      %s246 = smul.addr %s245, 8
      %s247 = scalar_lea.vmem %s5, %s246
      %s248 = smul.u32 16, %s17
      %v249 = vld [vmem:[%s233] sm:$0xff]
      %v250 = vld [vmem:[%s233 + $0x8] sm:$0xff]
      %v251 = vld [vmem:[%s233 + $0x10] sm:$0xff]
      %v252 = vld [vmem:[%s233 + $0x18] sm:$0xff]
      %v253 = vld [vmem:[%s233 + $0x20] sm:$0xff]
      %v254 = vld [vmem:[%s233 + $0x28] sm:$0xff]
      %v255 = vld [vmem:[%s233 + $0x30] sm:$0xff]
      %v256 = vld [vmem:[%s233 + $0x38] sm:$0xff]
      %v257 = vld [vmem:[%s233 + $0x40] sm:$0xff]
      %v258 = vld [vmem:[%s233 + $0x48] sm:$0xff]
      %v259 = vld [vmem:[%s233 + $0x50] sm:$0xff]
      %v260 = vld [vmem:[%s233 + $0x58] sm:$0xff]
      %v261 = vld [vmem:[%s233 + $0x60] sm:$0xff]
      %v262 = vld [vmem:[%s233 + $0x68] sm:$0xff]
      %v263 = vld [vmem:[%s233 + $0x70] sm:$0xff]
      %v264 = vld [vmem:[%s233 + $0x78] sm:$0xff]
      %v265 = vld [vmem:[%s233 + $0x80] sm:$0xff]
      %v266 = vld [vmem:[%s233 + $0x88] sm:$0xff]
      %v267 = vld [vmem:[%s233 + $0x90] sm:$0xff]
      %v268 = vld [vmem:[%s233 + $0x98] sm:$0xff]
      %v269 = vld [vmem:[%s233 + $0xa0] sm:$0xff]
      %v270 = vld [vmem:[%s233 + $0xa8] sm:$0xff]
      %v271 = vld [vmem:[%s233 + $0xb0] sm:$0xff]
      %v272 = vld [vmem:[%s233 + $0xb8] sm:$0xff]
      %v273 = vld [vmem:[%s233 + $0xc0] sm:$0xff]
      %v274 = vld [vmem:[%s233 + $0xc8] sm:$0xff]
      %v275 = vld [vmem:[%s233 + $0xd0] sm:$0xff]
      %v276 = vld [vmem:[%s233 + $0xd8] sm:$0xff]
      %v277 = vld [vmem:[%s233 + $0xe0] sm:$0xff]
      %v278 = vld [vmem:[%s233 + $0xe8] sm:$0xff]
      %v279 = vld [vmem:[%s233 + $0xf0] sm:$0xff]
      %v280 = vld [vmem:[%s233 + $0xf8] sm:$0xff]
      %v281 = vld [vmem:[%s233 + $0x100] sm:$0xff]
      %v282 = vld [vmem:[%s233 + $0x108] sm:$0xff]
      %v283 = vld [vmem:[%s233 + $0x110] sm:$0xff]
      %v284 = vld [vmem:[%s233 + $0x118] sm:$0xff]
      %v285 = vld [vmem:[%s233 + $0x120] sm:$0xff]
      %v286 = vld [vmem:[%s233 + $0x128] sm:$0xff]
      %v287 = vld [vmem:[%s233 + $0x130] sm:$0xff]
      %v288 = vld [vmem:[%s233 + $0x138] sm:$0xff]
      %v289 = vld [vmem:[%s233 + $0x140] sm:$0xff]
      %v290 = vld [vmem:[%s233 + $0x148] sm:$0xff]
      %v291 = vld [vmem:[%s233 + $0x150] sm:$0xff]
      %v292 = vld [vmem:[%s233 + $0x158] sm:$0xff]
      %v293 = vld [vmem:[%s233 + $0x160] sm:$0xff]
      %v294 = vld [vmem:[%s233 + $0x168] sm:$0xff]
      %v295 = vld [vmem:[%s233 + $0x170] sm:$0xff]
      %v296 = vld [vmem:[%s233 + $0x178] sm:$0xff]
      %v297 = vld [vmem:[%s233 + $0x180] sm:$0xff]
      %v298 = vld [vmem:[%s233 + $0x188] sm:$0xff]
      %v299 = vld [vmem:[%s233 + $0x190] sm:$0xff]
      %v300 = vld [vmem:[%s233 + $0x198] sm:$0xff]
      %v301 = vld [vmem:[%s233 + $0x1a0] sm:$0xff]
      %v302 = vld [vmem:[%s233 + $0x1a8] sm:$0xff]
      %v303 = vld [vmem:[%s233 + $0x1b0] sm:$0xff]
      %v304 = vld [vmem:[%s233 + $0x1b8] sm:$0xff]
      %v305 = vld [vmem:[%s233 + $0x1c0] sm:$0xff]
      %v306 = vld [vmem:[%s233 + $0x1c8] sm:$0xff]
      %v307 = vld [vmem:[%s233 + $0x1d0] sm:$0xff]
      %v308 = vld [vmem:[%s233 + $0x1d8] sm:$0xff]
      %v309 = vld [vmem:[%s233 + $0x1e0] sm:$0xff]
      %v310 = vld [vmem:[%s233 + $0x1e8] sm:$0xff]
      %v311 = vld [vmem:[%s233 + $0x1f0] sm:$0xff]
      %v312 = vld [vmem:[%s233 + $0x1f8] sm:$0xff]
      %v313 = vld [vmem:[%s233 + $0x200] sm:$0xff]
      %v314 = vld [vmem:[%s233 + $0x208] sm:$0xff]
      %v315 = vld [vmem:[%s233 + $0x210] sm:$0xff]
      %v316 = vld [vmem:[%s233 + $0x218] sm:$0xff]
      %v317 = vld [vmem:[%s233 + $0x220] sm:$0xff]
      %v318 = vld [vmem:[%s233 + $0x228] sm:$0xff]
      %v319 = vld [vmem:[%s233 + $0x230] sm:$0xff]
      %v320 = vld [vmem:[%s233 + $0x238] sm:$0xff]
      %v321 = vld [vmem:[%s233 + $0x240] sm:$0xff]
      %v322 = vld [vmem:[%s233 + $0x248] sm:$0xff]
      %v323 = vld [vmem:[%s233 + $0x250] sm:$0xff]
      %v324 = vld [vmem:[%s233 + $0x258] sm:$0xff]
      %v325 = vld [vmem:[%s233 + $0x260] sm:$0xff]
      %v326 = vld [vmem:[%s233 + $0x268] sm:$0xff]
      %v327 = vld [vmem:[%s233 + $0x270] sm:$0xff]
      %v328 = vld [vmem:[%s233 + $0x278] sm:$0xff]
      %v329 = vld [vmem:[%s233 + $0x280] sm:$0xff]
      %v330 = vld [vmem:[%s233 + $0x288] sm:$0xff]
      %v331 = vld [vmem:[%s233 + $0x290] sm:$0xff]
      %v332 = vld [vmem:[%s233 + $0x298] sm:$0xff]
      %v333 = vld [vmem:[%s233 + $0x2a0] sm:$0xff]
      %v334 = vld [vmem:[%s233 + $0x2a8] sm:$0xff]
      %v335 = vld [vmem:[%s233 + $0x2b0] sm:$0xff]
      %v336 = vld [vmem:[%s233 + $0x2b8] sm:$0xff]
      %v337 = vld [vmem:[%s233 + $0x2c0] sm:$0xff]
      %v338 = vld [vmem:[%s233 + $0x2c8] sm:$0xff]
      %v339 = vld [vmem:[%s233 + $0x2d0] sm:$0xff]
      %v340 = vld [vmem:[%s233 + $0x2d8] sm:$0xff]
      %v341 = vld [vmem:[%s233 + $0x2e0] sm:$0xff]
      %v342 = vld [vmem:[%s233 + $0x2e8] sm:$0xff]
      %v343 = vld [vmem:[%s233 + $0x2f0] sm:$0xff]
      %v344 = vld [vmem:[%s233 + $0x2f8] sm:$0xff]
      %v345 = vld [vmem:[%s233 + $0x300] sm:$0xff]
      %v346 = vld [vmem:[%s233 + $0x308] sm:$0xff]
      %v347 = vld [vmem:[%s233 + $0x310] sm:$0xff]
      %v348 = vld [vmem:[%s233 + $0x318] sm:$0xff]
      %v349 = vld [vmem:[%s233 + $0x320] sm:$0xff]
      %v350 = vld [vmem:[%s233 + $0x328] sm:$0xff]
      %v351 = vld [vmem:[%s233 + $0x330] sm:$0xff]
      %v352 = vld [vmem:[%s233 + $0x338] sm:$0xff]
      %v353 = vld [vmem:[%s233 + $0x340] sm:$0xff]
      %v354 = vld [vmem:[%s233 + $0x348] sm:$0xff]
      %v355 = vld [vmem:[%s233 + $0x350] sm:$0xff]
      %v356 = vld [vmem:[%s233 + $0x358] sm:$0xff]
      %v357 = vld [vmem:[%s233 + $0x360] sm:$0xff]
      %v358 = vld [vmem:[%s233 + $0x368] sm:$0xff]
      %v359 = vld [vmem:[%s233 + $0x370] sm:$0xff]
      %v360 = vld [vmem:[%s233 + $0x378] sm:$0xff]
      %v361 = vld [vmem:[%s1] sm:$0xff]
      %v362 = vld [vmem:[%s1 + $0x8] sm:$0xff]
      %v363 = vld [vmem:[%s1 + $0x10] sm:$0xff]
      %v364 = vld [vmem:[%s1 + $0x18] sm:$0xff]
      %v365 = vld [vmem:[%s1 + $0x20] sm:$0xff]
      %v366 = vld [vmem:[%s1 + $0x28] sm:$0xff]
      %v367 = vld [vmem:[%s1 + $0x30] sm:$0xff]
      %v368 = vld [vmem:[%s1 + $0x38] sm:$0xff]
      %v369 = vld [vmem:[%s1 + $0x40] sm:$0xff]
      %v370 = vld [vmem:[%s1 + $0x48] sm:$0xff]
      %v371 = vld [vmem:[%s1 + $0x50] sm:$0xff]
      %v372 = vld [vmem:[%s1 + $0x58] sm:$0xff]
      %v373 = vld [vmem:[%s1 + $0x60] sm:$0xff]
      %v374 = vld [vmem:[%s1 + $0x68] sm:$0xff]
      %v375 = vld [vmem:[%s1 + $0x70] sm:$0xff]
      %v376 = vld [vmem:[%s1 + $0x78] sm:$0xff]
      %v377 = vld [vmem:[%s1 + $0x80] sm:$0xff]
      %v378 = vld [vmem:[%s1 + $0x88] sm:$0xff]
      %v379 = vld [vmem:[%s1 + $0x90] sm:$0xff]
      %v380 = vld [vmem:[%s1 + $0x98] sm:$0xff]
      %v381 = vld [vmem:[%s1 + $0xa0] sm:$0xff]
      %v382 = vld [vmem:[%s1 + $0xa8] sm:$0xff]
      %v383 = vld [vmem:[%s1 + $0xb0] sm:$0xff]
      %v384 = vld [vmem:[%s1 + $0xb8] sm:$0xff]
      %v385 = vld [vmem:[%s1 + $0xc0] sm:$0xff]
      %v386 = vld [vmem:[%s1 + $0xc8] sm:$0xff]
      %v387 = vld [vmem:[%s1 + $0xd0] sm:$0xff]
      %v388 = vld [vmem:[%s1 + $0xd8] sm:$0xff]
      %v389 = vld [vmem:[%s1 + $0xe0] sm:$0xff]
      %v390 = vld [vmem:[%s1 + $0xe8] sm:$0xff]
      %v391 = vld [vmem:[%s1 + $0xf0] sm:$0xff]
      %v392 = vld [vmem:[%s1 + $0xf8] sm:$0xff]
      %v393 = vld [vmem:[%s1 + $0x100] sm:$0xff]
      %v394 = vld [vmem:[%s1 + $0x108] sm:$0xff]
      %v395 = vld [vmem:[%s1 + $0x110] sm:$0xff]
      %v396 = vld [vmem:[%s1 + $0x118] sm:$0xff]
      %v397 = vld [vmem:[%s1 + $0x120] sm:$0xff]
      %v398 = vld [vmem:[%s1 + $0x128] sm:$0xff]
      %v399 = vld [vmem:[%s1 + $0x130] sm:$0xff]
      %v400 = vld [vmem:[%s1 + $0x138] sm:$0xff]
      %v401 = vld [vmem:[%s1 + $0x140] sm:$0xff]
      %v402 = vld [vmem:[%s1 + $0x148] sm:$0xff]
      %v403 = vld [vmem:[%s1 + $0x150] sm:$0xff]
      %v404 = vld [vmem:[%s1 + $0x158] sm:$0xff]
      %v405 = vld [vmem:[%s1 + $0x160] sm:$0xff]
      %v406 = vld [vmem:[%s1 + $0x168] sm:$0xff]
      %v407 = vld [vmem:[%s1 + $0x170] sm:$0xff]
      %v408 = vld [vmem:[%s1 + $0x178] sm:$0xff]
      %v409 = vld [vmem:[%s1 + $0x180] sm:$0xff]
      %v410 = vld [vmem:[%s1 + $0x188] sm:$0xff]
      %v411 = vld [vmem:[%s1 + $0x190] sm:$0xff]
      %v412 = vld [vmem:[%s1 + $0x198] sm:$0xff]
      %v413 = vld [vmem:[%s1 + $0x1a0] sm:$0xff]
      %v414 = vld [vmem:[%s1 + $0x1a8] sm:$0xff]
      %v415 = vld [vmem:[%s1 + $0x1b0] sm:$0xff]
      %v416 = vld [vmem:[%s1 + $0x1b8] sm:$0xff]
      %v417 = vld [vmem:[%s1 + $0x1c0] sm:$0xff]
      %v418 = vld [vmem:[%s1 + $0x1c8] sm:$0xff]
      %v419 = vld [vmem:[%s1 + $0x1d0] sm:$0xff]
      %v420 = vld [vmem:[%s1 + $0x1d8] sm:$0xff]
      %v421 = vld [vmem:[%s1 + $0x1e0] sm:$0xff]
      %v422 = vld [vmem:[%s1 + $0x1e8] sm:$0xff]
      %v423 = vld [vmem:[%s1 + $0x1f0] sm:$0xff]
      %v424 = vld [vmem:[%s1 + $0x1f8] sm:$0xff]
      %v425 = vld [vmem:[%s1 + $0x200] sm:$0xff]
      %v426 = vld [vmem:[%s1 + $0x208] sm:$0xff]
      %v427 = vld [vmem:[%s1 + $0x210] sm:$0xff]
      %v428 = vld [vmem:[%s1 + $0x218] sm:$0xff]
      %v429 = vld [vmem:[%s1 + $0x220] sm:$0xff]
      %v430 = vld [vmem:[%s1 + $0x228] sm:$0xff]
      %v431 = vld [vmem:[%s1 + $0x230] sm:$0xff]
      %v432 = vld [vmem:[%s1 + $0x238] sm:$0xff]
      %v433 = vld [vmem:[%s1 + $0x240] sm:$0xff]
      %v434 = vld [vmem:[%s1 + $0x248] sm:$0xff]
      %v435 = vld [vmem:[%s1 + $0x250] sm:$0xff]
      %v436 = vld [vmem:[%s1 + $0x258] sm:$0xff]
      %v437 = vld [vmem:[%s1 + $0x260] sm:$0xff]
      %v438 = vld [vmem:[%s1 + $0x268] sm:$0xff]
      %v439 = vld [vmem:[%s1 + $0x270] sm:$0xff]
      %v440 = vld [vmem:[%s1 + $0x278] sm:$0xff]
      %v441 = vld [vmem:[%s1 + $0x280] sm:$0xff]
      %v442 = vld [vmem:[%s1 + $0x288] sm:$0xff]
      %v443 = vld [vmem:[%s1 + $0x290] sm:$0xff]
      %v444 = vld [vmem:[%s1 + $0x298] sm:$0xff]
      %v445 = vld [vmem:[%s1 + $0x2a0] sm:$0xff]
      %v446 = vld [vmem:[%s1 + $0x2a8] sm:$0xff]
      %v447 = vld [vmem:[%s1 + $0x2b0] sm:$0xff]
      %v448 = vld [vmem:[%s1 + $0x2b8] sm:$0xff]
      %v449 = vld [vmem:[%s1 + $0x2c0] sm:$0xff]
      %v450 = vld [vmem:[%s1 + $0x2c8] sm:$0xff]
      %v451 = vld [vmem:[%s1 + $0x2d0] sm:$0xff]
      %v452 = vld [vmem:[%s1 + $0x2d8] sm:$0xff]
      %v453 = vld [vmem:[%s1 + $0x2e0] sm:$0xff]
      %v454 = vld [vmem:[%s1 + $0x2e8] sm:$0xff]
      %v455 = vld [vmem:[%s1 + $0x2f0] sm:$0xff]
      %v456 = vld [vmem:[%s1 + $0x2f8] sm:$0xff]
      %v457 = vld [vmem:[%s1 + $0x300] sm:$0xff]
      %v458 = vld [vmem:[%s1 + $0x308] sm:$0xff]
      %vm459 = vcmask 130048
      %v461 = vsel %vm459, %v255, 0
      %v464 = vsel %vm459, %v262, 0
      %v467 = vsel %vm459, %v269, 0
      %v470 = vsel %vm459, %v276, 0
      %v473 = vsel %vm459, %v283, 0
      %v476 = vsel %vm459, %v290, 0
      %v479 = vsel %vm459, %v297, 0
      %v482 = vsel %vm459, %v304, 0
      %v485 = vsel %vm459, %v311, 0
      %v488 = vsel %vm459, %v318, 0
      %v491 = vsel %vm459, %v325, 0
      %v494 = vsel %vm459, %v332, 0
      %v497 = vsel %vm459, %v339, 0
      %v500 = vsel %vm459, %v346, 0
      %v503 = vsel %vm459, %v353, 0
      %v506 = vsel %vm459, %v360, 0
      %508 = vmatprep.subr.mxu0 0.0
      %509 = vmatpush1.msra.mxu0 %v361
      %510 = vmatprep.subr.mxu0 0.0
      %511 = vmatpush1.msra.mxu0 %v362
      %512 = vmatprep.subr.mxu0 0.0
      %513 = vmatpush1.msra.mxu0 %v363
      %514 = vmatprep.subr.mxu0 0.0
      %515 = vmatpush1.msra.mxu0 %v364
      %516 = vmatprep.subr.mxu0 0.0
      %517 = vmatpush1.msra.mxu0 %v365
      %518 = vmatprep.subr.mxu0 0.0
      %519 = vmatpush1.msra.mxu0 %v366
      %520 = vmatprep.subr.mxu0 0.0
      %521 = vmatpush1.msra.mxu0 %v367
      %522 = vmatprep.subr.mxu0 0.0
      %523 = vmatpush1.msra.mxu0 %v368
      %524 = vmatprep.subr.mxu0 0.0
      %525 = vmatpush1.msra.mxu0 %v369
      %526 = vmatprep.subr.mxu0 0.0
      %527 = vmatpush1.msra.mxu0 %v370
      %528 = vmatprep.subr.mxu0 0.0
      %529 = vmatpush1.msra.mxu0 %v371
      %530 = vmatprep.subr.mxu0 0.0
      %531 = vmatpush1.msra.mxu0 %v372
      %532 = vmatprep.subr.mxu0 0.0
      %533 = vmatpush1.msra.mxu0 %v373
      %534 = vmatprep.subr.mxu0 0.0
      %535 = vmatpush1.msra.mxu0 %v374
      %536 = vmatprep.subr.mxu0 0.0
      %537 = vmatpush1.msra.mxu0 %v375
      %538 = vmatprep.subr.mxu0 0.0
      %539 = vmatpush1.msra.mxu0 %v376
      %540 = vmatprep.subr.mxu0 0.0
      %541 = vmatpush1.msra.mxu0 %v377
      %542 = vmatprep.subr.mxu0 0.0
      %543 = vmatpush1.msra.mxu0 %v378
      %544 = vmatprep.subr.mxu0 0.0
      %545 = vmatpush1.msra.mxu0 %v379
      %546 = vmatprep.subr.mxu0 0.0
      %547 = vmatpush1.msra.mxu0 %v380
      %548 = vmatprep.subr.mxu0 0.0
      %549 = vmatpush1.msra.mxu0 %v381
      %550 = vmatprep.subr.mxu0 0.0
      %551 = vmatpush1.msra.mxu0 %v382
      %552 = vmatprep.subr.mxu0 0.0
      %553 = vmatpush1.msra.mxu0 %v383
      %554 = vmatprep.subr.mxu0 0.0
      %555 = vmatpush1.msra.mxu0 %v384
      %556 = vmatprep.subr.mxu0 0.0
      %557 = vmatpush1.msra.mxu0 %v385
      %558 = vmatprep.subr.mxu0 0.0
      %559 = vmatpush1.msra.mxu0 %v386
      %560 = vmatprep.subr.mxu0 0.0
      %561 = vmatpush1.msra.mxu0 %v387
      %562 = vmatprep.subr.mxu0 0.0
      %563 = vmatpush1.msra.mxu0 %v388
      %564 = vmatprep.subr.mxu0 0.0
      %565 = vmatpush1.msra.mxu0 %v389
      %566 = vmatprep.subr.mxu0 0.0
      %567 = vmatpush1.msra.mxu0 %v390
      %568 = vmatprep.subr.mxu0 0.0
      %569 = vmatpush1.msra.mxu0 %v391
      %570 = vmatprep.subr.mxu0 0.0
      %571 = vmatpush1.msra.mxu0 %v392
      %572 = vmatprep.mubr.f32.mxu0 %v250
      %573 = vmatmul.mubr.f32.gmra.mrb[0].mxu0 %v249
      %v574 = vpop.f32.mrb[0].mxu0
      %v575 = vadd.f32 0.0, %v574
      %v576 = vpop.f32.mrb[0].mxu0
      %577 = vmatprep.mubr.f32.mxu0 %v257
      %578 = vmatmul.mubr.f32.gmra.mrb[0].mxu0 %v256
      %v579 = vpop.f32.mrb[0].mxu0
      %v580 = vadd.f32 0.0, %v579
      %v581 = vpop.f32.mrb[0].mxu0
      %582 = vmatprep.mubr.f32.mxu0 %v264
      %583 = vmatmul.mubr.f32.gmra.mrb[0].mxu0 %v263
      %v584 = vpop.f32.mrb[0].mxu0
      %v585 = vadd.f32 0.0, %v584
      %v586 = vpop.f32.mrb[0].mxu0
      %587 = vmatprep.mubr.f32.mxu0 %v271
      %588 = vmatmul.mubr.f32.gmra.mrb[0].mxu0 %v270
      %v589 = vpop.f32.mrb[0].mxu0
      %v590 = vadd.f32 0.0, %v589
      %v591 = vpop.f32.mrb[0].mxu0
      %592 = vmatprep.mubr.f32.mxu0 %v278
      %593 = vmatmul.mubr.f32.gmra.mrb[0].mxu0 %v277
      %v594 = vpop.f32.mrb[0].mxu0
      %v595 = vadd.f32 0.0, %v594
      %v596 = vpop.f32.mrb[0].mxu0
      %597 = vmatprep.mubr.f32.mxu0 %v285
      %598 = vmatmul.mubr.f32.gmra.mrb[0].mxu0 %v284
      %v599 = vpop.f32.mrb[0].mxu0
      %v600 = vadd.f32 0.0, %v599
      %v601 = vpop.f32.mrb[0].mxu0
      %602 = vmatprep.mubr.f32.mxu0 %v292
      %603 = vmatmul.mubr.f32.gmra.mrb[0].mxu0 %v291
      %v604 = vpop.f32.mrb[0].mxu0
      %v605 = vadd.f32 0.0, %v604
      %v606 = vpop.f32.mrb[0].mxu0
      %607 = vmatprep.mubr.f32.mxu0 %v299
      %608 = vmatmul.mubr.f32.gmra.mrb[0].mxu0 %v298
      %v609 = vpop.f32.mrb[0].mxu0
      %v610 = vadd.f32 0.0, %v609
      %v611 = vpop.f32.mrb[0].mxu0
      %612 = vmatprep.mubr.f32.mxu0 %v306
      %613 = vmatmul.mubr.f32.gmra.mrb[0].mxu0 %v305
      %v614 = vpop.f32.mrb[0].mxu0
      %v615 = vadd.f32 0.0, %v614
      %v616 = vpop.f32.mrb[0].mxu0
      %617 = vmatprep.mubr.f32.mxu0 %v313
      %618 = vmatmul.mubr.f32.gmra.mrb[0].mxu0 %v312
      %v619 = vpop.f32.mrb[0].mxu0
      %v620 = vadd.f32 0.0, %v619
      %v621 = vpop.f32.mrb[0].mxu0
      %622 = vmatprep.mubr.f32.mxu0 %v320
      %623 = vmatmul.mubr.f32.gmra.mrb[0].mxu0 %v319
      %v624 = vpop.f32.mrb[0].mxu0
      %v625 = vadd.f32 0.0, %v624
      %v626 = vpop.f32.mrb[0].mxu0
      %627 = vmatprep.mubr.f32.mxu0 %v327
      %628 = vmatmul.mubr.f32.gmra.mrb[0].mxu0 %v326
      %v629 = vpop.f32.mrb[0].mxu0
      %v630 = vadd.f32 0.0, %v629
      %v631 = vpop.f32.mrb[0].mxu0
      %632 = vmatprep.mubr.f32.mxu0 %v334
      %633 = vmatmul.mubr.f32.gmra.mrb[0].mxu0 %v333
      %v634 = vpop.f32.mrb[0].mxu0
      %v635 = vadd.f32 0.0, %v634
      %v636 = vpop.f32.mrb[0].mxu0
      %637 = vmatprep.mubr.f32.mxu0 %v341
      %638 = vmatmul.mubr.f32.gmra.mrb[0].mxu0 %v340
      %v639 = vpop.f32.mrb[0].mxu0
      %v640 = vadd.f32 0.0, %v639
      %v641 = vpop.f32.mrb[0].mxu0
      %642 = vmatprep.mubr.f32.mxu0 %v348
      %643 = vmatmul.mubr.f32.gmra.mrb[0].mxu0 %v347
      %v644 = vpop.f32.mrb[0].mxu0
      %v645 = vadd.f32 0.0, %v644
      %v646 = vpop.f32.mrb[0].mxu0
      %647 = vmatprep.mubr.f32.mxu0 %v355
      %648 = vmatmul.mubr.f32.gmra.mrb[0].mxu0 %v354
      %v649 = vpop.f32.mrb[0].mxu0
      %v650 = vadd.f32 0.0, %v649
      %v651 = vpop.f32.mrb[0].mxu0
      %652 = vdwg.mxu0
      %653 = vmatprep.subr.mxu0 0.0
      %654 = vmatpush1.msra.mxu0 %v393
      %655 = vmatprep.subr.mxu0 0.0
      %656 = vmatpush1.msra.mxu0 %v394
      %657 = vmatprep.subr.mxu0 0.0
      %658 = vmatpush1.msra.mxu0 %v395
      %659 = vmatprep.subr.mxu0 0.0
      %660 = vmatpush1.msra.mxu0 %v396
      %661 = vmatprep.subr.mxu0 0.0
      %662 = vmatpush1.msra.mxu0 %v397
      %663 = vmatprep.subr.mxu0 0.0
      %664 = vmatpush1.msra.mxu0 %v398
      %665 = vmatprep.subr.mxu0 0.0
      %666 = vmatpush1.msra.mxu0 %v399
      %667 = vmatprep.subr.mxu0 0.0
      %668 = vmatpush1.msra.mxu0 %v400
      %669 = vmatprep.subr.mxu0 0.0
      %670 = vmatpush1.msra.mxu0 %v401
      %671 = vmatprep.subr.mxu0 0.0
      %672 = vmatpush1.msra.mxu0 %v402
      %673 = vmatprep.subr.mxu0 0.0
      %674 = vmatpush1.msra.mxu0 %v403
      %675 = vmatprep.subr.mxu0 0.0
      %676 = vmatpush1.msra.mxu0 %v404
      %677 = vmatprep.subr.mxu0 0.0
      %678 = vmatpush1.msra.mxu0 %v405
      %679 = vmatprep.subr.mxu0 0.0
      %680 = vmatpush1.msra.mxu0 %v406
      %681 = vmatprep.subr.mxu0 0.0
      %682 = vmatpush1.msra.mxu0 %v407
      %683 = vmatprep.subr.mxu0 0.0
      %684 = vmatpush1.msra.mxu0 %v408
      %685 = vmatprep.subr.mxu0 0.0
      %686 = vmatpush1.msra.mxu0 %v409
      %687 = vmatprep.subr.mxu0 0.0
      %688 = vmatpush1.msra.mxu0 %v410
      %689 = vmatprep.subr.mxu0 0.0
      %690 = vmatpush1.msra.mxu0 %v411
      %691 = vmatprep.subr.mxu0 0.0
      %692 = vmatpush1.msra.mxu0 %v412
      %693 = vmatprep.subr.mxu0 0.0
      %694 = vmatpush1.msra.mxu0 %v413
      %695 = vmatprep.subr.mxu0 0.0
      %696 = vmatpush1.msra.mxu0 %v414
      %697 = vmatprep.subr.mxu0 0.0
      %698 = vmatpush1.msra.mxu0 %v415
      %699 = vmatprep.subr.mxu0 0.0
      %700 = vmatpush1.msra.mxu0 %v416
      %701 = vmatprep.subr.mxu0 0.0
      %702 = vmatpush1.msra.mxu0 %v417
      %703 = vmatprep.subr.mxu0 0.0
      %704 = vmatpush1.msra.mxu0 %v418
      %705 = vmatprep.subr.mxu0 0.0
      %706 = vmatpush1.msra.mxu0 %v419
      %707 = vmatprep.subr.mxu0 0.0
      %708 = vmatpush1.msra.mxu0 %v420
      %709 = vmatprep.subr.mxu0 0.0
      %710 = vmatpush1.msra.mxu0 %v421
      %711 = vmatprep.subr.mxu0 0.0
      %712 = vmatpush1.msra.mxu0 %v422
      %713 = vmatprep.subr.mxu0 0.0
      %714 = vmatpush1.msra.mxu0 %v423
      %715 = vmatprep.subr.mxu0 0.0
      %716 = vmatpush1.msra.mxu0 %v424
      %717 = vmatprep.mubr.f32.mxu0 %v252
      %718 = vmatmul.mubr.f32.gmra.mrb[0].mxu0 %v251
      %v719 = vpop.f32.mrb[0].mxu0
      %v720 = vadd.f32 %v575, %v719
      %v721 = vpop.f32.mrb[0].mxu0
      %722 = vmatprep.mubr.f32.mxu0 %v259
      %723 = vmatmul.mubr.f32.gmra.mrb[0].mxu0 %v258
      %v724 = vpop.f32.mrb[0].mxu0
      %v725 = vadd.f32 %v580, %v724
      %v726 = vpop.f32.mrb[0].mxu0
      %727 = vmatprep.mubr.f32.mxu0 %v266
      %728 = vmatmul.mubr.f32.gmra.mrb[0].mxu0 %v265
      %v729 = vpop.f32.mrb[0].mxu0
      %v730 = vadd.f32 %v585, %v729
      %v731 = vpop.f32.mrb[0].mxu0
      %732 = vmatprep.mubr.f32.mxu0 %v273
      %733 = vmatmul.mubr.f32.gmra.mrb[0].mxu0 %v272
      %v734 = vpop.f32.mrb[0].mxu0
      %v735 = vadd.f32 %v590, %v734
      %v736 = vpop.f32.mrb[0].mxu0
      %737 = vmatprep.mubr.f32.mxu0 %v280
      %738 = vmatmul.mubr.f32.gmra.mrb[0].mxu0 %v279
      %v739 = vpop.f32.mrb[0].mxu0
      %v740 = vadd.f32 %v595, %v739
      %v741 = vpop.f32.mrb[0].mxu0
      %742 = vmatprep.mubr.f32.mxu0 %v287
      %743 = vmatmul.mubr.f32.gmra.mrb[0].mxu0 %v286
      %v744 = vpop.f32.mrb[0].mxu0
      %v745 = vadd.f32 %v600, %v744
      %v746 = vpop.f32.mrb[0].mxu0
      %747 = vmatprep.mubr.f32.mxu0 %v294
      %748 = vmatmul.mubr.f32.gmra.mrb[0].mxu0 %v293
      %v749 = vpop.f32.mrb[0].mxu0
      %v750 = vadd.f32 %v605, %v749
      %v751 = vpop.f32.mrb[0].mxu0
      %752 = vmatprep.mubr.f32.mxu0 %v301
      %753 = vmatmul.mubr.f32.gmra.mrb[0].mxu0 %v300
      %v754 = vpop.f32.mrb[0].mxu0
      %v755 = vadd.f32 %v610, %v754
      %v756 = vpop.f32.mrb[0].mxu0
      %757 = vmatprep.mubr.f32.mxu0 %v308
      %758 = vmatmul.mubr.f32.gmra.mrb[0].mxu0 %v307
      %v759 = vpop.f32.mrb[0].mxu0
      %v760 = vadd.f32 %v615, %v759
      %v761 = vpop.f32.mrb[0].mxu0
      %762 = vmatprep.mubr.f32.mxu0 %v315
      %763 = vmatmul.mubr.f32.gmra.mrb[0].mxu0 %v314
      %v764 = vpop.f32.mrb[0].mxu0
      %v765 = vadd.f32 %v620, %v764
      %v766 = vpop.f32.mrb[0].mxu0
      %767 = vmatprep.mubr.f32.mxu0 %v322
      %768 = vmatmul.mubr.f32.gmra.mrb[0].mxu0 %v321
      %v769 = vpop.f32.mrb[0].mxu0
      %v770 = vadd.f32 %v625, %v769
      %v771 = vpop.f32.mrb[0].mxu0
      %772 = vmatprep.mubr.f32.mxu0 %v329
      %773 = vmatmul.mubr.f32.gmra.mrb[0].mxu0 %v328
      %v774 = vpop.f32.mrb[0].mxu0
      %v775 = vadd.f32 %v630, %v774
      %v776 = vpop.f32.mrb[0].mxu0
      %777 = vmatprep.mubr.f32.mxu0 %v336
      %778 = vmatmul.mubr.f32.gmra.mrb[0].mxu0 %v335
      %v779 = vpop.f32.mrb[0].mxu0
      %v780 = vadd.f32 %v635, %v779
      %v781 = vpop.f32.mrb[0].mxu0
      %782 = vmatprep.mubr.f32.mxu0 %v343
      %783 = vmatmul.mubr.f32.gmra.mrb[0].mxu0 %v342
      %v784 = vpop.f32.mrb[0].mxu0
      %v785 = vadd.f32 %v640, %v784
      %v786 = vpop.f32.mrb[0].mxu0
      %787 = vmatprep.mubr.f32.mxu0 %v350
      %788 = vmatmul.mubr.f32.gmra.mrb[0].mxu0 %v349
      %v789 = vpop.f32.mrb[0].mxu0
      %v790 = vadd.f32 %v645, %v789
      %v791 = vpop.f32.mrb[0].mxu0
      %792 = vmatprep.mubr.f32.mxu0 %v357
      %793 = vmatmul.mubr.f32.gmra.mrb[0].mxu0 %v356
      %v794 = vpop.f32.mrb[0].mxu0
      %v795 = vadd.f32 %v650, %v794
      %v796 = vpop.f32.mrb[0].mxu0
      %797 = vdwg.mxu0
      %798 = vmatprep.subr.mxu0 0.0
      %799 = vmatpush1.msra.mxu0 %v425
      %800 = vmatprep.subr.mxu0 0.0
      %801 = vmatpush1.msra.mxu0 %v426
      %802 = vmatprep.subr.mxu0 0.0
      %803 = vmatpush1.msra.mxu0 %v427
      %804 = vmatprep.subr.mxu0 0.0
      %805 = vmatpush1.msra.mxu0 %v428
      %806 = vmatprep.subr.mxu0 0.0
      %807 = vmatpush1.msra.mxu0 %v429
      %808 = vmatprep.subr.mxu0 0.0
      %809 = vmatpush1.msra.mxu0 %v430
      %810 = vmatprep.subr.mxu0 0.0
      %811 = vmatpush1.msra.mxu0 %v431
      %812 = vmatprep.subr.mxu0 0.0
      %813 = vmatpush1.msra.mxu0 %v432
      %814 = vmatprep.subr.mxu0 0.0
      %815 = vmatpush1.msra.mxu0 %v433
      %816 = vmatprep.subr.mxu0 0.0
      %817 = vmatpush1.msra.mxu0 %v434
      %818 = vmatprep.subr.mxu0 0.0
      %819 = vmatpush1.msra.mxu0 %v435
      %820 = vmatprep.subr.mxu0 0.0
      %821 = vmatpush1.msra.mxu0 %v436
      %822 = vmatprep.subr.mxu0 0.0
      %823 = vmatpush1.msra.mxu0 %v437
      %824 = vmatprep.subr.mxu0 0.0
      %825 = vmatpush1.msra.mxu0 %v438
      %826 = vmatprep.subr.mxu0 0.0
      %827 = vmatpush1.msra.mxu0 %v439
      %828 = vmatprep.subr.mxu0 0.0
      %829 = vmatpush1.msra.mxu0 %v440
      %830 = vmatprep.subr.mxu0 0.0
      %831 = vmatpush1.msra.mxu0 %v441
      %832 = vmatprep.subr.mxu0 0.0
      %833 = vmatpush1.msra.mxu0 %v442
      %834 = vmatprep.subr.mxu0 0.0
      %835 = vmatpush1.msra.mxu0 %v443
      %836 = vmatprep.subr.mxu0 0.0
      %837 = vmatpush1.msra.mxu0 %v444
      %838 = vmatprep.subr.mxu0 0.0
      %839 = vmatpush1.msra.mxu0 %v445
      %840 = vmatprep.subr.mxu0 0.0
      %841 = vmatpush1.msra.mxu0 %v446
      %842 = vmatprep.subr.mxu0 0.0
      %843 = vmatpush1.msra.mxu0 %v447
      %844 = vmatprep.subr.mxu0 0.0
      %845 = vmatpush1.msra.mxu0 %v448
      %846 = vmatprep.subr.mxu0 0.0
      %847 = vmatpush1.msra.mxu0 %v449
      %848 = vmatprep.subr.mxu0 0.0
      %849 = vmatpush1.msra.mxu0 %v450
      %850 = vmatprep.subr.mxu0 0.0
      %851 = vmatpush1.msra.mxu0 %v451
      %852 = vmatprep.subr.mxu0 0.0
      %853 = vmatpush1.msra.mxu0 %v452
      %854 = vmatprep.subr.mxu0 0.0
      %855 = vmatpush1.msra.mxu0 %v453
      %856 = vmatprep.subr.mxu0 0.0
      %857 = vmatpush1.msra.mxu0 %v454
      %858 = vmatprep.subr.mxu0 0.0
      %859 = vmatpush1.msra.mxu0 %v455
      %860 = vmatprep.subr.mxu0 0.0
      %861 = vmatpush1.msra.mxu0 %v456
      %862 = vmatprep.mubr.f32.mxu0 %v254
      %863 = vmatmul.mubr.f32.gmra.mrb[0].mxu0 %v253
      %v864 = vpop.f32.mrb[0].mxu0
      %v865 = vadd.f32 %v720, %v864
      %v866 = vpop.f32.mrb[0].mxu0
      %867 = vmatprep.mubr.f32.mxu0 %v261
      %868 = vmatmul.mubr.f32.gmra.mrb[0].mxu0 %v260
      %v869 = vpop.f32.mrb[0].mxu0
      %v870 = vadd.f32 %v725, %v869
      %v871 = vpop.f32.mrb[0].mxu0
      %872 = vmatprep.mubr.f32.mxu0 %v268
      %873 = vmatmul.mubr.f32.gmra.mrb[0].mxu0 %v267
      %v874 = vpop.f32.mrb[0].mxu0
      %v875 = vadd.f32 %v730, %v874
      %v876 = vpop.f32.mrb[0].mxu0
      %877 = vmatprep.mubr.f32.mxu0 %v275
      %878 = vmatmul.mubr.f32.gmra.mrb[0].mxu0 %v274
      %v879 = vpop.f32.mrb[0].mxu0
      %v880 = vadd.f32 %v735, %v879
      %v881 = vpop.f32.mrb[0].mxu0
      %882 = vmatprep.mubr.f32.mxu0 %v282
      %883 = vmatmul.mubr.f32.gmra.mrb[0].mxu0 %v281
      %v884 = vpop.f32.mrb[0].mxu0
      %v885 = vadd.f32 %v740, %v884
      %v886 = vpop.f32.mrb[0].mxu0
      %887 = vmatprep.mubr.f32.mxu0 %v289
      %888 = vmatmul.mubr.f32.gmra.mrb[0].mxu0 %v288
      %v889 = vpop.f32.mrb[0].mxu0
      %v890 = vadd.f32 %v745, %v889
      %v891 = vpop.f32.mrb[0].mxu0
      %892 = vmatprep.mubr.f32.mxu0 %v296
      %893 = vmatmul.mubr.f32.gmra.mrb[0].mxu0 %v295
      %v894 = vpop.f32.mrb[0].mxu0
      %v895 = vadd.f32 %v750, %v894
      %v896 = vpop.f32.mrb[0].mxu0
      %897 = vmatprep.mubr.f32.mxu0 %v303
      %898 = vmatmul.mubr.f32.gmra.mrb[0].mxu0 %v302
      %v899 = vpop.f32.mrb[0].mxu0
      %v900 = vadd.f32 %v755, %v899
      %v901 = vpop.f32.mrb[0].mxu0
      %902 = vmatprep.mubr.f32.mxu0 %v310
      %903 = vmatmul.mubr.f32.gmra.mrb[0].mxu0 %v309
      %v904 = vpop.f32.mrb[0].mxu0
      %v905 = vadd.f32 %v760, %v904
      %v906 = vpop.f32.mrb[0].mxu0
      %907 = vmatprep.mubr.f32.mxu0 %v317
      %908 = vmatmul.mubr.f32.gmra.mrb[0].mxu0 %v316
      %v909 = vpop.f32.mrb[0].mxu0
      %v910 = vadd.f32 %v765, %v909
      %v911 = vpop.f32.mrb[0].mxu0
      %912 = vmatprep.mubr.f32.mxu0 %v324
      %913 = vmatmul.mubr.f32.gmra.mrb[0].mxu0 %v323
      %v914 = vpop.f32.mrb[0].mxu0
      %v915 = vadd.f32 %v770, %v914
      %v916 = vpop.f32.mrb[0].mxu0
      %917 = vmatprep.mubr.f32.mxu0 %v331
      %918 = vmatmul.mubr.f32.gmra.mrb[0].mxu0 %v330
      %v919 = vpop.f32.mrb[0].mxu0
      %v920 = vadd.f32 %v775, %v919
      %v921 = vpop.f32.mrb[0].mxu0
      %922 = vmatprep.mubr.f32.mxu0 %v338
      %923 = vmatmul.mubr.f32.gmra.mrb[0].mxu0 %v337
      %v924 = vpop.f32.mrb[0].mxu0
      %v925 = vadd.f32 %v780, %v924
      %v926 = vpop.f32.mrb[0].mxu0
      %927 = vmatprep.mubr.f32.mxu0 %v345
      %928 = vmatmul.mubr.f32.gmra.mrb[0].mxu0 %v344
      %v929 = vpop.f32.mrb[0].mxu0
      %v930 = vadd.f32 %v785, %v929
      %v931 = vpop.f32.mrb[0].mxu0
      %932 = vmatprep.mubr.f32.mxu0 %v352
      %933 = vmatmul.mubr.f32.gmra.mrb[0].mxu0 %v351
      %v934 = vpop.f32.mrb[0].mxu0
      %v935 = vadd.f32 %v790, %v934
      %v936 = vpop.f32.mrb[0].mxu0
      %937 = vmatprep.mubr.f32.mxu0 %v359
      %938 = vmatmul.mubr.f32.gmra.mrb[0].mxu0 %v358
      %v939 = vpop.f32.mrb[0].mxu0
      %v940 = vadd.f32 %v795, %v939
      %v941 = vpop.f32.mrb[0].mxu0
      %942 = vdwg.mxu0
      %943 = vmatprep.subr.mxu0 0.0
      %944 = vmatpush1.msra.mxu0 %v457
      %945 = vmatprep.subr.mxu0 0.0
      %946 = vmatpush1.msra.mxu0 %v458
      %947 = vmatprep.subr.mxu0 0.0
      %948 = vmatpush1.msra.mxu0 0.0
      %949 = vmatprep.subr.mxu0 0.0
      %950 = vmatpush1.msra.mxu0 0.0
      %951 = vmatprep.subr.mxu0 0.0
      %952 = vmatpush1.msra.mxu0 0.0
      %953 = vmatprep.subr.mxu0 0.0
      %954 = vmatpush1.msra.mxu0 0.0
      %955 = vmatprep.subr.mxu0 0.0
      %956 = vmatpush1.msra.mxu0 0.0
      %957 = vmatprep.subr.mxu0 0.0
      %958 = vmatpush1.msra.mxu0 0.0
      %959 = vmatprep.subr.mxu0 0.0
      %960 = vmatpush1.msra.mxu0 0.0
      %961 = vmatprep.subr.mxu0 0.0
      %962 = vmatpush1.msra.mxu0 0.0
      %963 = vmatprep.subr.mxu0 0.0
      %964 = vmatpush1.msra.mxu0 0.0
      %965 = vmatprep.subr.mxu0 0.0
      %966 = vmatpush1.msra.mxu0 0.0
      %967 = vmatprep.subr.mxu0 0.0
      %968 = vmatpush1.msra.mxu0 0.0
      %969 = vmatprep.subr.mxu0 0.0
      %970 = vmatpush1.msra.mxu0 0.0
      %971 = vmatprep.subr.mxu0 0.0
      %972 = vmatpush1.msra.mxu0 0.0
      %973 = vmatprep.subr.mxu0 0.0
      %974 = vmatpush1.msra.mxu0 0.0
      %975 = vmatprep.subr.mxu0 0.0
      %976 = vmatpush1.msra.mxu0 0.0
      %977 = vmatprep.subr.mxu0 0.0
      %978 = vmatpush1.msra.mxu0 0.0
      %979 = vmatprep.subr.mxu0 0.0
      %980 = vmatpush1.msra.mxu0 0.0
      %981 = vmatprep.subr.mxu0 0.0
      %982 = vmatpush1.msra.mxu0 0.0
      %983 = vmatprep.subr.mxu0 0.0
      %984 = vmatpush1.msra.mxu0 0.0
      %985 = vmatprep.subr.mxu0 0.0
      %986 = vmatpush1.msra.mxu0 0.0
      %987 = vmatprep.subr.mxu0 0.0
      %988 = vmatpush1.msra.mxu0 0.0
      %989 = vmatprep.subr.mxu0 0.0
      %990 = vmatpush1.msra.mxu0 0.0
      %991 = vmatprep.subr.mxu0 0.0
      %992 = vmatpush1.msra.mxu0 0.0
      %993 = vmatprep.subr.mxu0 0.0
      %994 = vmatpush1.msra.mxu0 0.0
      %995 = vmatprep.subr.mxu0 0.0
      %996 = vmatpush1.msra.mxu0 0.0
      %997 = vmatprep.subr.mxu0 0.0
      %998 = vmatpush1.msra.mxu0 0.0
      %999 = vmatprep.subr.mxu0 0.0
      %1000 = vmatpush1.msra.mxu0 0.0
      %1001 = vmatprep.subr.mxu0 0.0
      %1002 = vmatpush1.msra.mxu0 0.0
      %1003 = vmatprep.subr.mxu0 0.0
      %1004 = vmatpush1.msra.mxu0 0.0
      %1005 = vmatprep.subr.mxu0 0.0
      %1006 = vmatpush1.msra.mxu0 0.0
      %1007 = vmatprep.mubr.f32.mxu0 0.0
      %1008 = vmatmul.mubr.f32.gmra.mrb[0].mxu0 %v461
      %v1009 = vpop.f32.mrb[0].mxu0
      %v1010 = vadd.f32 %v865, %v1009
      %v1011 = vpop.f32.mrb[0].mxu0
      %1012 = vmatprep.mubr.f32.mxu0 0.0
      %1013 = vmatmul.mubr.f32.gmra.mrb[0].mxu0 %v464
      %v1014 = vpop.f32.mrb[0].mxu0
      %v1015 = vadd.f32 %v870, %v1014
      %v1016 = vpop.f32.mrb[0].mxu0
      %1017 = vmatprep.mubr.f32.mxu0 0.0
      %1018 = vmatmul.mubr.f32.gmra.mrb[0].mxu0 %v467
      %v1019 = vpop.f32.mrb[0].mxu0
      %v1020 = vadd.f32 %v875, %v1019
      %v1021 = vpop.f32.mrb[0].mxu0
      %1022 = vmatprep.mubr.f32.mxu0 0.0
      %1023 = vmatmul.mubr.f32.gmra.mrb[0].mxu0 %v470
      %v1024 = vpop.f32.mrb[0].mxu0
      %v1025 = vadd.f32 %v880, %v1024
      %v1026 = vpop.f32.mrb[0].mxu0
      %1027 = vmatprep.mubr.f32.mxu0 0.0
      %1028 = vmatmul.mubr.f32.gmra.mrb[0].mxu0 %v473
      %v1029 = vpop.f32.mrb[0].mxu0
      %v1030 = vadd.f32 %v885, %v1029
      %v1031 = vpop.f32.mrb[0].mxu0
      %1032 = vmatprep.mubr.f32.mxu0 0.0
      %1033 = vmatmul.mubr.f32.gmra.mrb[0].mxu0 %v476
      %v1034 = vpop.f32.mrb[0].mxu0
      %v1035 = vadd.f32 %v890, %v1034
      %v1036 = vpop.f32.mrb[0].mxu0
      %1037 = vmatprep.mubr.f32.mxu0 0.0
      %1038 = vmatmul.mubr.f32.gmra.mrb[0].mxu0 %v479
      %v1039 = vpop.f32.mrb[0].mxu0
      %v1040 = vadd.f32 %v895, %v1039
      %v1041 = vpop.f32.mrb[0].mxu0
      %1042 = vmatprep.mubr.f32.mxu0 0.0
      %1043 = vmatmul.mubr.f32.gmra.mrb[0].mxu0 %v482
      %v1044 = vpop.f32.mrb[0].mxu0
      %v1045 = vadd.f32 %v900, %v1044
      %v1046 = vpop.f32.mrb[0].mxu0
      %1047 = vmatprep.mubr.f32.mxu0 0.0
      %1048 = vmatmul.mubr.f32.gmra.mrb[0].mxu0 %v485
      %v1049 = vpop.f32.mrb[0].mxu0
      %v1050 = vadd.f32 %v905, %v1049
      %v1051 = vpop.f32.mrb[0].mxu0
      %1052 = vmatprep.mubr.f32.mxu0 0.0
      %1053 = vmatmul.mubr.f32.gmra.mrb[0].mxu0 %v488
      %v1054 = vpop.f32.mrb[0].mxu0
      %v1055 = vadd.f32 %v910, %v1054
      %v1056 = vpop.f32.mrb[0].mxu0
      %1057 = vmatprep.mubr.f32.mxu0 0.0
      %1058 = vmatmul.mubr.f32.gmra.mrb[0].mxu0 %v491
      %v1059 = vpop.f32.mrb[0].mxu0
      %v1060 = vadd.f32 %v915, %v1059
      %v1061 = vpop.f32.mrb[0].mxu0
      %1062 = vmatprep.mubr.f32.mxu0 0.0
      %1063 = vmatmul.mubr.f32.gmra.mrb[0].mxu0 %v494
      %v1064 = vpop.f32.mrb[0].mxu0
      %v1065 = vadd.f32 %v920, %v1064
      %v1066 = vpop.f32.mrb[0].mxu0
      %1067 = vmatprep.mubr.f32.mxu0 0.0
      %1068 = vmatmul.mubr.f32.gmra.mrb[0].mxu0 %v497
      %v1069 = vpop.f32.mrb[0].mxu0
      %v1070 = vadd.f32 %v925, %v1069
      %v1071 = vpop.f32.mrb[0].mxu0
      %1072 = vmatprep.mubr.f32.mxu0 0.0
      %1073 = vmatmul.mubr.f32.gmra.mrb[0].mxu0 %v500
      %v1074 = vpop.f32.mrb[0].mxu0
      %v1075 = vadd.f32 %v930, %v1074
      %v1076 = vpop.f32.mrb[0].mxu0
      %1077 = vmatprep.mubr.f32.mxu0 0.0
      %1078 = vmatmul.mubr.f32.gmra.mrb[0].mxu0 %v503
      %v1079 = vpop.f32.mrb[0].mxu0
      %v1080 = vadd.f32 %v935, %v1079
      %v1081 = vpop.f32.mrb[0].mxu0
      %1082 = vmatprep.mubr.f32.mxu0 0.0
      %1083 = vmatmul.mubr.f32.gmra.mrb[0].mxu0 %v506
      %v1084 = vpop.f32.mrb[0].mxu0
      %v1085 = vadd.f32 %v940, %v1084
      %v1086 = vpop.f32.mrb[0].mxu0
      %1087 = vdwg.mxu0
      %v1088 = vld [vmem:[%s2] sm:$0xff]
      %v1089 = vld [vmem:[%s2 + $0x8] sm:$0xff]
      %v1090 = vld [vmem:[%s2 + $0x10] sm:$0xff]
      %v1091 = vld [vmem:[%s2 + $0x18] sm:$0xff]
      %v1092 = vld [vmem:[%s2 + $0x20] sm:$0xff]
      %v1093 = vld [vmem:[%s2 + $0x28] sm:$0xff]
      %v1094 = vld [vmem:[%s2 + $0x30] sm:$0xff]
      %v1095 = vld [vmem:[%s2 + $0x38] sm:$0xff]
      %v1096 = vld [vmem:[%s2 + $0x40] sm:$0xff]
      %v1097 = vld [vmem:[%s2 + $0x48] sm:$0xff]
      %v1098 = vld [vmem:[%s2 + $0x50] sm:$0xff]
      %v1099 = vld [vmem:[%s2 + $0x58] sm:$0xff]
      %v1100 = vld [vmem:[%s2 + $0x60] sm:$0xff]
      %v1101 = vld [vmem:[%s2 + $0x68] sm:$0xff]
      %v1102 = vld [vmem:[%s2 + $0x70] sm:$0xff]
      %v1103 = vld [vmem:[%s2 + $0x78] sm:$0xff]
      %v1104 = vld [vmem:[%s2 + $0x80] sm:$0xff]
      %v1105 = vld [vmem:[%s2 + $0x88] sm:$0xff]
      %v1106 = vld [vmem:[%s2 + $0x90] sm:$0xff]
      %v1107 = vld [vmem:[%s2 + $0x98] sm:$0xff]
      %v1108 = vld [vmem:[%s2 + $0xa0] sm:$0xff]
      %v1109 = vld [vmem:[%s2 + $0xa8] sm:$0xff]
      %v1110 = vld [vmem:[%s2 + $0xb0] sm:$0xff]
      %v1111 = vld [vmem:[%s2 + $0xb8] sm:$0xff]
      %v1112 = vld [vmem:[%s2 + $0xc0] sm:$0xff]
      %v1113 = vld [vmem:[%s2 + $0xc8] sm:$0xff]
      %v1114 = vld [vmem:[%s2 + $0xd0] sm:$0xff]
      %v1115 = vld [vmem:[%s2 + $0xd8] sm:$0xff]
      %v1116 = vld [vmem:[%s2 + $0xe0] sm:$0xff]
      %v1117 = vld [vmem:[%s2 + $0xe8] sm:$0xff]
      %v1118 = vld [vmem:[%s2 + $0xf0] sm:$0xff]
      %v1119 = vld [vmem:[%s2 + $0xf8] sm:$0xff]
      %v1120 = vld [vmem:[%s2 + $0x100] sm:$0xff]
      %v1121 = vld [vmem:[%s2 + $0x108] sm:$0xff]
      %v1122 = vld [vmem:[%s2 + $0x110] sm:$0xff]
      %v1123 = vld [vmem:[%s2 + $0x118] sm:$0xff]
      %v1124 = vld [vmem:[%s2 + $0x120] sm:$0xff]
      %v1125 = vld [vmem:[%s2 + $0x128] sm:$0xff]
      %v1126 = vld [vmem:[%s2 + $0x130] sm:$0xff]
      %v1127 = vld [vmem:[%s2 + $0x138] sm:$0xff]
      %v1128 = vld [vmem:[%s2 + $0x140] sm:$0xff]
      %v1129 = vld [vmem:[%s2 + $0x148] sm:$0xff]
      %v1130 = vld [vmem:[%s2 + $0x150] sm:$0xff]
      %v1131 = vld [vmem:[%s2 + $0x158] sm:$0xff]
      %v1132 = vld [vmem:[%s2 + $0x160] sm:$0xff]
      %v1133 = vld [vmem:[%s2 + $0x168] sm:$0xff]
      %v1134 = vld [vmem:[%s2 + $0x170] sm:$0xff]
      %v1135 = vld [vmem:[%s2 + $0x178] sm:$0xff]
      %v1136 = vld [vmem:[%s2 + $0x180] sm:$0xff]
      %v1137 = vld [vmem:[%s2 + $0x188] sm:$0xff]
      %v1138 = vld [vmem:[%s2 + $0x190] sm:$0xff]
      %v1139 = vld [vmem:[%s2 + $0x198] sm:$0xff]
      %v1140 = vld [vmem:[%s2 + $0x1a0] sm:$0xff]
      %v1141 = vld [vmem:[%s2 + $0x1a8] sm:$0xff]
      %v1142 = vld [vmem:[%s2 + $0x1b0] sm:$0xff]
      %v1143 = vld [vmem:[%s2 + $0x1b8] sm:$0xff]
      %v1144 = vld [vmem:[%s2 + $0x1c0] sm:$0xff]
      %v1145 = vld [vmem:[%s2 + $0x1c8] sm:$0xff]
      %v1146 = vld [vmem:[%s2 + $0x1d0] sm:$0xff]
      %v1147 = vld [vmem:[%s2 + $0x1d8] sm:$0xff]
      %v1148 = vld [vmem:[%s2 + $0x1e0] sm:$0xff]
      %v1149 = vld [vmem:[%s2 + $0x1e8] sm:$0xff]
      %v1150 = vld [vmem:[%s2 + $0x1f0] sm:$0xff]
      %v1151 = vld [vmem:[%s2 + $0x1f8] sm:$0xff]
      %v1152 = vld [vmem:[%s2 + $0x200] sm:$0xff]
      %v1153 = vld [vmem:[%s2 + $0x208] sm:$0xff]
      %v1154 = vld [vmem:[%s2 + $0x210] sm:$0xff]
      %v1155 = vld [vmem:[%s2 + $0x218] sm:$0xff]
      %v1156 = vld [vmem:[%s2 + $0x220] sm:$0xff]
      %v1157 = vld [vmem:[%s2 + $0x228] sm:$0xff]
      %v1158 = vld [vmem:[%s2 + $0x230] sm:$0xff]
      %v1159 = vld [vmem:[%s2 + $0x238] sm:$0xff]
      %v1160 = vld [vmem:[%s2 + $0x240] sm:$0xff]
      %v1161 = vld [vmem:[%s2 + $0x248] sm:$0xff]
      %v1162 = vld [vmem:[%s2 + $0x250] sm:$0xff]
      %v1163 = vld [vmem:[%s2 + $0x258] sm:$0xff]
      %v1164 = vld [vmem:[%s2 + $0x260] sm:$0xff]
      %v1165 = vld [vmem:[%s2 + $0x268] sm:$0xff]
      %v1166 = vld [vmem:[%s2 + $0x270] sm:$0xff]
      %v1167 = vld [vmem:[%s2 + $0x278] sm:$0xff]
      %v1168 = vld [vmem:[%s2 + $0x280] sm:$0xff]
      %v1169 = vld [vmem:[%s2 + $0x288] sm:$0xff]
      %v1170 = vld [vmem:[%s2 + $0x290] sm:$0xff]
      %v1171 = vld [vmem:[%s2 + $0x298] sm:$0xff]
      %v1172 = vld [vmem:[%s2 + $0x2a0] sm:$0xff]
      %v1173 = vld [vmem:[%s2 + $0x2a8] sm:$0xff]
      %v1174 = vld [vmem:[%s2 + $0x2b0] sm:$0xff]
      %v1175 = vld [vmem:[%s2 + $0x2b8] sm:$0xff]
      %v1176 = vld [vmem:[%s2 + $0x2c0] sm:$0xff]
      %v1177 = vld [vmem:[%s2 + $0x2c8] sm:$0xff]
      %v1178 = vld [vmem:[%s2 + $0x2d0] sm:$0xff]
      %v1179 = vld [vmem:[%s2 + $0x2d8] sm:$0xff]
      %v1180 = vld [vmem:[%s2 + $0x2e0] sm:$0xff]
      %v1181 = vld [vmem:[%s2 + $0x2e8] sm:$0xff]
      %v1182 = vld [vmem:[%s2 + $0x2f0] sm:$0xff]
      %v1183 = vld [vmem:[%s2 + $0x2f8] sm:$0xff]
      %v1184 = vld [vmem:[%s2 + $0x300] sm:$0xff]
      %v1185 = vld [vmem:[%s2 + $0x308] sm:$0xff]
      %v1186 = vld [vmem:[%s2 + $0x310] sm:$0xff]
      %v1187 = vld [vmem:[%s2 + $0x318] sm:$0xff]
      %v1188 = vld [vmem:[%s2 + $0x320] sm:$0xff]
      %v1189 = vld [vmem:[%s2 + $0x328] sm:$0xff]
      %v1190 = vld [vmem:[%s2 + $0x330] sm:$0xff]
      %v1191 = vld [vmem:[%s2 + $0x338] sm:$0xff]
      %v1192 = vld [vmem:[%s2 + $0x340] sm:$0xff]
      %v1193 = vld [vmem:[%s2 + $0x348] sm:$0xff]
      %v1194 = vld [vmem:[%s2 + $0x350] sm:$0xff]
      %v1195 = vld [vmem:[%s2 + $0x358] sm:$0xff]
      %v1196 = vld [vmem:[%s2 + $0x360] sm:$0xff]
      %v1197 = vld [vmem:[%s2 + $0x368] sm:$0xff]
      %v1198 = vld [vmem:[%s2 + $0x370] sm:$0xff]
      %v1199 = vld [vmem:[%s2 + $0x378] sm:$0xff]
      %v1200 = vld [vmem:[%s2 + $0x380] sm:$0xff]
      %v1201 = vld [vmem:[%s2 + $0x388] sm:$0xff]
      %v1202 = vld [vmem:[%s2 + $0x390] sm:$0xff]
      %v1203 = vld [vmem:[%s2 + $0x398] sm:$0xff]
      %v1204 = vld [vmem:[%s2 + $0x3a0] sm:$0xff]
      %v1205 = vld [vmem:[%s2 + $0x3a8] sm:$0xff]
      %v1206 = vld [vmem:[%s2 + $0x3b0] sm:$0xff]
      %v1207 = vld [vmem:[%s2 + $0x3b8] sm:$0xff]
      %v1208 = vld [vmem:[%s2 + $0x3c0] sm:$0xff]
      %v1209 = vld [vmem:[%s2 + $0x3c8] sm:$0xff]
      %v1210 = vld [vmem:[%s2 + $0x3d0] sm:$0xff]
      %v1211 = vld [vmem:[%s2 + $0x3d8] sm:$0xff]
      %v1212 = vld [vmem:[%s2 + $0x3e0] sm:$0xff]
      %v1213 = vld [vmem:[%s2 + $0x3e8] sm:$0xff]
      %v1214 = vld [vmem:[%s2 + $0x3f0] sm:$0xff]
      %v1215 = vld [vmem:[%s2 + $0x3f8] sm:$0xff]
      %v1216 = vld [vmem:[%s2 + $0x400] sm:$0xff]
      %v1217 = vld [vmem:[%s2 + $0x408] sm:$0xff]
      %v1218 = vld [vmem:[%s2 + $0x410] sm:$0xff]
      %v1219 = vld [vmem:[%s2 + $0x418] sm:$0xff]
      %v1220 = vld [vmem:[%s2 + $0x420] sm:$0xff]
      %v1221 = vld [vmem:[%s2 + $0x428] sm:$0xff]
      %v1222 = vld [vmem:[%s2 + $0x430] sm:$0xff]
      %v1223 = vld [vmem:[%s2 + $0x438] sm:$0xff]
      %v1224 = vld [vmem:[%s2 + $0x440] sm:$0xff]
      %v1225 = vld [vmem:[%s2 + $0x448] sm:$0xff]
      %v1226 = vld [vmem:[%s2 + $0x450] sm:$0xff]
      %v1227 = vld [vmem:[%s2 + $0x458] sm:$0xff]
      %v1228 = vld [vmem:[%s2 + $0x460] sm:$0xff]
      %v1229 = vld [vmem:[%s2 + $0x468] sm:$0xff]
      %v1230 = vld [vmem:[%s2 + $0x470] sm:$0xff]
      %v1231 = vld [vmem:[%s2 + $0x478] sm:$0xff]
      %v1232 = vld [vmem:[%s2 + $0x480] sm:$0xff]
      %v1233 = vld [vmem:[%s2 + $0x488] sm:$0xff]
      %v1234 = vld [vmem:[%s2 + $0x490] sm:$0xff]
      %v1235 = vld [vmem:[%s2 + $0x498] sm:$0xff]
      %v1236 = vld [vmem:[%s2 + $0x4a0] sm:$0xff]
      %v1237 = vld [vmem:[%s2 + $0x4a8] sm:$0xff]
      %v1238 = vld [vmem:[%s2 + $0x4b0] sm:$0xff]
      %v1239 = vld [vmem:[%s2 + $0x4b8] sm:$0xff]
      %v1240 = vld [vmem:[%s2 + $0x4c0] sm:$0xff]
      %v1241 = vld [vmem:[%s2 + $0x4c8] sm:$0xff]
      %v1242 = vld [vmem:[%s2 + $0x4d0] sm:$0xff]
      %v1243 = vld [vmem:[%s2 + $0x4d8] sm:$0xff]
      %v1244 = vld [vmem:[%s2 + $0x4e0] sm:$0xff]
      %v1245 = vld [vmem:[%s2 + $0x4e8] sm:$0xff]
      %v1246 = vld [vmem:[%s2 + $0x4f0] sm:$0xff]
      %v1247 = vld [vmem:[%s2 + $0x4f8] sm:$0xff]
      %v1248 = vld [vmem:[%s2 + $0x500] sm:$0xff]
      %v1249 = vld [vmem:[%s2 + $0x508] sm:$0xff]
      %v1250 = vld [vmem:[%s2 + $0x510] sm:$0xff]
      %v1251 = vld [vmem:[%s2 + $0x518] sm:$0xff]
      %v1252 = vld [vmem:[%s2 + $0x520] sm:$0xff]
      %v1253 = vld [vmem:[%s2 + $0x528] sm:$0xff]
      %v1254 = vld [vmem:[%s2 + $0x530] sm:$0xff]
      %v1255 = vld [vmem:[%s2 + $0x538] sm:$0xff]
      %v1256 = vld [vmem:[%s2 + $0x540] sm:$0xff]
      %v1257 = vld [vmem:[%s2 + $0x548] sm:$0xff]
      %v1258 = vld [vmem:[%s2 + $0x550] sm:$0xff]
      %v1259 = vld [vmem:[%s2 + $0x558] sm:$0xff]
      %v1260 = vld [vmem:[%s2 + $0x560] sm:$0xff]
      %v1261 = vld [vmem:[%s2 + $0x568] sm:$0xff]
      %v1262 = vld [vmem:[%s2 + $0x570] sm:$0xff]
      %v1263 = vld [vmem:[%s2 + $0x578] sm:$0xff]
      %v1264 = vld [vmem:[%s2 + $0x580] sm:$0xff]
      %v1265 = vld [vmem:[%s2 + $0x588] sm:$0xff]
      %v1266 = vld [vmem:[%s2 + $0x590] sm:$0xff]
      %v1267 = vld [vmem:[%s2 + $0x598] sm:$0xff]
      %v1268 = vld [vmem:[%s2 + $0x5a0] sm:$0xff]
      %v1269 = vld [vmem:[%s2 + $0x5a8] sm:$0xff]
      %v1270 = vld [vmem:[%s2 + $0x5b0] sm:$0xff]
      %v1271 = vld [vmem:[%s2 + $0x5b8] sm:$0xff]
      %v1272 = vld [vmem:[%s2 + $0x5c0] sm:$0xff]
      %v1273 = vld [vmem:[%s2 + $0x5c8] sm:$0xff]
      %v1274 = vld [vmem:[%s2 + $0x5d0] sm:$0xff]
      %v1275 = vld [vmem:[%s2 + $0x5d8] sm:$0xff]
      %v1276 = vld [vmem:[%s2 + $0x5e0] sm:$0xff]
      %v1277 = vld [vmem:[%s2 + $0x5e8] sm:$0xff]
      %v1278 = vld [vmem:[%s2 + $0x5f0] sm:$0xff]
      %v1279 = vld [vmem:[%s2 + $0x5f8] sm:$0xff]
      %v1280 = vld [vmem:[%s2 + $0x600] sm:$0xff]
      %v1281 = vld [vmem:[%s2 + $0x608] sm:$0xff]
      %v1282 = vld [vmem:[%s2 + $0x610] sm:$0xff]
      %v1283 = vld [vmem:[%s2 + $0x618] sm:$0xff]
      %v1284 = vld [vmem:[%s2 + $0x620] sm:$0xff]
      %v1285 = vld [vmem:[%s2 + $0x628] sm:$0xff]
      %v1286 = vld [vmem:[%s2 + $0x630] sm:$0xff]
      %v1287 = vld [vmem:[%s2 + $0x638] sm:$0xff]
      %v1288 = vld [vmem:[%s2 + $0x640] sm:$0xff]
      %v1289 = vld [vmem:[%s2 + $0x648] sm:$0xff]
      %v1290 = vld [vmem:[%s2 + $0x650] sm:$0xff]
      %v1291 = vld [vmem:[%s2 + $0x658] sm:$0xff]
      %v1292 = vld [vmem:[%s2 + $0x660] sm:$0xff]
      %v1293 = vld [vmem:[%s2 + $0x668] sm:$0xff]
      %v1294 = vld [vmem:[%s2 + $0x670] sm:$0xff]
      %v1295 = vld [vmem:[%s2 + $0x678] sm:$0xff]
      %v1296 = vld [vmem:[%s2 + $0x680] sm:$0xff]
      %v1297 = vld [vmem:[%s2 + $0x688] sm:$0xff]
      %v1298 = vld [vmem:[%s2 + $0x690] sm:$0xff]
      %v1299 = vld [vmem:[%s2 + $0x698] sm:$0xff]
      %v1300 = vld [vmem:[%s2 + $0x6a0] sm:$0xff]
      %v1301 = vld [vmem:[%s2 + $0x6a8] sm:$0xff]
      %v1302 = vld [vmem:[%s2 + $0x6b0] sm:$0xff]
      %v1303 = vld [vmem:[%s2 + $0x6b8] sm:$0xff]
      %v1304 = vld [vmem:[%s2 + $0x6c0] sm:$0xff]
      %v1305 = vld [vmem:[%s2 + $0x6c8] sm:$0xff]
      %v1306 = vld [vmem:[%s2 + $0x6d0] sm:$0xff]
      %v1307 = vld [vmem:[%s2 + $0x6d8] sm:$0xff]
      %v1308 = vld [vmem:[%s2 + $0x6e0] sm:$0xff]
      %v1309 = vld [vmem:[%s2 + $0x6e8] sm:$0xff]
      %v1310 = vld [vmem:[%s2 + $0x6f0] sm:$0xff]
      %v1311 = vld [vmem:[%s2 + $0x6f8] sm:$0xff]
      %v1312 = vld [vmem:[%s3] sm:$0xff]
      %v1313 = vld [vmem:[%s3 + $0x8] sm:$0x3f]
      %v1316 = vlaneseq
      %v1317 = vshrl.u32 %v1316, 7
      %v1318 = vsub.s32 0, %v1317
      %v1319 = vrot.slane %v1312, %v1318
      %v1320 = vlaneseq
      %v1321 = vshrl.u32 %v1320, 7
      %v1322 = vsub.s32 1, %v1321
      %v1323 = vrot.slane %v1312, %v1322
      %v1324 = vlaneseq
      %v1325 = vshrl.u32 %v1324, 7
      %v1326 = vsub.s32 2, %v1325
      %v1327 = vrot.slane %v1312, %v1326
      %v1328 = vlaneseq
      %v1329 = vshrl.u32 %v1328, 7
      %v1330 = vsub.s32 3, %v1329
      %v1331 = vrot.slane %v1312, %v1330
      %v1332 = vlaneseq
      %v1333 = vshrl.u32 %v1332, 7
      %v1334 = vsub.s32 4, %v1333
      %v1335 = vrot.slane %v1312, %v1334
      %v1336 = vlaneseq
      %v1337 = vshrl.u32 %v1336, 7
      %v1338 = vsub.s32 5, %v1337
      %v1339 = vrot.slane %v1312, %v1338
      %v1340 = vlaneseq
      %v1341 = vshrl.u32 %v1340, 7
      %v1342 = vsub.s32 6, %v1341
      %v1343 = vrot.slane %v1312, %v1342
      %v1344 = vlaneseq
      %v1345 = vshrl.u32 %v1344, 7
      %v1346 = vsub.s32 7, %v1345
      %v1347 = vrot.slane %v1312, %v1346
      %v1348 = vlaneseq
      %v1349 = vshrl.u32 %v1348, 7
      %v1350 = vsub.s32 0, %v1349
      %v1351 = vrot.slane %v1313, %v1350
      %v1352 = vlaneseq
      %v1353 = vshrl.u32 %v1352, 7
      %v1354 = vsub.s32 1, %v1353
      %v1355 = vrot.slane %v1313, %v1354
      %v1356 = vlaneseq
      %v1357 = vshrl.u32 %v1356, 7
      %v1358 = vsub.s32 2, %v1357
      %v1359 = vrot.slane %v1313, %v1358
      %v1360 = vlaneseq
      %v1361 = vshrl.u32 %v1360, 7
      %v1362 = vsub.s32 3, %v1361
      %v1363 = vrot.slane %v1313, %v1362
      %v1364 = vlaneseq
      %v1365 = vshrl.u32 %v1364, 7
      %v1366 = vsub.s32 4, %v1365
      %v1367 = vrot.slane %v1313, %v1366
      %v1368 = vlaneseq
      %v1369 = vshrl.u32 %v1368, 7
      %v1370 = vsub.s32 5, %v1369
      %v1371 = vrot.slane %v1313, %v1370
      %1386 = vmatprep.subr.mxu0 %v1089
      %1387 = vmatpush1.msra.mxu0 %v1088
      %1388 = vmatprep.subr.mxu0 %v1103
      %1389 = vmatpush1.msra.mxu0 %v1102
      %1390 = vmatprep.subr.mxu0 %v1117
      %1391 = vmatpush1.msra.mxu0 %v1116
      %1392 = vmatprep.subr.mxu0 %v1131
      %1393 = vmatpush1.msra.mxu0 %v1130
      %1394 = vmatprep.subr.mxu0 %v1145
      %1395 = vmatpush1.msra.mxu0 %v1144
      %1396 = vmatprep.subr.mxu0 %v1159
      %1397 = vmatpush1.msra.mxu0 %v1158
      %1398 = vmatprep.subr.mxu0 %v1173
      %1399 = vmatpush1.msra.mxu0 %v1172
      %1400 = vmatprep.subr.mxu0 %v1187
      %1401 = vmatpush1.msra.mxu0 %v1186
      %1402 = vmatprep.subr.mxu0 %v1201
      %1403 = vmatpush1.msra.mxu0 %v1200
      %1404 = vmatprep.subr.mxu0 %v1215
      %1405 = vmatpush1.msra.mxu0 %v1214
      %1406 = vmatprep.subr.mxu0 %v1229
      %1407 = vmatpush1.msra.mxu0 %v1228
      %1408 = vmatprep.subr.mxu0 %v1243
      %1409 = vmatpush1.msra.mxu0 %v1242
      %1410 = vmatprep.subr.mxu0 %v1257
      %1411 = vmatpush1.msra.mxu0 %v1256
      %1412 = vmatprep.subr.mxu0 %v1271
      %1413 = vmatpush1.msra.mxu0 %v1270
      %1414 = vmatprep.subr.mxu0 %v1285
      %1415 = vmatpush1.msra.mxu0 %v1284
      %1416 = vmatprep.subr.mxu0 %v1299
      %1417 = vmatpush1.msra.mxu0 %v1298
      %1418 = vmatprep.subr.mxu0 0.0
      %1419 = vmatpush1.msra.mxu0 0.0
      %1420 = vmatprep.subr.mxu0 0.0
      %1421 = vmatpush1.msra.mxu0 0.0
      %1422 = vmatprep.subr.mxu0 0.0
      %1423 = vmatpush1.msra.mxu0 0.0
      %1424 = vmatprep.subr.mxu0 0.0
      %1425 = vmatpush1.msra.mxu0 0.0
      %1426 = vmatprep.subr.mxu0 0.0
      %1427 = vmatpush1.msra.mxu0 0.0
      %1428 = vmatprep.subr.mxu0 0.0
      %1429 = vmatpush1.msra.mxu0 0.0
      %1430 = vmatprep.subr.mxu0 0.0
      %1431 = vmatpush1.msra.mxu0 0.0
      %1432 = vmatprep.subr.mxu0 0.0
      %1433 = vmatpush1.msra.mxu0 0.0
      %1434 = vmatprep.subr.mxu0 0.0
      %1435 = vmatpush1.msra.mxu0 0.0
      %1436 = vmatprep.subr.mxu0 0.0
      %1437 = vmatpush1.msra.mxu0 0.0
      %1438 = vmatprep.subr.mxu0 0.0
      %1439 = vmatpush1.msra.mxu0 0.0
      %1440 = vmatprep.subr.mxu0 0.0
      %1441 = vmatpush1.msra.mxu0 0.0
      %1442 = vmatprep.subr.mxu0 0.0
      %1443 = vmatpush1.msra.mxu0 0.0
      %1444 = vmatprep.subr.mxu0 0.0
      %1445 = vmatpush1.msra.mxu0 0.0
      %1446 = vmatprep.subr.mxu0 0.0
      %1447 = vmatpush1.msra.mxu0 0.0
      %1448 = vmatprep.subr.mxu0 0.0
      %1449 = vmatpush1.msra.mxu0 0.0
      %1450 = vmatprep.mubr.f32.mxu0 0.0
      %1451 = vmatmul.mubr.f32.gmra.mrb[0].mxu0 %v1010
      %v1452 = vpop.f32.mrb[0].mxu0
      %v1453 = vadd.f32 %v1319, %v1452
      %v1454 = vpop.f32.mrb[0].mxu0
      %v1455 = vadd.f32 %v1323, %v1454
      %1456 = vmatprep.mubr.f32.mxu0 0.0
      %1457 = vmatmul.mubr.f32.gmra.mrb[0].mxu0 %v1015
      %v1458 = vpop.f32.mrb[0].mxu0
      %v1459 = vadd.f32 %v1319, %v1458
      %v1460 = vpop.f32.mrb[0].mxu0
      %v1461 = vadd.f32 %v1323, %v1460
      %1462 = vmatprep.mubr.f32.mxu0 0.0
      %1463 = vmatmul.mubr.f32.gmra.mrb[0].mxu0 %v1020
      %v1464 = vpop.f32.mrb[0].mxu0
      %v1465 = vadd.f32 %v1319, %v1464
      %v1466 = vpop.f32.mrb[0].mxu0
      %v1467 = vadd.f32 %v1323, %v1466
      %1468 = vmatprep.mubr.f32.mxu0 0.0
      %1469 = vmatmul.mubr.f32.gmra.mrb[0].mxu0 %v1025
      %v1470 = vpop.f32.mrb[0].mxu0
      %v1471 = vadd.f32 %v1319, %v1470
      %v1472 = vpop.f32.mrb[0].mxu0
      %v1473 = vadd.f32 %v1323, %v1472
      %1474 = vmatprep.mubr.f32.mxu0 0.0
      %1475 = vmatmul.mubr.f32.gmra.mrb[0].mxu0 %v1030
      %v1476 = vpop.f32.mrb[0].mxu0
      %v1477 = vadd.f32 %v1319, %v1476
      %v1478 = vpop.f32.mrb[0].mxu0
      %v1479 = vadd.f32 %v1323, %v1478
      %1480 = vmatprep.mubr.f32.mxu0 0.0
      %1481 = vmatmul.mubr.f32.gmra.mrb[0].mxu0 %v1035
      %v1482 = vpop.f32.mrb[0].mxu0
      %v1483 = vadd.f32 %v1319, %v1482
      %v1484 = vpop.f32.mrb[0].mxu0
      %v1485 = vadd.f32 %v1323, %v1484
      %1486 = vmatprep.mubr.f32.mxu0 0.0
      %1487 = vmatmul.mubr.f32.gmra.mrb[0].mxu0 %v1040
      %v1488 = vpop.f32.mrb[0].mxu0
      %v1489 = vadd.f32 %v1319, %v1488
      %v1490 = vpop.f32.mrb[0].mxu0
      %v1491 = vadd.f32 %v1323, %v1490
      %1492 = vmatprep.mubr.f32.mxu0 0.0
      %1493 = vmatmul.mubr.f32.gmra.mrb[0].mxu0 %v1045
      %v1494 = vpop.f32.mrb[0].mxu0
      %v1495 = vadd.f32 %v1319, %v1494
      %v1496 = vpop.f32.mrb[0].mxu0
      %v1497 = vadd.f32 %v1323, %v1496
      %1498 = vmatprep.mubr.f32.mxu0 0.0
      %1499 = vmatmul.mubr.f32.gmra.mrb[0].mxu0 %v1050
      %v1500 = vpop.f32.mrb[0].mxu0
      %v1501 = vadd.f32 %v1319, %v1500
      %v1502 = vpop.f32.mrb[0].mxu0
      %v1503 = vadd.f32 %v1323, %v1502
      %1504 = vmatprep.mubr.f32.mxu0 0.0
      %1505 = vmatmul.mubr.f32.gmra.mrb[0].mxu0 %v1055
      %v1506 = vpop.f32.mrb[0].mxu0
      %v1507 = vadd.f32 %v1319, %v1506
      %v1508 = vpop.f32.mrb[0].mxu0
      %v1509 = vadd.f32 %v1323, %v1508
      %1510 = vmatprep.mubr.f32.mxu0 0.0
      %1511 = vmatmul.mubr.f32.gmra.mrb[0].mxu0 %v1060
      %v1512 = vpop.f32.mrb[0].mxu0
      %v1513 = vadd.f32 %v1319, %v1512
      %v1514 = vpop.f32.mrb[0].mxu0
      %v1515 = vadd.f32 %v1323, %v1514
      %1516 = vmatprep.mubr.f32.mxu0 0.0
      %1517 = vmatmul.mubr.f32.gmra.mrb[0].mxu0 %v1065
      %v1518 = vpop.f32.mrb[0].mxu0
      %v1519 = vadd.f32 %v1319, %v1518
      %v1520 = vpop.f32.mrb[0].mxu0
      %v1521 = vadd.f32 %v1323, %v1520
      %1522 = vmatprep.mubr.f32.mxu0 0.0
      %1523 = vmatmul.mubr.f32.gmra.mrb[0].mxu0 %v1070
      %v1524 = vpop.f32.mrb[0].mxu0
      %v1525 = vadd.f32 %v1319, %v1524
      %v1526 = vpop.f32.mrb[0].mxu0
      %v1527 = vadd.f32 %v1323, %v1526
      %1528 = vmatprep.mubr.f32.mxu0 0.0
      %1529 = vmatmul.mubr.f32.gmra.mrb[0].mxu0 %v1075
      %v1530 = vpop.f32.mrb[0].mxu0
      %v1531 = vadd.f32 %v1319, %v1530
      %v1532 = vpop.f32.mrb[0].mxu0
      %v1533 = vadd.f32 %v1323, %v1532
      %1534 = vmatprep.mubr.f32.mxu0 0.0
      %1535 = vmatmul.mubr.f32.gmra.mrb[0].mxu0 %v1080
      %v1536 = vpop.f32.mrb[0].mxu0
      %v1537 = vadd.f32 %v1319, %v1536
      %v1538 = vpop.f32.mrb[0].mxu0
      %v1539 = vadd.f32 %v1323, %v1538
      %1540 = vmatprep.mubr.f32.mxu0 0.0
      %1541 = vmatmul.mubr.f32.gmra.mrb[0].mxu0 %v1085
      %v1542 = vpop.f32.mrb[0].mxu0
      %v1543 = vadd.f32 %v1319, %v1542
      %v1544 = vpop.f32.mrb[0].mxu0
      %v1545 = vadd.f32 %v1323, %v1544
      %1546 = vdwg.mxu0
      %1547 = vmatprep.subr.mxu0 %v1091
      %1548 = vmatpush1.msra.mxu0 %v1090
      %1549 = vmatprep.subr.mxu0 %v1105
      %1550 = vmatpush1.msra.mxu0 %v1104
      %1551 = vmatprep.subr.mxu0 %v1119
      %1552 = vmatpush1.msra.mxu0 %v1118
      %1553 = vmatprep.subr.mxu0 %v1133
      %1554 = vmatpush1.msra.mxu0 %v1132
      %1555 = vmatprep.subr.mxu0 %v1147
      %1556 = vmatpush1.msra.mxu0 %v1146
      %1557 = vmatprep.subr.mxu0 %v1161
      %1558 = vmatpush1.msra.mxu0 %v1160
      %1559 = vmatprep.subr.mxu0 %v1175
      %1560 = vmatpush1.msra.mxu0 %v1174
      %1561 = vmatprep.subr.mxu0 %v1189
      %1562 = vmatpush1.msra.mxu0 %v1188
      %1563 = vmatprep.subr.mxu0 %v1203
      %1564 = vmatpush1.msra.mxu0 %v1202
      %1565 = vmatprep.subr.mxu0 %v1217
      %1566 = vmatpush1.msra.mxu0 %v1216
      %1567 = vmatprep.subr.mxu0 %v1231
      %1568 = vmatpush1.msra.mxu0 %v1230
      %1569 = vmatprep.subr.mxu0 %v1245
      %1570 = vmatpush1.msra.mxu0 %v1244
      %1571 = vmatprep.subr.mxu0 %v1259
      %1572 = vmatpush1.msra.mxu0 %v1258
      %1573 = vmatprep.subr.mxu0 %v1273
      %1574 = vmatpush1.msra.mxu0 %v1272
      %1575 = vmatprep.subr.mxu0 %v1287
      %1576 = vmatpush1.msra.mxu0 %v1286
      %1577 = vmatprep.subr.mxu0 %v1301
      %1578 = vmatpush1.msra.mxu0 %v1300
      %1579 = vmatprep.subr.mxu0 0.0
      %1580 = vmatpush1.msra.mxu0 0.0
      %1581 = vmatprep.subr.mxu0 0.0
      %1582 = vmatpush1.msra.mxu0 0.0
      %1583 = vmatprep.subr.mxu0 0.0
      %1584 = vmatpush1.msra.mxu0 0.0
      %1585 = vmatprep.subr.mxu0 0.0
      %1586 = vmatpush1.msra.mxu0 0.0
      %1587 = vmatprep.subr.mxu0 0.0
      %1588 = vmatpush1.msra.mxu0 0.0
      %1589 = vmatprep.subr.mxu0 0.0
      %1590 = vmatpush1.msra.mxu0 0.0
      %1591 = vmatprep.subr.mxu0 0.0
      %1592 = vmatpush1.msra.mxu0 0.0
      %1593 = vmatprep.subr.mxu0 0.0
      %1594 = vmatpush1.msra.mxu0 0.0
      %1595 = vmatprep.subr.mxu0 0.0
      %1596 = vmatpush1.msra.mxu0 0.0
      %1597 = vmatprep.subr.mxu0 0.0
      %1598 = vmatpush1.msra.mxu0 0.0
      %1599 = vmatprep.subr.mxu0 0.0
      %1600 = vmatpush1.msra.mxu0 0.0
      %1601 = vmatprep.subr.mxu0 0.0
      %1602 = vmatpush1.msra.mxu0 0.0
      %1603 = vmatprep.subr.mxu0 0.0
      %1604 = vmatpush1.msra.mxu0 0.0
      %1605 = vmatprep.subr.mxu0 0.0
      %1606 = vmatpush1.msra.mxu0 0.0
      %1607 = vmatprep.subr.mxu0 0.0
      %1608 = vmatpush1.msra.mxu0 0.0
      %1609 = vmatprep.subr.mxu0 0.0
      %1610 = vmatpush1.msra.mxu0 0.0
      %1611 = vmatprep.mubr.f32.mxu0 0.0
      %1612 = vmatmul.mubr.f32.gmra.mrb[0].mxu0 %v1010
      %v1613 = vpop.f32.mrb[0].mxu0
      %v1614 = vadd.f32 %v1327, %v1613
      %v1615 = vpop.f32.mrb[0].mxu0
      %v1616 = vadd.f32 %v1331, %v1615
      %1617 = vmatprep.mubr.f32.mxu0 0.0
      %1618 = vmatmul.mubr.f32.gmra.mrb[0].mxu0 %v1015
      %v1619 = vpop.f32.mrb[0].mxu0
      %v1620 = vadd.f32 %v1327, %v1619
      %v1621 = vpop.f32.mrb[0].mxu0
      %v1622 = vadd.f32 %v1331, %v1621
      %1623 = vmatprep.mubr.f32.mxu0 0.0
      %1624 = vmatmul.mubr.f32.gmra.mrb[0].mxu0 %v1020
      %v1625 = vpop.f32.mrb[0].mxu0
      %v1626 = vadd.f32 %v1327, %v1625
      %v1627 = vpop.f32.mrb[0].mxu0
      %v1628 = vadd.f32 %v1331, %v1627
      %1629 = vmatprep.mubr.f32.mxu0 0.0
      %1630 = vmatmul.mubr.f32.gmra.mrb[0].mxu0 %v1025
      %v1631 = vpop.f32.mrb[0].mxu0
      %v1632 = vadd.f32 %v1327, %v1631
      %v1633 = vpop.f32.mrb[0].mxu0
      %v1634 = vadd.f32 %v1331, %v1633
      %1635 = vmatprep.mubr.f32.mxu0 0.0
      %1636 = vmatmul.mubr.f32.gmra.mrb[0].mxu0 %v1030
      %v1637 = vpop.f32.mrb[0].mxu0
      %v1638 = vadd.f32 %v1327, %v1637
      %v1639 = vpop.f32.mrb[0].mxu0
      %v1640 = vadd.f32 %v1331, %v1639
      %1641 = vmatprep.mubr.f32.mxu0 0.0
      %1642 = vmatmul.mubr.f32.gmra.mrb[0].mxu0 %v1035
      %v1643 = vpop.f32.mrb[0].mxu0
      %v1644 = vadd.f32 %v1327, %v1643
      %v1645 = vpop.f32.mrb[0].mxu0
      %v1646 = vadd.f32 %v1331, %v1645
      %1647 = vmatprep.mubr.f32.mxu0 0.0
      %1648 = vmatmul.mubr.f32.gmra.mrb[0].mxu0 %v1040
      %v1649 = vpop.f32.mrb[0].mxu0
      %v1650 = vadd.f32 %v1327, %v1649
      %v1651 = vpop.f32.mrb[0].mxu0
      %v1652 = vadd.f32 %v1331, %v1651
      %1653 = vmatprep.mubr.f32.mxu0 0.0
      %1654 = vmatmul.mubr.f32.gmra.mrb[0].mxu0 %v1045
      %v1655 = vpop.f32.mrb[0].mxu0
      %v1656 = vadd.f32 %v1327, %v1655
      %v1657 = vpop.f32.mrb[0].mxu0
      %v1658 = vadd.f32 %v1331, %v1657
      %1659 = vmatprep.mubr.f32.mxu0 0.0
      %1660 = vmatmul.mubr.f32.gmra.mrb[0].mxu0 %v1050
      %v1661 = vpop.f32.mrb[0].mxu0
      %v1662 = vadd.f32 %v1327, %v1661
      %v1663 = vpop.f32.mrb[0].mxu0
      %v1664 = vadd.f32 %v1331, %v1663
      %1665 = vmatprep.mubr.f32.mxu0 0.0
      %1666 = vmatmul.mubr.f32.gmra.mrb[0].mxu0 %v1055
      %v1667 = vpop.f32.mrb[0].mxu0
      %v1668 = vadd.f32 %v1327, %v1667
      %v1669 = vpop.f32.mrb[0].mxu0
      %v1670 = vadd.f32 %v1331, %v1669
      %1671 = vmatprep.mubr.f32.mxu0 0.0
      %1672 = vmatmul.mubr.f32.gmra.mrb[0].mxu0 %v1060
      %v1673 = vpop.f32.mrb[0].mxu0
      %v1674 = vadd.f32 %v1327, %v1673
      %v1675 = vpop.f32.mrb[0].mxu0
      %v1676 = vadd.f32 %v1331, %v1675
      %1677 = vmatprep.mubr.f32.mxu0 0.0
      %1678 = vmatmul.mubr.f32.gmra.mrb[0].mxu0 %v1065
      %v1679 = vpop.f32.mrb[0].mxu0
      %v1680 = vadd.f32 %v1327, %v1679
      %v1681 = vpop.f32.mrb[0].mxu0
      %v1682 = vadd.f32 %v1331, %v1681
      %1683 = vmatprep.mubr.f32.mxu0 0.0
      %1684 = vmatmul.mubr.f32.gmra.mrb[0].mxu0 %v1070
      %v1685 = vpop.f32.mrb[0].mxu0
      %v1686 = vadd.f32 %v1327, %v1685
      %v1687 = vpop.f32.mrb[0].mxu0
      %v1688 = vadd.f32 %v1331, %v1687
      %1689 = vmatprep.mubr.f32.mxu0 0.0
      %1690 = vmatmul.mubr.f32.gmra.mrb[0].mxu0 %v1075
      %v1691 = vpop.f32.mrb[0].mxu0
      %v1692 = vadd.f32 %v1327, %v1691
      %v1693 = vpop.f32.mrb[0].mxu0
      %v1694 = vadd.f32 %v1331, %v1693
      %1695 = vmatprep.mubr.f32.mxu0 0.0
      %1696 = vmatmul.mubr.f32.gmra.mrb[0].mxu0 %v1080
      %v1697 = vpop.f32.mrb[0].mxu0
      %v1698 = vadd.f32 %v1327, %v1697
      %v1699 = vpop.f32.mrb[0].mxu0
      %v1700 = vadd.f32 %v1331, %v1699
      %1701 = vmatprep.mubr.f32.mxu0 0.0
      %1702 = vmatmul.mubr.f32.gmra.mrb[0].mxu0 %v1085
      %v1703 = vpop.f32.mrb[0].mxu0
      %v1704 = vadd.f32 %v1327, %v1703
      %v1705 = vpop.f32.mrb[0].mxu0
      %v1706 = vadd.f32 %v1331, %v1705
      %1707 = vdwg.mxu0
      %1708 = vmatprep.subr.mxu0 %v1093
      %1709 = vmatpush1.msra.mxu0 %v1092
      %1710 = vmatprep.subr.mxu0 %v1107
      %1711 = vmatpush1.msra.mxu0 %v1106
      %1712 = vmatprep.subr.mxu0 %v1121
      %1713 = vmatpush1.msra.mxu0 %v1120
      %1714 = vmatprep.subr.mxu0 %v1135
      %1715 = vmatpush1.msra.mxu0 %v1134
      %1716 = vmatprep.subr.mxu0 %v1149
      %1717 = vmatpush1.msra.mxu0 %v1148
      %1718 = vmatprep.subr.mxu0 %v1163
      %1719 = vmatpush1.msra.mxu0 %v1162
      %1720 = vmatprep.subr.mxu0 %v1177
      %1721 = vmatpush1.msra.mxu0 %v1176
      %1722 = vmatprep.subr.mxu0 %v1191
      %1723 = vmatpush1.msra.mxu0 %v1190
      %1724 = vmatprep.subr.mxu0 %v1205
      %1725 = vmatpush1.msra.mxu0 %v1204
      %1726 = vmatprep.subr.mxu0 %v1219
      %1727 = vmatpush1.msra.mxu0 %v1218
      %1728 = vmatprep.subr.mxu0 %v1233
      %1729 = vmatpush1.msra.mxu0 %v1232
      %1730 = vmatprep.subr.mxu0 %v1247
      %1731 = vmatpush1.msra.mxu0 %v1246
      %1732 = vmatprep.subr.mxu0 %v1261
      %1733 = vmatpush1.msra.mxu0 %v1260
      %1734 = vmatprep.subr.mxu0 %v1275
      %1735 = vmatpush1.msra.mxu0 %v1274
      %1736 = vmatprep.subr.mxu0 %v1289
      %1737 = vmatpush1.msra.mxu0 %v1288
      %1738 = vmatprep.subr.mxu0 %v1303
      %1739 = vmatpush1.msra.mxu0 %v1302
      %1740 = vmatprep.subr.mxu0 0.0
      %1741 = vmatpush1.msra.mxu0 0.0
      %1742 = vmatprep.subr.mxu0 0.0
      %1743 = vmatpush1.msra.mxu0 0.0
      %1744 = vmatprep.subr.mxu0 0.0
      %1745 = vmatpush1.msra.mxu0 0.0
      %1746 = vmatprep.subr.mxu0 0.0
      %1747 = vmatpush1.msra.mxu0 0.0
      %1748 = vmatprep.subr.mxu0 0.0
      %1749 = vmatpush1.msra.mxu0 0.0
      %1750 = vmatprep.subr.mxu0 0.0
      %1751 = vmatpush1.msra.mxu0 0.0
      %1752 = vmatprep.subr.mxu0 0.0
      %1753 = vmatpush1.msra.mxu0 0.0
      %1754 = vmatprep.subr.mxu0 0.0
      %1755 = vmatpush1.msra.mxu0 0.0
      %1756 = vmatprep.subr.mxu0 0.0
      %1757 = vmatpush1.msra.mxu0 0.0
      %1758 = vmatprep.subr.mxu0 0.0
      %1759 = vmatpush1.msra.mxu0 0.0
      %1760 = vmatprep.subr.mxu0 0.0
      %1761 = vmatpush1.msra.mxu0 0.0
      %1762 = vmatprep.subr.mxu0 0.0
      %1763 = vmatpush1.msra.mxu0 0.0
      %1764 = vmatprep.subr.mxu0 0.0
      %1765 = vmatpush1.msra.mxu0 0.0
      %1766 = vmatprep.subr.mxu0 0.0
      %1767 = vmatpush1.msra.mxu0 0.0
      %1768 = vmatprep.subr.mxu0 0.0
      %1769 = vmatpush1.msra.mxu0 0.0
      %1770 = vmatprep.subr.mxu0 0.0
      %1771 = vmatpush1.msra.mxu0 0.0
      %1772 = vmatprep.mubr.f32.mxu0 0.0
      %1773 = vmatmul.mubr.f32.gmra.mrb[0].mxu0 %v1010
      %v1774 = vpop.f32.mrb[0].mxu0
      %v1775 = vadd.f32 %v1335, %v1774
      %v1776 = vpop.f32.mrb[0].mxu0
      %v1777 = vadd.f32 %v1339, %v1776
      %1778 = vmatprep.mubr.f32.mxu0 0.0
      %1779 = vmatmul.mubr.f32.gmra.mrb[0].mxu0 %v1015
      %v1780 = vpop.f32.mrb[0].mxu0
      %v1781 = vadd.f32 %v1335, %v1780
      %v1782 = vpop.f32.mrb[0].mxu0
      %v1783 = vadd.f32 %v1339, %v1782
      %1784 = vmatprep.mubr.f32.mxu0 0.0
      %1785 = vmatmul.mubr.f32.gmra.mrb[0].mxu0 %v1020
      %v1786 = vpop.f32.mrb[0].mxu0
      %v1787 = vadd.f32 %v1335, %v1786
      %v1788 = vpop.f32.mrb[0].mxu0
      %v1789 = vadd.f32 %v1339, %v1788
      %1790 = vmatprep.mubr.f32.mxu0 0.0
      %1791 = vmatmul.mubr.f32.gmra.mrb[0].mxu0 %v1025
      %v1792 = vpop.f32.mrb[0].mxu0
      %v1793 = vadd.f32 %v1335, %v1792
      %v1794 = vpop.f32.mrb[0].mxu0
      %v1795 = vadd.f32 %v1339, %v1794
      %1796 = vmatprep.mubr.f32.mxu0 0.0
      %1797 = vmatmul.mubr.f32.gmra.mrb[0].mxu0 %v1030
      %v1798 = vpop.f32.mrb[0].mxu0
      %v1799 = vadd.f32 %v1335, %v1798
      %v1800 = vpop.f32.mrb[0].mxu0
      %v1801 = vadd.f32 %v1339, %v1800
      %1802 = vmatprep.mubr.f32.mxu0 0.0
      %1803 = vmatmul.mubr.f32.gmra.mrb[0].mxu0 %v1035
      %v1804 = vpop.f32.mrb[0].mxu0
      %v1805 = vadd.f32 %v1335, %v1804
      %v1806 = vpop.f32.mrb[0].mxu0
      %v1807 = vadd.f32 %v1339, %v1806
      %1808 = vmatprep.mubr.f32.mxu0 0.0
      %1809 = vmatmul.mubr.f32.gmra.mrb[0].mxu0 %v1040
      %v1810 = vpop.f32.mrb[0].mxu0
      %v1811 = vadd.f32 %v1335, %v1810
      %v1812 = vpop.f32.mrb[0].mxu0
      %v1813 = vadd.f32 %v1339, %v1812
      %1814 = vmatprep.mubr.f32.mxu0 0.0
      %1815 = vmatmul.mubr.f32.gmra.mrb[0].mxu0 %v1045
      %v1816 = vpop.f32.mrb[0].mxu0
      %v1817 = vadd.f32 %v1335, %v1816
      %v1818 = vpop.f32.mrb[0].mxu0
      %v1819 = vadd.f32 %v1339, %v1818
      %1820 = vmatprep.mubr.f32.mxu0 0.0
      %1821 = vmatmul.mubr.f32.gmra.mrb[0].mxu0 %v1050
      %v1822 = vpop.f32.mrb[0].mxu0
      %v1823 = vadd.f32 %v1335, %v1822
      %v1824 = vpop.f32.mrb[0].mxu0
      %v1825 = vadd.f32 %v1339, %v1824
      %1826 = vmatprep.mubr.f32.mxu0 0.0
      %1827 = vmatmul.mubr.f32.gmra.mrb[0].mxu0 %v1055
      %v1828 = vpop.f32.mrb[0].mxu0
      %v1829 = vadd.f32 %v1335, %v1828
      %v1830 = vpop.f32.mrb[0].mxu0
      %v1831 = vadd.f32 %v1339, %v1830
      %1832 = vmatprep.mubr.f32.mxu0 0.0
      %1833 = vmatmul.mubr.f32.gmra.mrb[0].mxu0 %v1060
      %v1834 = vpop.f32.mrb[0].mxu0
      %v1835 = vadd.f32 %v1335, %v1834
      %v1836 = vpop.f32.mrb[0].mxu0
      %v1837 = vadd.f32 %v1339, %v1836
      %1838 = vmatprep.mubr.f32.mxu0 0.0
      %1839 = vmatmul.mubr.f32.gmra.mrb[0].mxu0 %v1065
      %v1840 = vpop.f32.mrb[0].mxu0
      %v1841 = vadd.f32 %v1335, %v1840
      %v1842 = vpop.f32.mrb[0].mxu0
      %v1843 = vadd.f32 %v1339, %v1842
      %1844 = vmatprep.mubr.f32.mxu0 0.0
      %1845 = vmatmul.mubr.f32.gmra.mrb[0].mxu0 %v1070
      %v1846 = vpop.f32.mrb[0].mxu0
      %v1847 = vadd.f32 %v1335, %v1846
      %v1848 = vpop.f32.mrb[0].mxu0
      %v1849 = vadd.f32 %v1339, %v1848
      %1850 = vmatprep.mubr.f32.mxu0 0.0
      %1851 = vmatmul.mubr.f32.gmra.mrb[0].mxu0 %v1075
      %v1852 = vpop.f32.mrb[0].mxu0
      %v1853 = vadd.f32 %v1335, %v1852
      %v1854 = vpop.f32.mrb[0].mxu0
      %v1855 = vadd.f32 %v1339, %v1854
      %1856 = vmatprep.mubr.f32.mxu0 0.0
      %1857 = vmatmul.mubr.f32.gmra.mrb[0].mxu0 %v1080
      %v1858 = vpop.f32.mrb[0].mxu0
      %v1859 = vadd.f32 %v1335, %v1858
      %v1860 = vpop.f32.mrb[0].mxu0
      %v1861 = vadd.f32 %v1339, %v1860
      %1862 = vmatprep.mubr.f32.mxu0 0.0
      %1863 = vmatmul.mubr.f32.gmra.mrb[0].mxu0 %v1085
      %v1864 = vpop.f32.mrb[0].mxu0
      %v1865 = vadd.f32 %v1335, %v1864
      %v1866 = vpop.f32.mrb[0].mxu0
      %v1867 = vadd.f32 %v1339, %v1866
      %1868 = vdwg.mxu0
      %1869 = vmatprep.subr.mxu0 %v1095
      %1870 = vmatpush1.msra.mxu0 %v1094
      %1871 = vmatprep.subr.mxu0 %v1109
      %1872 = vmatpush1.msra.mxu0 %v1108
      %1873 = vmatprep.subr.mxu0 %v1123
      %1874 = vmatpush1.msra.mxu0 %v1122
      %1875 = vmatprep.subr.mxu0 %v1137
      %1876 = vmatpush1.msra.mxu0 %v1136
      %1877 = vmatprep.subr.mxu0 %v1151
      %1878 = vmatpush1.msra.mxu0 %v1150
      %1879 = vmatprep.subr.mxu0 %v1165
      %1880 = vmatpush1.msra.mxu0 %v1164
      %1881 = vmatprep.subr.mxu0 %v1179
      %1882 = vmatpush1.msra.mxu0 %v1178
      %1883 = vmatprep.subr.mxu0 %v1193
      %1884 = vmatpush1.msra.mxu0 %v1192
      %1885 = vmatprep.subr.mxu0 %v1207
      %1886 = vmatpush1.msra.mxu0 %v1206
      %1887 = vmatprep.subr.mxu0 %v1221
      %1888 = vmatpush1.msra.mxu0 %v1220
      %1889 = vmatprep.subr.mxu0 %v1235
      %1890 = vmatpush1.msra.mxu0 %v1234
      %1891 = vmatprep.subr.mxu0 %v1249
      %1892 = vmatpush1.msra.mxu0 %v1248
      %1893 = vmatprep.subr.mxu0 %v1263
      %1894 = vmatpush1.msra.mxu0 %v1262
      %1895 = vmatprep.subr.mxu0 %v1277
      %1896 = vmatpush1.msra.mxu0 %v1276
      %1897 = vmatprep.subr.mxu0 %v1291
      %1898 = vmatpush1.msra.mxu0 %v1290
      %1899 = vmatprep.subr.mxu0 %v1305
      %1900 = vmatpush1.msra.mxu0 %v1304
      %1901 = vmatprep.subr.mxu0 0.0
      %1902 = vmatpush1.msra.mxu0 0.0
      %1903 = vmatprep.subr.mxu0 0.0
      %1904 = vmatpush1.msra.mxu0 0.0
      %1905 = vmatprep.subr.mxu0 0.0
      %1906 = vmatpush1.msra.mxu0 0.0
      %1907 = vmatprep.subr.mxu0 0.0
      %1908 = vmatpush1.msra.mxu0 0.0
      %1909 = vmatprep.subr.mxu0 0.0
      %1910 = vmatpush1.msra.mxu0 0.0
      %1911 = vmatprep.subr.mxu0 0.0
      %1912 = vmatpush1.msra.mxu0 0.0
      %1913 = vmatprep.subr.mxu0 0.0
      %1914 = vmatpush1.msra.mxu0 0.0
      %1915 = vmatprep.subr.mxu0 0.0
      %1916 = vmatpush1.msra.mxu0 0.0
      %1917 = vmatprep.subr.mxu0 0.0
      %1918 = vmatpush1.msra.mxu0 0.0
      %1919 = vmatprep.subr.mxu0 0.0
      %1920 = vmatpush1.msra.mxu0 0.0
      %1921 = vmatprep.subr.mxu0 0.0
      %1922 = vmatpush1.msra.mxu0 0.0
      %1923 = vmatprep.subr.mxu0 0.0
      %1924 = vmatpush1.msra.mxu0 0.0
      %1925 = vmatprep.subr.mxu0 0.0
      %1926 = vmatpush1.msra.mxu0 0.0
      %1927 = vmatprep.subr.mxu0 0.0
      %1928 = vmatpush1.msra.mxu0 0.0
      %1929 = vmatprep.subr.mxu0 0.0
      %1930 = vmatpush1.msra.mxu0 0.0
      %1931 = vmatprep.subr.mxu0 0.0
      %1932 = vmatpush1.msra.mxu0 0.0
      %1933 = vmatprep.mubr.f32.mxu0 0.0
      %1934 = vmatmul.mubr.f32.gmra.mrb[0].mxu0 %v1010
      %v1935 = vpop.f32.mrb[0].mxu0
      %v1936 = vadd.f32 %v1343, %v1935
      %v1937 = vpop.f32.mrb[0].mxu0
      %v1938 = vadd.f32 %v1347, %v1937
      %1939 = vmatprep.mubr.f32.mxu0 0.0
      %1940 = vmatmul.mubr.f32.gmra.mrb[0].mxu0 %v1015
      %v1941 = vpop.f32.mrb[0].mxu0
      %v1942 = vadd.f32 %v1343, %v1941
      %v1943 = vpop.f32.mrb[0].mxu0
      %v1944 = vadd.f32 %v1347, %v1943
      %1945 = vmatprep.mubr.f32.mxu0 0.0
      %1946 = vmatmul.mubr.f32.gmra.mrb[0].mxu0 %v1020
      %v1947 = vpop.f32.mrb[0].mxu0
      %v1948 = vadd.f32 %v1343, %v1947
      %v1949 = vpop.f32.mrb[0].mxu0
      %v1950 = vadd.f32 %v1347, %v1949
      %1951 = vmatprep.mubr.f32.mxu0 0.0
      %1952 = vmatmul.mubr.f32.gmra.mrb[0].mxu0 %v1025
      %v1953 = vpop.f32.mrb[0].mxu0
      %v1954 = vadd.f32 %v1343, %v1953
      %v1955 = vpop.f32.mrb[0].mxu0
      %v1956 = vadd.f32 %v1347, %v1955
      %1957 = vmatprep.mubr.f32.mxu0 0.0
      %1958 = vmatmul.mubr.f32.gmra.mrb[0].mxu0 %v1030
      %v1959 = vpop.f32.mrb[0].mxu0
      %v1960 = vadd.f32 %v1343, %v1959
      %v1961 = vpop.f32.mrb[0].mxu0
      %v1962 = vadd.f32 %v1347, %v1961
      %1963 = vmatprep.mubr.f32.mxu0 0.0
      %1964 = vmatmul.mubr.f32.gmra.mrb[0].mxu0 %v1035
      %v1965 = vpop.f32.mrb[0].mxu0
      %v1966 = vadd.f32 %v1343, %v1965
      %v1967 = vpop.f32.mrb[0].mxu0
      %v1968 = vadd.f32 %v1347, %v1967
      %1969 = vmatprep.mubr.f32.mxu0 0.0
      %1970 = vmatmul.mubr.f32.gmra.mrb[0].mxu0 %v1040
      %v1971 = vpop.f32.mrb[0].mxu0
      %v1972 = vadd.f32 %v1343, %v1971
      %v1973 = vpop.f32.mrb[0].mxu0
      %v1974 = vadd.f32 %v1347, %v1973
      %1975 = vmatprep.mubr.f32.mxu0 0.0
      %1976 = vmatmul.mubr.f32.gmra.mrb[0].mxu0 %v1045
      %v1977 = vpop.f32.mrb[0].mxu0
      %v1978 = vadd.f32 %v1343, %v1977
      %v1979 = vpop.f32.mrb[0].mxu0
      %v1980 = vadd.f32 %v1347, %v1979
      %1981 = vmatprep.mubr.f32.mxu0 0.0
      %1982 = vmatmul.mubr.f32.gmra.mrb[0].mxu0 %v1050
      %v1983 = vpop.f32.mrb[0].mxu0
      %v1984 = vadd.f32 %v1343, %v1983
      %v1985 = vpop.f32.mrb[0].mxu0
      %v1986 = vadd.f32 %v1347, %v1985
      %1987 = vmatprep.mubr.f32.mxu0 0.0
      %1988 = vmatmul.mubr.f32.gmra.mrb[0].mxu0 %v1055
      %v1989 = vpop.f32.mrb[0].mxu0
      %v1990 = vadd.f32 %v1343, %v1989
      %v1991 = vpop.f32.mrb[0].mxu0
      %v1992 = vadd.f32 %v1347, %v1991
      %1993 = vmatprep.mubr.f32.mxu0 0.0
      %1994 = vmatmul.mubr.f32.gmra.mrb[0].mxu0 %v1060
      %v1995 = vpop.f32.mrb[0].mxu0
      %v1996 = vadd.f32 %v1343, %v1995
      %v1997 = vpop.f32.mrb[0].mxu0
      %v1998 = vadd.f32 %v1347, %v1997
      %1999 = vmatprep.mubr.f32.mxu0 0.0
      %2000 = vmatmul.mubr.f32.gmra.mrb[0].mxu0 %v1065
      %v2001 = vpop.f32.mrb[0].mxu0
      %v2002 = vadd.f32 %v1343, %v2001
      %v2003 = vpop.f32.mrb[0].mxu0
      %v2004 = vadd.f32 %v1347, %v2003
      %2005 = vmatprep.mubr.f32.mxu0 0.0
      %2006 = vmatmul.mubr.f32.gmra.mrb[0].mxu0 %v1070
      %v2007 = vpop.f32.mrb[0].mxu0
      %v2008 = vadd.f32 %v1343, %v2007
      %v2009 = vpop.f32.mrb[0].mxu0
      %v2010 = vadd.f32 %v1347, %v2009
      %2011 = vmatprep.mubr.f32.mxu0 0.0
      %2012 = vmatmul.mubr.f32.gmra.mrb[0].mxu0 %v1075
      %v2013 = vpop.f32.mrb[0].mxu0
      %v2014 = vadd.f32 %v1343, %v2013
      %v2015 = vpop.f32.mrb[0].mxu0
      %v2016 = vadd.f32 %v1347, %v2015
      %2017 = vmatprep.mubr.f32.mxu0 0.0
      %2018 = vmatmul.mubr.f32.gmra.mrb[0].mxu0 %v1080
      %v2019 = vpop.f32.mrb[0].mxu0
      %v2020 = vadd.f32 %v1343, %v2019
      %v2021 = vpop.f32.mrb[0].mxu0
      %v2022 = vadd.f32 %v1347, %v2021
      %2023 = vmatprep.mubr.f32.mxu0 0.0
      %2024 = vmatmul.mubr.f32.gmra.mrb[0].mxu0 %v1085
      %v2025 = vpop.f32.mrb[0].mxu0
      %v2026 = vadd.f32 %v1343, %v2025
      %v2027 = vpop.f32.mrb[0].mxu0
      %v2028 = vadd.f32 %v1347, %v2027
      %2029 = vdwg.mxu0
      %2030 = vmatprep.subr.mxu0 %v1097
      %2031 = vmatpush1.msra.mxu0 %v1096
      %2032 = vmatprep.subr.mxu0 %v1111
      %2033 = vmatpush1.msra.mxu0 %v1110
      %2034 = vmatprep.subr.mxu0 %v1125
      %2035 = vmatpush1.msra.mxu0 %v1124
      %2036 = vmatprep.subr.mxu0 %v1139
      %2037 = vmatpush1.msra.mxu0 %v1138
      %2038 = vmatprep.subr.mxu0 %v1153
      %2039 = vmatpush1.msra.mxu0 %v1152
      %2040 = vmatprep.subr.mxu0 %v1167
      %2041 = vmatpush1.msra.mxu0 %v1166
      %2042 = vmatprep.subr.mxu0 %v1181
      %2043 = vmatpush1.msra.mxu0 %v1180
      %2044 = vmatprep.subr.mxu0 %v1195
      %2045 = vmatpush1.msra.mxu0 %v1194
      %2046 = vmatprep.subr.mxu0 %v1209
      %2047 = vmatpush1.msra.mxu0 %v1208
      %2048 = vmatprep.subr.mxu0 %v1223
      %2049 = vmatpush1.msra.mxu0 %v1222
      %2050 = vmatprep.subr.mxu0 %v1237
      %2051 = vmatpush1.msra.mxu0 %v1236
      %2052 = vmatprep.subr.mxu0 %v1251
      %2053 = vmatpush1.msra.mxu0 %v1250
      %2054 = vmatprep.subr.mxu0 %v1265
      %2055 = vmatpush1.msra.mxu0 %v1264
      %2056 = vmatprep.subr.mxu0 %v1279
      %2057 = vmatpush1.msra.mxu0 %v1278
      %2058 = vmatprep.subr.mxu0 %v1293
      %2059 = vmatpush1.msra.mxu0 %v1292
      %2060 = vmatprep.subr.mxu0 %v1307
      %2061 = vmatpush1.msra.mxu0 %v1306
      %2062 = vmatprep.subr.mxu0 0.0
      %2063 = vmatpush1.msra.mxu0 0.0
      %2064 = vmatprep.subr.mxu0 0.0
      %2065 = vmatpush1.msra.mxu0 0.0
      %2066 = vmatprep.subr.mxu0 0.0
      %2067 = vmatpush1.msra.mxu0 0.0
      %2068 = vmatprep.subr.mxu0 0.0
      %2069 = vmatpush1.msra.mxu0 0.0
      %2070 = vmatprep.subr.mxu0 0.0
      %2071 = vmatpush1.msra.mxu0 0.0
      %2072 = vmatprep.subr.mxu0 0.0
      %2073 = vmatpush1.msra.mxu0 0.0
      %2074 = vmatprep.subr.mxu0 0.0
      %2075 = vmatpush1.msra.mxu0 0.0
      %2076 = vmatprep.subr.mxu0 0.0
      %2077 = vmatpush1.msra.mxu0 0.0
      %2078 = vmatprep.subr.mxu0 0.0
      %2079 = vmatpush1.msra.mxu0 0.0
      %2080 = vmatprep.subr.mxu0 0.0
      %2081 = vmatpush1.msra.mxu0 0.0
      %2082 = vmatprep.subr.mxu0 0.0
      %2083 = vmatpush1.msra.mxu0 0.0
      %2084 = vmatprep.subr.mxu0 0.0
      %2085 = vmatpush1.msra.mxu0 0.0
      %2086 = vmatprep.subr.mxu0 0.0
      %2087 = vmatpush1.msra.mxu0 0.0
      %2088 = vmatprep.subr.mxu0 0.0
      %2089 = vmatpush1.msra.mxu0 0.0
      %2090 = vmatprep.subr.mxu0 0.0
      %2091 = vmatpush1.msra.mxu0 0.0
      %2092 = vmatprep.subr.mxu0 0.0
      %2093 = vmatpush1.msra.mxu0 0.0
      %2094 = vmatprep.mubr.f32.mxu0 0.0
      %2095 = vmatmul.mubr.f32.gmra.mrb[0].mxu0 %v1010
      %v2096 = vpop.f32.mrb[0].mxu0
      %v2097 = vadd.f32 %v1351, %v2096
      %v2098 = vpop.f32.mrb[0].mxu0
      %v2099 = vadd.f32 %v1355, %v2098
      %2100 = vmatprep.mubr.f32.mxu0 0.0
      %2101 = vmatmul.mubr.f32.gmra.mrb[0].mxu0 %v1015
      %v2102 = vpop.f32.mrb[0].mxu0
      %v2103 = vadd.f32 %v1351, %v2102
      %v2104 = vpop.f32.mrb[0].mxu0
      %v2105 = vadd.f32 %v1355, %v2104
      %2106 = vmatprep.mubr.f32.mxu0 0.0
      %2107 = vmatmul.mubr.f32.gmra.mrb[0].mxu0 %v1020
      %v2108 = vpop.f32.mrb[0].mxu0
      %v2109 = vadd.f32 %v1351, %v2108
      %v2110 = vpop.f32.mrb[0].mxu0
      %v2111 = vadd.f32 %v1355, %v2110
      %2112 = vmatprep.mubr.f32.mxu0 0.0
      %2113 = vmatmul.mubr.f32.gmra.mrb[0].mxu0 %v1025
      %v2114 = vpop.f32.mrb[0].mxu0
      %v2115 = vadd.f32 %v1351, %v2114
      %v2116 = vpop.f32.mrb[0].mxu0
      %v2117 = vadd.f32 %v1355, %v2116
      %2118 = vmatprep.mubr.f32.mxu0 0.0
      %2119 = vmatmul.mubr.f32.gmra.mrb[0].mxu0 %v1030
      %v2120 = vpop.f32.mrb[0].mxu0
      %v2121 = vadd.f32 %v1351, %v2120
      %v2122 = vpop.f32.mrb[0].mxu0
      %v2123 = vadd.f32 %v1355, %v2122
      %2124 = vmatprep.mubr.f32.mxu0 0.0
      %2125 = vmatmul.mubr.f32.gmra.mrb[0].mxu0 %v1035
      %v2126 = vpop.f32.mrb[0].mxu0
      %v2127 = vadd.f32 %v1351, %v2126
      %v2128 = vpop.f32.mrb[0].mxu0
      %v2129 = vadd.f32 %v1355, %v2128
      %2130 = vmatprep.mubr.f32.mxu0 0.0
      %2131 = vmatmul.mubr.f32.gmra.mrb[0].mxu0 %v1040
      %v2132 = vpop.f32.mrb[0].mxu0
      %v2133 = vadd.f32 %v1351, %v2132
      %v2134 = vpop.f32.mrb[0].mxu0
      %v2135 = vadd.f32 %v1355, %v2134
      %2136 = vmatprep.mubr.f32.mxu0 0.0
      %2137 = vmatmul.mubr.f32.gmra.mrb[0].mxu0 %v1045
      %v2138 = vpop.f32.mrb[0].mxu0
      %v2139 = vadd.f32 %v1351, %v2138
      %v2140 = vpop.f32.mrb[0].mxu0
      %v2141 = vadd.f32 %v1355, %v2140
      %2142 = vmatprep.mubr.f32.mxu0 0.0
      %2143 = vmatmul.mubr.f32.gmra.mrb[0].mxu0 %v1050
      %v2144 = vpop.f32.mrb[0].mxu0
      %v2145 = vadd.f32 %v1351, %v2144
      %v2146 = vpop.f32.mrb[0].mxu0
      %v2147 = vadd.f32 %v1355, %v2146
      %2148 = vmatprep.mubr.f32.mxu0 0.0
      %2149 = vmatmul.mubr.f32.gmra.mrb[0].mxu0 %v1055
      %v2150 = vpop.f32.mrb[0].mxu0
      %v2151 = vadd.f32 %v1351, %v2150
      %v2152 = vpop.f32.mrb[0].mxu0
      %v2153 = vadd.f32 %v1355, %v2152
      %2154 = vmatprep.mubr.f32.mxu0 0.0
      %2155 = vmatmul.mubr.f32.gmra.mrb[0].mxu0 %v1060
      %v2156 = vpop.f32.mrb[0].mxu0
      %v2157 = vadd.f32 %v1351, %v2156
      %v2158 = vpop.f32.mrb[0].mxu0
      %v2159 = vadd.f32 %v1355, %v2158
      %2160 = vmatprep.mubr.f32.mxu0 0.0
      %2161 = vmatmul.mubr.f32.gmra.mrb[0].mxu0 %v1065
      %v2162 = vpop.f32.mrb[0].mxu0
      %v2163 = vadd.f32 %v1351, %v2162
      %v2164 = vpop.f32.mrb[0].mxu0
      %v2165 = vadd.f32 %v1355, %v2164
      %2166 = vmatprep.mubr.f32.mxu0 0.0
      %2167 = vmatmul.mubr.f32.gmra.mrb[0].mxu0 %v1070
      %v2168 = vpop.f32.mrb[0].mxu0
      %v2169 = vadd.f32 %v1351, %v2168
      %v2170 = vpop.f32.mrb[0].mxu0
      %v2171 = vadd.f32 %v1355, %v2170
      %2172 = vmatprep.mubr.f32.mxu0 0.0
      %2173 = vmatmul.mubr.f32.gmra.mrb[0].mxu0 %v1075
      %v2174 = vpop.f32.mrb[0].mxu0
      %v2175 = vadd.f32 %v1351, %v2174
      %v2176 = vpop.f32.mrb[0].mxu0
      %v2177 = vadd.f32 %v1355, %v2176
      %2178 = vmatprep.mubr.f32.mxu0 0.0
      %2179 = vmatmul.mubr.f32.gmra.mrb[0].mxu0 %v1080
      %v2180 = vpop.f32.mrb[0].mxu0
      %v2181 = vadd.f32 %v1351, %v2180
      %v2182 = vpop.f32.mrb[0].mxu0
      %v2183 = vadd.f32 %v1355, %v2182
      %2184 = vmatprep.mubr.f32.mxu0 0.0
      %2185 = vmatmul.mubr.f32.gmra.mrb[0].mxu0 %v1085
      %v2186 = vpop.f32.mrb[0].mxu0
      %v2187 = vadd.f32 %v1351, %v2186
      %v2188 = vpop.f32.mrb[0].mxu0
      %v2189 = vadd.f32 %v1355, %v2188
      %2190 = vdwg.mxu0
      %2191 = vmatprep.subr.mxu0 %v1099
      %2192 = vmatpush1.msra.mxu0 %v1098
      %2193 = vmatprep.subr.mxu0 %v1113
      %2194 = vmatpush1.msra.mxu0 %v1112
      %2195 = vmatprep.subr.mxu0 %v1127
      %2196 = vmatpush1.msra.mxu0 %v1126
      %2197 = vmatprep.subr.mxu0 %v1141
      %2198 = vmatpush1.msra.mxu0 %v1140
      %2199 = vmatprep.subr.mxu0 %v1155
      %2200 = vmatpush1.msra.mxu0 %v1154
      %2201 = vmatprep.subr.mxu0 %v1169
      %2202 = vmatpush1.msra.mxu0 %v1168
      %2203 = vmatprep.subr.mxu0 %v1183
      %2204 = vmatpush1.msra.mxu0 %v1182
      %2205 = vmatprep.subr.mxu0 %v1197
      %2206 = vmatpush1.msra.mxu0 %v1196
      %2207 = vmatprep.subr.mxu0 %v1211
      %2208 = vmatpush1.msra.mxu0 %v1210
      %2209 = vmatprep.subr.mxu0 %v1225
      %2210 = vmatpush1.msra.mxu0 %v1224
      %2211 = vmatprep.subr.mxu0 %v1239
      %2212 = vmatpush1.msra.mxu0 %v1238
      %2213 = vmatprep.subr.mxu0 %v1253
      %2214 = vmatpush1.msra.mxu0 %v1252
      %2215 = vmatprep.subr.mxu0 %v1267
      %2216 = vmatpush1.msra.mxu0 %v1266
      %2217 = vmatprep.subr.mxu0 %v1281
      %2218 = vmatpush1.msra.mxu0 %v1280
      %2219 = vmatprep.subr.mxu0 %v1295
      %2220 = vmatpush1.msra.mxu0 %v1294
      %2221 = vmatprep.subr.mxu0 %v1309
      %2222 = vmatpush1.msra.mxu0 %v1308
      %2223 = vmatprep.subr.mxu0 0.0
      %2224 = vmatpush1.msra.mxu0 0.0
      %2225 = vmatprep.subr.mxu0 0.0
      %2226 = vmatpush1.msra.mxu0 0.0
      %2227 = vmatprep.subr.mxu0 0.0
      %2228 = vmatpush1.msra.mxu0 0.0
      %2229 = vmatprep.subr.mxu0 0.0
      %2230 = vmatpush1.msra.mxu0 0.0
      %2231 = vmatprep.subr.mxu0 0.0
      %2232 = vmatpush1.msra.mxu0 0.0
      %2233 = vmatprep.subr.mxu0 0.0
      %2234 = vmatpush1.msra.mxu0 0.0
      %2235 = vmatprep.subr.mxu0 0.0
      %2236 = vmatpush1.msra.mxu0 0.0
      %2237 = vmatprep.subr.mxu0 0.0
      %2238 = vmatpush1.msra.mxu0 0.0
      %2239 = vmatprep.subr.mxu0 0.0
      %2240 = vmatpush1.msra.mxu0 0.0
      %2241 = vmatprep.subr.mxu0 0.0
      %2242 = vmatpush1.msra.mxu0 0.0
      %2243 = vmatprep.subr.mxu0 0.0
      %2244 = vmatpush1.msra.mxu0 0.0
      %2245 = vmatprep.subr.mxu0 0.0
      %2246 = vmatpush1.msra.mxu0 0.0
      %2247 = vmatprep.subr.mxu0 0.0
      %2248 = vmatpush1.msra.mxu0 0.0
      %2249 = vmatprep.subr.mxu0 0.0
      %2250 = vmatpush1.msra.mxu0 0.0
      %2251 = vmatprep.subr.mxu0 0.0
      %2252 = vmatpush1.msra.mxu0 0.0
      %2253 = vmatprep.subr.mxu0 0.0
      %2254 = vmatpush1.msra.mxu0 0.0
      %2255 = vmatprep.mubr.f32.mxu0 0.0
      %2256 = vmatmul.mubr.f32.gmra.mrb[0].mxu0 %v1010
      %v2257 = vpop.f32.mrb[0].mxu0
      %v2258 = vadd.f32 %v1359, %v2257
      %v2259 = vpop.f32.mrb[0].mxu0
      %v2260 = vadd.f32 %v1363, %v2259
      %2261 = vmatprep.mubr.f32.mxu0 0.0
      %2262 = vmatmul.mubr.f32.gmra.mrb[0].mxu0 %v1015
      %v2263 = vpop.f32.mrb[0].mxu0
      %v2264 = vadd.f32 %v1359, %v2263
      %v2265 = vpop.f32.mrb[0].mxu0
      %v2266 = vadd.f32 %v1363, %v2265
      %2267 = vmatprep.mubr.f32.mxu0 0.0
      %2268 = vmatmul.mubr.f32.gmra.mrb[0].mxu0 %v1020
      %v2269 = vpop.f32.mrb[0].mxu0
      %v2270 = vadd.f32 %v1359, %v2269
      %v2271 = vpop.f32.mrb[0].mxu0
      %v2272 = vadd.f32 %v1363, %v2271
      %2273 = vmatprep.mubr.f32.mxu0 0.0
      %2274 = vmatmul.mubr.f32.gmra.mrb[0].mxu0 %v1025
      %v2275 = vpop.f32.mrb[0].mxu0
      %v2276 = vadd.f32 %v1359, %v2275
      %v2277 = vpop.f32.mrb[0].mxu0
      %v2278 = vadd.f32 %v1363, %v2277
      %2279 = vmatprep.mubr.f32.mxu0 0.0
      %2280 = vmatmul.mubr.f32.gmra.mrb[0].mxu0 %v1030
      %v2281 = vpop.f32.mrb[0].mxu0
      %v2282 = vadd.f32 %v1359, %v2281
      %v2283 = vpop.f32.mrb[0].mxu0
      %v2284 = vadd.f32 %v1363, %v2283
      %2285 = vmatprep.mubr.f32.mxu0 0.0
      %2286 = vmatmul.mubr.f32.gmra.mrb[0].mxu0 %v1035
      %v2287 = vpop.f32.mrb[0].mxu0
      %v2288 = vadd.f32 %v1359, %v2287
      %v2289 = vpop.f32.mrb[0].mxu0
      %v2290 = vadd.f32 %v1363, %v2289
      %2291 = vmatprep.mubr.f32.mxu0 0.0
      %2292 = vmatmul.mubr.f32.gmra.mrb[0].mxu0 %v1040
      %v2293 = vpop.f32.mrb[0].mxu0
      %v2294 = vadd.f32 %v1359, %v2293
      %v2295 = vpop.f32.mrb[0].mxu0
      %v2296 = vadd.f32 %v1363, %v2295
      %2297 = vmatprep.mubr.f32.mxu0 0.0
      %2298 = vmatmul.mubr.f32.gmra.mrb[0].mxu0 %v1045
      %v2299 = vpop.f32.mrb[0].mxu0
      %v2300 = vadd.f32 %v1359, %v2299
      %v2301 = vpop.f32.mrb[0].mxu0
      %v2302 = vadd.f32 %v1363, %v2301
      %2303 = vmatprep.mubr.f32.mxu0 0.0
      %2304 = vmatmul.mubr.f32.gmra.mrb[0].mxu0 %v1050
      %v2305 = vpop.f32.mrb[0].mxu0
      %v2306 = vadd.f32 %v1359, %v2305
      %v2307 = vpop.f32.mrb[0].mxu0
      %v2308 = vadd.f32 %v1363, %v2307
      %2309 = vmatprep.mubr.f32.mxu0 0.0
      %2310 = vmatmul.mubr.f32.gmra.mrb[0].mxu0 %v1055
      %v2311 = vpop.f32.mrb[0].mxu0
      %v2312 = vadd.f32 %v1359, %v2311
      %v2313 = vpop.f32.mrb[0].mxu0
      %v2314 = vadd.f32 %v1363, %v2313
      %2315 = vmatprep.mubr.f32.mxu0 0.0
      %2316 = vmatmul.mubr.f32.gmra.mrb[0].mxu0 %v1060
      %v2317 = vpop.f32.mrb[0].mxu0
      %v2318 = vadd.f32 %v1359, %v2317
      %v2319 = vpop.f32.mrb[0].mxu0
      %v2320 = vadd.f32 %v1363, %v2319
      %2321 = vmatprep.mubr.f32.mxu0 0.0
      %2322 = vmatmul.mubr.f32.gmra.mrb[0].mxu0 %v1065
      %v2323 = vpop.f32.mrb[0].mxu0
      %v2324 = vadd.f32 %v1359, %v2323
      %v2325 = vpop.f32.mrb[0].mxu0
      %v2326 = vadd.f32 %v1363, %v2325
      %2327 = vmatprep.mubr.f32.mxu0 0.0
      %2328 = vmatmul.mubr.f32.gmra.mrb[0].mxu0 %v1070
      %v2329 = vpop.f32.mrb[0].mxu0
      %v2330 = vadd.f32 %v1359, %v2329
      %v2331 = vpop.f32.mrb[0].mxu0
      %v2332 = vadd.f32 %v1363, %v2331
      %2333 = vmatprep.mubr.f32.mxu0 0.0
      %2334 = vmatmul.mubr.f32.gmra.mrb[0].mxu0 %v1075
      %v2335 = vpop.f32.mrb[0].mxu0
      %v2336 = vadd.f32 %v1359, %v2335
      %v2337 = vpop.f32.mrb[0].mxu0
      %v2338 = vadd.f32 %v1363, %v2337
      %2339 = vmatprep.mubr.f32.mxu0 0.0
      %2340 = vmatmul.mubr.f32.gmra.mrb[0].mxu0 %v1080
      %v2341 = vpop.f32.mrb[0].mxu0
      %v2342 = vadd.f32 %v1359, %v2341
      %v2343 = vpop.f32.mrb[0].mxu0
      %v2344 = vadd.f32 %v1363, %v2343
      %2345 = vmatprep.mubr.f32.mxu0 0.0
      %2346 = vmatmul.mubr.f32.gmra.mrb[0].mxu0 %v1085
      %v2347 = vpop.f32.mrb[0].mxu0
      %v2348 = vadd.f32 %v1359, %v2347
      %v2349 = vpop.f32.mrb[0].mxu0
      %v2350 = vadd.f32 %v1363, %v2349
      %2351 = vdwg.mxu0
      %2352 = vmatprep.subr.mxu0 %v1101
      %2353 = vmatpush1.msra.mxu0 %v1100
      %2354 = vmatprep.subr.mxu0 %v1115
      %2355 = vmatpush1.msra.mxu0 %v1114
      %2356 = vmatprep.subr.mxu0 %v1129
      %2357 = vmatpush1.msra.mxu0 %v1128
      %2358 = vmatprep.subr.mxu0 %v1143
      %2359 = vmatpush1.msra.mxu0 %v1142
      %2360 = vmatprep.subr.mxu0 %v1157
      %2361 = vmatpush1.msra.mxu0 %v1156
      %2362 = vmatprep.subr.mxu0 %v1171
      %2363 = vmatpush1.msra.mxu0 %v1170
      %2364 = vmatprep.subr.mxu0 %v1185
      %2365 = vmatpush1.msra.mxu0 %v1184
      %2366 = vmatprep.subr.mxu0 %v1199
      %2367 = vmatpush1.msra.mxu0 %v1198
      %2368 = vmatprep.subr.mxu0 %v1213
      %2369 = vmatpush1.msra.mxu0 %v1212
      %2370 = vmatprep.subr.mxu0 %v1227
      %2371 = vmatpush1.msra.mxu0 %v1226
      %2372 = vmatprep.subr.mxu0 %v1241
      %2373 = vmatpush1.msra.mxu0 %v1240
      %2374 = vmatprep.subr.mxu0 %v1255
      %2375 = vmatpush1.msra.mxu0 %v1254
      %2376 = vmatprep.subr.mxu0 %v1269
      %2377 = vmatpush1.msra.mxu0 %v1268
      %2378 = vmatprep.subr.mxu0 %v1283
      %2379 = vmatpush1.msra.mxu0 %v1282
      %2380 = vmatprep.subr.mxu0 %v1297
      %2381 = vmatpush1.msra.mxu0 %v1296
      %2382 = vmatprep.subr.mxu0 %v1311
      %2383 = vmatpush1.msra.mxu0 %v1310
      %2384 = vmatprep.subr.mxu0 0.0
      %2385 = vmatpush1.msra.mxu0 0.0
      %2386 = vmatprep.subr.mxu0 0.0
      %2387 = vmatpush1.msra.mxu0 0.0
      %2388 = vmatprep.subr.mxu0 0.0
      %2389 = vmatpush1.msra.mxu0 0.0
      %2390 = vmatprep.subr.mxu0 0.0
      %2391 = vmatpush1.msra.mxu0 0.0
      %2392 = vmatprep.subr.mxu0 0.0
      %2393 = vmatpush1.msra.mxu0 0.0
      %2394 = vmatprep.subr.mxu0 0.0
      %2395 = vmatpush1.msra.mxu0 0.0
      %2396 = vmatprep.subr.mxu0 0.0
      %2397 = vmatpush1.msra.mxu0 0.0
      %2398 = vmatprep.subr.mxu0 0.0
      %2399 = vmatpush1.msra.mxu0 0.0
      %2400 = vmatprep.subr.mxu0 0.0
      %2401 = vmatpush1.msra.mxu0 0.0
      %2402 = vmatprep.subr.mxu0 0.0
      %2403 = vmatpush1.msra.mxu0 0.0
      %2404 = vmatprep.subr.mxu0 0.0
      %2405 = vmatpush1.msra.mxu0 0.0
      %2406 = vmatprep.subr.mxu0 0.0
      %2407 = vmatpush1.msra.mxu0 0.0
      %2408 = vmatprep.subr.mxu0 0.0
      %2409 = vmatpush1.msra.mxu0 0.0
      %2410 = vmatprep.subr.mxu0 0.0
      %2411 = vmatpush1.msra.mxu0 0.0
      %2412 = vmatprep.subr.mxu0 0.0
      %2413 = vmatpush1.msra.mxu0 0.0
      %2414 = vmatprep.subr.mxu0 0.0
      %2415 = vmatpush1.msra.mxu0 0.0
      %2416 = vmatprep.mubr.f32.mxu0 0.0
      %2417 = vmatmul.mubr.f32.gmra.mrb[0].mxu0 %v1010
      %v2418 = vpop.f32.mrb[0].mxu0
      %v2419 = vadd.f32 %v1367, %v2418
      %v2420 = vpop.f32.mrb[0].mxu0
      %v2421 = vadd.f32 %v1371, %v2420
      %2422 = vmatprep.mubr.f32.mxu0 0.0
      %2423 = vmatmul.mubr.f32.gmra.mrb[0].mxu0 %v1015
      %v2424 = vpop.f32.mrb[0].mxu0
      %v2425 = vadd.f32 %v1367, %v2424
      %v2426 = vpop.f32.mrb[0].mxu0
      %v2427 = vadd.f32 %v1371, %v2426
      %2428 = vmatprep.mubr.f32.mxu0 0.0
      %2429 = vmatmul.mubr.f32.gmra.mrb[0].mxu0 %v1020
      %v2430 = vpop.f32.mrb[0].mxu0
      %v2431 = vadd.f32 %v1367, %v2430
      %v2432 = vpop.f32.mrb[0].mxu0
      %v2433 = vadd.f32 %v1371, %v2432
      %2434 = vmatprep.mubr.f32.mxu0 0.0
      %2435 = vmatmul.mubr.f32.gmra.mrb[0].mxu0 %v1025
      %v2436 = vpop.f32.mrb[0].mxu0
      %v2437 = vadd.f32 %v1367, %v2436
      %v2438 = vpop.f32.mrb[0].mxu0
      %v2439 = vadd.f32 %v1371, %v2438
      %2440 = vmatprep.mubr.f32.mxu0 0.0
      %2441 = vmatmul.mubr.f32.gmra.mrb[0].mxu0 %v1030
      %v2442 = vpop.f32.mrb[0].mxu0
      %v2443 = vadd.f32 %v1367, %v2442
      %v2444 = vpop.f32.mrb[0].mxu0
      %v2445 = vadd.f32 %v1371, %v2444
      %2446 = vmatprep.mubr.f32.mxu0 0.0
      %2447 = vmatmul.mubr.f32.gmra.mrb[0].mxu0 %v1035
      %v2448 = vpop.f32.mrb[0].mxu0
      %v2449 = vadd.f32 %v1367, %v2448
      %v2450 = vpop.f32.mrb[0].mxu0
      %v2451 = vadd.f32 %v1371, %v2450
      %2452 = vmatprep.mubr.f32.mxu0 0.0
      %2453 = vmatmul.mubr.f32.gmra.mrb[0].mxu0 %v1040
      %v2454 = vpop.f32.mrb[0].mxu0
      %v2455 = vadd.f32 %v1367, %v2454
      %v2456 = vpop.f32.mrb[0].mxu0
      %v2457 = vadd.f32 %v1371, %v2456
      %2458 = vmatprep.mubr.f32.mxu0 0.0
      %2459 = vmatmul.mubr.f32.gmra.mrb[0].mxu0 %v1045
      %v2460 = vpop.f32.mrb[0].mxu0
      %v2461 = vadd.f32 %v1367, %v2460
      %v2462 = vpop.f32.mrb[0].mxu0
      %v2463 = vadd.f32 %v1371, %v2462
      %2464 = vmatprep.mubr.f32.mxu0 0.0
      %2465 = vmatmul.mubr.f32.gmra.mrb[0].mxu0 %v1050
      %v2466 = vpop.f32.mrb[0].mxu0
      %v2467 = vadd.f32 %v1367, %v2466
      %v2468 = vpop.f32.mrb[0].mxu0
      %v2469 = vadd.f32 %v1371, %v2468
      %2470 = vmatprep.mubr.f32.mxu0 0.0
      %2471 = vmatmul.mubr.f32.gmra.mrb[0].mxu0 %v1055
      %v2472 = vpop.f32.mrb[0].mxu0
      %v2473 = vadd.f32 %v1367, %v2472
      %v2474 = vpop.f32.mrb[0].mxu0
      %v2475 = vadd.f32 %v1371, %v2474
      %2476 = vmatprep.mubr.f32.mxu0 0.0
      %2477 = vmatmul.mubr.f32.gmra.mrb[0].mxu0 %v1060
      %v2478 = vpop.f32.mrb[0].mxu0
      %v2479 = vadd.f32 %v1367, %v2478
      %v2480 = vpop.f32.mrb[0].mxu0
      %v2481 = vadd.f32 %v1371, %v2480
      %2482 = vmatprep.mubr.f32.mxu0 0.0
      %2483 = vmatmul.mubr.f32.gmra.mrb[0].mxu0 %v1065
      %v2484 = vpop.f32.mrb[0].mxu0
      %v2485 = vadd.f32 %v1367, %v2484
      %v2486 = vpop.f32.mrb[0].mxu0
      %v2487 = vadd.f32 %v1371, %v2486
      %2488 = vmatprep.mubr.f32.mxu0 0.0
      %2489 = vmatmul.mubr.f32.gmra.mrb[0].mxu0 %v1070
      %v2490 = vpop.f32.mrb[0].mxu0
      %v2491 = vadd.f32 %v1367, %v2490
      %v2492 = vpop.f32.mrb[0].mxu0
      %v2493 = vadd.f32 %v1371, %v2492
      %2494 = vmatprep.mubr.f32.mxu0 0.0
      %2495 = vmatmul.mubr.f32.gmra.mrb[0].mxu0 %v1075
      %v2496 = vpop.f32.mrb[0].mxu0
      %v2497 = vadd.f32 %v1367, %v2496
      %v2498 = vpop.f32.mrb[0].mxu0
      %v2499 = vadd.f32 %v1371, %v2498
      %2500 = vmatprep.mubr.f32.mxu0 0.0
      %2501 = vmatmul.mubr.f32.gmra.mrb[0].mxu0 %v1080
      %v2502 = vpop.f32.mrb[0].mxu0
      %v2503 = vadd.f32 %v1367, %v2502
      %v2504 = vpop.f32.mrb[0].mxu0
      %v2505 = vadd.f32 %v1371, %v2504
      %2506 = vmatprep.mubr.f32.mxu0 0.0
      %2507 = vmatmul.mubr.f32.gmra.mrb[0].mxu0 %v1085
      %v2508 = vpop.f32.mrb[0].mxu0
      %v2509 = vadd.f32 %v1367, %v2508
      %v2510 = vpop.f32.mrb[0].mxu0
      %v2511 = vadd.f32 %v1371, %v2510
      %2512 = vdwg.mxu0
      %2513 = vst [vmem:[%s240] sm:$0xff] %v1453
      %2514 = vst [vmem:[%s240 + $0x8] sm:$0xff] %v1455
      %2515 = vst [vmem:[%s240 + $0x10] sm:$0xff] %v1614
      %2516 = vst [vmem:[%s240 + $0x18] sm:$0xff] %v1616
      %2517 = vst [vmem:[%s240 + $0x20] sm:$0xff] %v1775
      %2518 = vst [vmem:[%s240 + $0x28] sm:$0xff] %v1777
      %2519 = vst.msk [vmem:[%s240 + $0x30] sm:$0xff] %vm459, %v1936
      %2520 = vst [vmem:[%s240 + $0x38] sm:$0xff] %v1459
      %2521 = vst [vmem:[%s240 + $0x40] sm:$0xff] %v1461
      %2522 = vst [vmem:[%s240 + $0x48] sm:$0xff] %v1620
      %2523 = vst [vmem:[%s240 + $0x50] sm:$0xff] %v1622
      %2524 = vst [vmem:[%s240 + $0x58] sm:$0xff] %v1781
      %2525 = vst [vmem:[%s240 + $0x60] sm:$0xff] %v1783
      %2526 = vst.msk [vmem:[%s240 + $0x68] sm:$0xff] %vm459, %v1942
      %2527 = vst [vmem:[%s240 + $0x70] sm:$0xff] %v1465
      %2528 = vst [vmem:[%s240 + $0x78] sm:$0xff] %v1467
      %2529 = vst [vmem:[%s240 + $0x80] sm:$0xff] %v1626
      %2530 = vst [vmem:[%s240 + $0x88] sm:$0xff] %v1628
      %2531 = vst [vmem:[%s240 + $0x90] sm:$0xff] %v1787
      %2532 = vst [vmem:[%s240 + $0x98] sm:$0xff] %v1789
      %2533 = vst.msk [vmem:[%s240 + $0xa0] sm:$0xff] %vm459, %v1948
      %2534 = vst [vmem:[%s240 + $0xa8] sm:$0xff] %v1471
      %2535 = vst [vmem:[%s240 + $0xb0] sm:$0xff] %v1473
      %2536 = vst [vmem:[%s240 + $0xb8] sm:$0xff] %v1632
      %2537 = vst [vmem:[%s240 + $0xc0] sm:$0xff] %v1634
      %2538 = vst [vmem:[%s240 + $0xc8] sm:$0xff] %v1793
      %2539 = vst [vmem:[%s240 + $0xd0] sm:$0xff] %v1795
      %2540 = vst.msk [vmem:[%s240 + $0xd8] sm:$0xff] %vm459, %v1954
      %2541 = vst [vmem:[%s240 + $0xe0] sm:$0xff] %v1477
      %2542 = vst [vmem:[%s240 + $0xe8] sm:$0xff] %v1479
      %2543 = vst [vmem:[%s240 + $0xf0] sm:$0xff] %v1638
      %2544 = vst [vmem:[%s240 + $0xf8] sm:$0xff] %v1640
      %2545 = vst [vmem:[%s240 + $0x100] sm:$0xff] %v1799
      %2546 = vst [vmem:[%s240 + $0x108] sm:$0xff] %v1801
      %2547 = vst.msk [vmem:[%s240 + $0x110] sm:$0xff] %vm459, %v1960
      %2548 = vst [vmem:[%s240 + $0x118] sm:$0xff] %v1483
      %2549 = vst [vmem:[%s240 + $0x120] sm:$0xff] %v1485
      %2550 = vst [vmem:[%s240 + $0x128] sm:$0xff] %v1644
      %2551 = vst [vmem:[%s240 + $0x130] sm:$0xff] %v1646
      %2552 = vst [vmem:[%s240 + $0x138] sm:$0xff] %v1805
      %2553 = vst [vmem:[%s240 + $0x140] sm:$0xff] %v1807
      %2554 = vst.msk [vmem:[%s240 + $0x148] sm:$0xff] %vm459, %v1966
      %2555 = vst [vmem:[%s240 + $0x150] sm:$0xff] %v1489
      %2556 = vst [vmem:[%s240 + $0x158] sm:$0xff] %v1491
      %2557 = vst [vmem:[%s240 + $0x160] sm:$0xff] %v1650
      %2558 = vst [vmem:[%s240 + $0x168] sm:$0xff] %v1652
      %2559 = vst [vmem:[%s240 + $0x170] sm:$0xff] %v1811
      %2560 = vst [vmem:[%s240 + $0x178] sm:$0xff] %v1813
      %2561 = vst.msk [vmem:[%s240 + $0x180] sm:$0xff] %vm459, %v1972
      %2562 = vst [vmem:[%s240 + $0x188] sm:$0xff] %v1495
      %2563 = vst [vmem:[%s240 + $0x190] sm:$0xff] %v1497
      %2564 = vst [vmem:[%s240 + $0x198] sm:$0xff] %v1656
      %2565 = vst [vmem:[%s240 + $0x1a0] sm:$0xff] %v1658
      %2566 = vst [vmem:[%s240 + $0x1a8] sm:$0xff] %v1817
      %2567 = vst [vmem:[%s240 + $0x1b0] sm:$0xff] %v1819
      %2568 = vst.msk [vmem:[%s240 + $0x1b8] sm:$0xff] %vm459, %v1978
      %2569 = vst [vmem:[%s240 + $0x1c0] sm:$0xff] %v1501
      %2570 = vst [vmem:[%s240 + $0x1c8] sm:$0xff] %v1503
      %2571 = vst [vmem:[%s240 + $0x1d0] sm:$0xff] %v1662
      %2572 = vst [vmem:[%s240 + $0x1d8] sm:$0xff] %v1664
      %2573 = vst [vmem:[%s240 + $0x1e0] sm:$0xff] %v1823
      %2574 = vst [vmem:[%s240 + $0x1e8] sm:$0xff] %v1825
      %2575 = vst.msk [vmem:[%s240 + $0x1f0] sm:$0xff] %vm459, %v1984
      %2576 = vst [vmem:[%s240 + $0x1f8] sm:$0xff] %v1507
      %2577 = vst [vmem:[%s240 + $0x200] sm:$0xff] %v1509
      %2578 = vst [vmem:[%s240 + $0x208] sm:$0xff] %v1668
      %2579 = vst [vmem:[%s240 + $0x210] sm:$0xff] %v1670
      %2580 = vst [vmem:[%s240 + $0x218] sm:$0xff] %v1829
      %2581 = vst [vmem:[%s240 + $0x220] sm:$0xff] %v1831
      %2582 = vst.msk [vmem:[%s240 + $0x228] sm:$0xff] %vm459, %v1990
      %2583 = vst [vmem:[%s240 + $0x230] sm:$0xff] %v1513
      %2584 = vst [vmem:[%s240 + $0x238] sm:$0xff] %v1515
      %2585 = vst [vmem:[%s240 + $0x240] sm:$0xff] %v1674
      %2586 = vst [vmem:[%s240 + $0x248] sm:$0xff] %v1676
      %2587 = vst [vmem:[%s240 + $0x250] sm:$0xff] %v1835
      %2588 = vst [vmem:[%s240 + $0x258] sm:$0xff] %v1837
      %2589 = vst.msk [vmem:[%s240 + $0x260] sm:$0xff] %vm459, %v1996
      %2590 = vst [vmem:[%s240 + $0x268] sm:$0xff] %v1519
      %2591 = vst [vmem:[%s240 + $0x270] sm:$0xff] %v1521
      %2592 = vst [vmem:[%s240 + $0x278] sm:$0xff] %v1680
      %2593 = vst [vmem:[%s240 + $0x280] sm:$0xff] %v1682
      %2594 = vst [vmem:[%s240 + $0x288] sm:$0xff] %v1841
      %2595 = vst [vmem:[%s240 + $0x290] sm:$0xff] %v1843
      %2596 = vst.msk [vmem:[%s240 + $0x298] sm:$0xff] %vm459, %v2002
      %2597 = vst [vmem:[%s240 + $0x2a0] sm:$0xff] %v1525
      %2598 = vst [vmem:[%s240 + $0x2a8] sm:$0xff] %v1527
      %2599 = vst [vmem:[%s240 + $0x2b0] sm:$0xff] %v1686
      %2600 = vst [vmem:[%s240 + $0x2b8] sm:$0xff] %v1688
      %2601 = vst [vmem:[%s240 + $0x2c0] sm:$0xff] %v1847
      %2602 = vst [vmem:[%s240 + $0x2c8] sm:$0xff] %v1849
      %2603 = vst.msk [vmem:[%s240 + $0x2d0] sm:$0xff] %vm459, %v2008
      %2604 = vst [vmem:[%s240 + $0x2d8] sm:$0xff] %v1531
      %2605 = vst [vmem:[%s240 + $0x2e0] sm:$0xff] %v1533
      %2606 = vst [vmem:[%s240 + $0x2e8] sm:$0xff] %v1692
      %2607 = vst [vmem:[%s240 + $0x2f0] sm:$0xff] %v1694
      %2608 = vst [vmem:[%s240 + $0x2f8] sm:$0xff] %v1853
      %2609 = vst [vmem:[%s240 + $0x300] sm:$0xff] %v1855
      %2610 = vst.msk [vmem:[%s240 + $0x308] sm:$0xff] %vm459, %v2014
      %2611 = vst [vmem:[%s240 + $0x310] sm:$0xff] %v1537
      %2612 = vst [vmem:[%s240 + $0x318] sm:$0xff] %v1539
      %2613 = vst [vmem:[%s240 + $0x320] sm:$0xff] %v1698
      %2614 = vst [vmem:[%s240 + $0x328] sm:$0xff] %v1700
      %2615 = vst [vmem:[%s240 + $0x330] sm:$0xff] %v1859
      %2616 = vst [vmem:[%s240 + $0x338] sm:$0xff] %v1861
      %2617 = vst.msk [vmem:[%s240 + $0x340] sm:$0xff] %vm459, %v2020
      %2618 = vst [vmem:[%s240 + $0x348] sm:$0xff] %v1543
      %2619 = vst [vmem:[%s240 + $0x350] sm:$0xff] %v1545
      %2620 = vst [vmem:[%s240 + $0x358] sm:$0xff] %v1704
      %2621 = vst [vmem:[%s240 + $0x360] sm:$0xff] %v1706
      %2622 = vst [vmem:[%s240 + $0x368] sm:$0xff] %v1865
      %2623 = vst [vmem:[%s240 + $0x370] sm:$0xff] %v1867
      %2624 = vst.msk [vmem:[%s240 + $0x378] sm:$0xff] %vm459, %v2026
      %2625 = vst [vmem:[%s247] sm:$0xff] %v1938
      %2626 = vst [vmem:[%s247 + $0x8] sm:$0xff] %v2097
      %2627 = vst [vmem:[%s247 + $0x10] sm:$0xff] %v2099
      %2628 = vst [vmem:[%s247 + $0x18] sm:$0xff] %v2258
      %2629 = vst [vmem:[%s247 + $0x20] sm:$0xff] %v2260
      %2630 = vst [vmem:[%s247 + $0x28] sm:$0xff] %v2419
      %2631 = vst.msk [vmem:[%s247 + $0x30] sm:$0xff] %vm459, %v2421
      %2632 = vst [vmem:[%s247 + $0x38] sm:$0xff] %v1944
      %2633 = vst [vmem:[%s247 + $0x40] sm:$0xff] %v2103
      %2634 = vst [vmem:[%s247 + $0x48] sm:$0xff] %v2105
      %2635 = vst [vmem:[%s247 + $0x50] sm:$0xff] %v2264
      %2636 = vst [vmem:[%s247 + $0x58] sm:$0xff] %v2266
      %2637 = vst [vmem:[%s247 + $0x60] sm:$0xff] %v2425
      %2638 = vst.msk [vmem:[%s247 + $0x68] sm:$0xff] %vm459, %v2427
      %2639 = vst [vmem:[%s247 + $0x70] sm:$0xff] %v1950
      %2640 = vst [vmem:[%s247 + $0x78] sm:$0xff] %v2109
      %2641 = vst [vmem:[%s247 + $0x80] sm:$0xff] %v2111
      %2642 = vst [vmem:[%s247 + $0x88] sm:$0xff] %v2270
      %2643 = vst [vmem:[%s247 + $0x90] sm:$0xff] %v2272
      %2644 = vst [vmem:[%s247 + $0x98] sm:$0xff] %v2431
      %2645 = vst.msk [vmem:[%s247 + $0xa0] sm:$0xff] %vm459, %v2433
      %2646 = vst [vmem:[%s247 + $0xa8] sm:$0xff] %v1956
      %2647 = vst [vmem:[%s247 + $0xb0] sm:$0xff] %v2115
      %2648 = vst [vmem:[%s247 + $0xb8] sm:$0xff] %v2117
      %2649 = vst [vmem:[%s247 + $0xc0] sm:$0xff] %v2276
      %2650 = vst [vmem:[%s247 + $0xc8] sm:$0xff] %v2278
      %2651 = vst [vmem:[%s247 + $0xd0] sm:$0xff] %v2437
      %2652 = vst.msk [vmem:[%s247 + $0xd8] sm:$0xff] %vm459, %v2439
      %2653 = vst [vmem:[%s247 + $0xe0] sm:$0xff] %v1962
      %2654 = vst [vmem:[%s247 + $0xe8] sm:$0xff] %v2121
      %2655 = vst [vmem:[%s247 + $0xf0] sm:$0xff] %v2123
      %2656 = vst [vmem:[%s247 + $0xf8] sm:$0xff] %v2282
      %2657 = vst [vmem:[%s247 + $0x100] sm:$0xff] %v2284
      %2658 = vst [vmem:[%s247 + $0x108] sm:$0xff] %v2443
      %2659 = vst.msk [vmem:[%s247 + $0x110] sm:$0xff] %vm459, %v2445
      %2660 = vst [vmem:[%s247 + $0x118] sm:$0xff] %v1968
      %2661 = vst [vmem:[%s247 + $0x120] sm:$0xff] %v2127
      %2662 = vst [vmem:[%s247 + $0x128] sm:$0xff] %v2129
      %2663 = vst [vmem:[%s247 + $0x130] sm:$0xff] %v2288
      %2664 = vst [vmem:[%s247 + $0x138] sm:$0xff] %v2290
      %2665 = vst [vmem:[%s247 + $0x140] sm:$0xff] %v2449
      %2666 = vst.msk [vmem:[%s247 + $0x148] sm:$0xff] %vm459, %v2451
      %2667 = vst [vmem:[%s247 + $0x150] sm:$0xff] %v1974
      %2668 = vst [vmem:[%s247 + $0x158] sm:$0xff] %v2133
      %2669 = vst [vmem:[%s247 + $0x160] sm:$0xff] %v2135
      %2670 = vst [vmem:[%s247 + $0x168] sm:$0xff] %v2294
      %2671 = vst [vmem:[%s247 + $0x170] sm:$0xff] %v2296
      %2672 = vst [vmem:[%s247 + $0x178] sm:$0xff] %v2455
      %2673 = vst.msk [vmem:[%s247 + $0x180] sm:$0xff] %vm459, %v2457
      %2674 = vst [vmem:[%s247 + $0x188] sm:$0xff] %v1980
      %2675 = vst [vmem:[%s247 + $0x190] sm:$0xff] %v2139
      %2676 = vst [vmem:[%s247 + $0x198] sm:$0xff] %v2141
      %2677 = vst [vmem:[%s247 + $0x1a0] sm:$0xff] %v2300
      %2678 = vst [vmem:[%s247 + $0x1a8] sm:$0xff] %v2302
      %2679 = vst [vmem:[%s247 + $0x1b0] sm:$0xff] %v2461
      %2680 = vst.msk [vmem:[%s247 + $0x1b8] sm:$0xff] %vm459, %v2463
      %2681 = vst [vmem:[%s247 + $0x1c0] sm:$0xff] %v1986
      %2682 = vst [vmem:[%s247 + $0x1c8] sm:$0xff] %v2145
      %2683 = vst [vmem:[%s247 + $0x1d0] sm:$0xff] %v2147
      %2684 = vst [vmem:[%s247 + $0x1d8] sm:$0xff] %v2306
      %2685 = vst [vmem:[%s247 + $0x1e0] sm:$0xff] %v2308
      %2686 = vst [vmem:[%s247 + $0x1e8] sm:$0xff] %v2467
      %2687 = vst.msk [vmem:[%s247 + $0x1f0] sm:$0xff] %vm459, %v2469
      %2688 = vst [vmem:[%s247 + $0x1f8] sm:$0xff] %v1992
      %2689 = vst [vmem:[%s247 + $0x200] sm:$0xff] %v2151
      %2690 = vst [vmem:[%s247 + $0x208] sm:$0xff] %v2153
      %2691 = vst [vmem:[%s247 + $0x210] sm:$0xff] %v2312
      %2692 = vst [vmem:[%s247 + $0x218] sm:$0xff] %v2314
      %2693 = vst [vmem:[%s247 + $0x220] sm:$0xff] %v2473
      %2694 = vst.msk [vmem:[%s247 + $0x228] sm:$0xff] %vm459, %v2475
      %2695 = vst [vmem:[%s247 + $0x230] sm:$0xff] %v1998
      %2696 = vst [vmem:[%s247 + $0x238] sm:$0xff] %v2157
      %2697 = vst [vmem:[%s247 + $0x240] sm:$0xff] %v2159
      %2698 = vst [vmem:[%s247 + $0x248] sm:$0xff] %v2318
      %2699 = vst [vmem:[%s247 + $0x250] sm:$0xff] %v2320
      %2700 = vst [vmem:[%s247 + $0x258] sm:$0xff] %v2479
      %2701 = vst.msk [vmem:[%s247 + $0x260] sm:$0xff] %vm459, %v2481
      %2702 = vst [vmem:[%s247 + $0x268] sm:$0xff] %v2004
      %2703 = vst [vmem:[%s247 + $0x270] sm:$0xff] %v2163
      %2704 = vst [vmem:[%s247 + $0x278] sm:$0xff] %v2165
      %2705 = vst [vmem:[%s247 + $0x280] sm:$0xff] %v2324
      %2706 = vst [vmem:[%s247 + $0x288] sm:$0xff] %v2326
      %2707 = vst [vmem:[%s247 + $0x290] sm:$0xff] %v2485
      %2708 = vst.msk [vmem:[%s247 + $0x298] sm:$0xff] %vm459, %v2487
      %2709 = vst [vmem:[%s247 + $0x2a0] sm:$0xff] %v2010
      %2710 = vst [vmem:[%s247 + $0x2a8] sm:$0xff] %v2169
      %2711 = vst [vmem:[%s247 + $0x2b0] sm:$0xff] %v2171
      %2712 = vst [vmem:[%s247 + $0x2b8] sm:$0xff] %v2330
      %2713 = vst [vmem:[%s247 + $0x2c0] sm:$0xff] %v2332
      %2714 = vst [vmem:[%s247 + $0x2c8] sm:$0xff] %v2491
      %2715 = vst.msk [vmem:[%s247 + $0x2d0] sm:$0xff] %vm459, %v2493
      %2716 = vst [vmem:[%s247 + $0x2d8] sm:$0xff] %v2016
      %2717 = vst [vmem:[%s247 + $0x2e0] sm:$0xff] %v2175
      %2718 = vst [vmem:[%s247 + $0x2e8] sm:$0xff] %v2177
      %2719 = vst [vmem:[%s247 + $0x2f0] sm:$0xff] %v2336
      %2720 = vst [vmem:[%s247 + $0x2f8] sm:$0xff] %v2338
      %2721 = vst [vmem:[%s247 + $0x300] sm:$0xff] %v2497
      %2722 = vst.msk [vmem:[%s247 + $0x308] sm:$0xff] %vm459, %v2499
      %2723 = vst [vmem:[%s247 + $0x310] sm:$0xff] %v2022
      %2724 = vst [vmem:[%s247 + $0x318] sm:$0xff] %v2181
      %2725 = vst [vmem:[%s247 + $0x320] sm:$0xff] %v2183
      %2726 = vst [vmem:[%s247 + $0x328] sm:$0xff] %v2342
      %2727 = vst [vmem:[%s247 + $0x330] sm:$0xff] %v2344
      %2728 = vst [vmem:[%s247 + $0x338] sm:$0xff] %v2503
      %2729 = vst.msk [vmem:[%s247 + $0x340] sm:$0xff] %vm459, %v2505
      %2730 = vst [vmem:[%s247 + $0x348] sm:$0xff] %v2028
      %2731 = vst [vmem:[%s247 + $0x350] sm:$0xff] %v2187
      %2732 = vst [vmem:[%s247 + $0x358] sm:$0xff] %v2189
      %2733 = vst [vmem:[%s247 + $0x360] sm:$0xff] %v2348
      %2734 = vst [vmem:[%s247 + $0x368] sm:$0xff] %v2350
      %2735 = vst [vmem:[%s247 + $0x370] sm:$0xff] %v2509
      %2736 = vst.msk [vmem:[%s247 + $0x378] sm:$0xff] %vm459, %v2511
      %s2737 = smul.u32 16, %s17
      %p2738 = scmp.lt.s32.totalorder %s2737, 63
      %s2739 = scalar_select %p2738, %s2737, 63
      %s2740 = smul.addr %s2739, 7
      %s2741 = smul.addr %s2740, 8
      %s2742 = scalar_lea.vmem %s4, %s2741
      %s2743 = smul.u32 16, %s17
      %p2744 = scmp.lt.s32.totalorder %s2743, 63
      %s2745 = scalar_select %p2744, %s2743, 63
      %s2746 = smul.addr %s2745, 7
      %s2747 = smul.addr %s2746, 8
      %s2748 = scalar_lea.vmem %s5, %s2747
      // Predicated region
      $region37: #{fs_autoencoder_forward.1} parent=35 // pred_check
        %p2749 = pneg %p124
      $region38: #{fs_autoencoder_forward.1} parent=35 // pred_check_branch
        %2751 = sbr.rel (%p2749) target = $region40
      $region39: #{fs_autoencoder_forward.1} parent=35 // pred_region
        %s2752 = smul.u32 16, %s17
      $region40: #{fs_autoencoder_forward.1} parent=35 // pred_fallthru
        _
      // Predicated region
      $region41: #{fs_autoencoder_forward.1} parent=35 // pred_check
        %p2753 = pneg %p150
      $region42: #{fs_autoencoder_forward.1} parent=35 // pred_check_branch
        %2755 = sbr.rel (%p2753) target = $region44
      $region43: #{fs_autoencoder_forward.1} parent=35 // pred_region
        %s2756 = smul.u32 16, %s17
      $region44: #{fs_autoencoder_forward.1} parent=35 // pred_fallthru
        _
    $region36: #{fs_autoencoder_forward.1} parent=5 // pred_fallthru
      _
    %p2757 = scmp.le.s32.totalorder 2, %s12
    // Predicated region
    $region45: #{fs_autoencoder_forward.1} parent=5 // pred_check
      %p2758 = pneg %p2757
    $region46: #{fs_autoencoder_forward.1} parent=5 // pred_check_branch
      %2760 = sbr.rel (%p2758) target = $region48
    $region47: #{fs_autoencoder_forward.1} parent=5 // pred_region
      %s2761 = ssub.s32 %s12, 2
      // Predicated region
      $region49: #{fs_autoencoder_forward.1} parent=47 // pred_check
        %p2762 = pneg %p130
      $region50: #{fs_autoencoder_forward.1} parent=47 // pred_check_branch
        %2764 = sbr.rel (%p2762) target = $region52
      $region51: #{fs_autoencoder_forward.1} parent=47 // pred_region
        %s2765 = smul.u32 16, %s18
        %p2766 = scmp.lt.s32.totalorder %s2765, 63
        %s2767 = scalar_select %p2766, %s2765, 63
        %s2768 = smul.addr %s2767, 7
        %s2769 = smul.addr %s2768, 8
        %s2770 = scalar_lea.vmem %s4, %s2769
      $region52: #{fs_autoencoder_forward.1} parent=47 // pred_fallthru
        _
      // Predicated region
      $region53: #{fs_autoencoder_forward.1} parent=47 // pred_check
        %p2771 = pneg %p156
      $region54: #{fs_autoencoder_forward.1} parent=47 // pred_check_branch
        %2773 = sbr.rel (%p2771) target = $region56
      $region55: #{fs_autoencoder_forward.1} parent=47 // pred_region
        %s2774 = smul.u32 16, %s18
        %p2775 = scmp.lt.s32.totalorder %s2774, 63
        %s2776 = scalar_select %p2775, %s2774, 63
        %s2777 = smul.addr %s2776, 7
        %s2778 = smul.addr %s2777, 8
        %s2779 = scalar_lea.vmem %s5, %s2778
      $region56: #{fs_autoencoder_forward.1} parent=47 // pred_fallthru
        _
    $region48: #{fs_autoencoder_forward.1} parent=5 // pred_fallthru
      _
  $region6: #{fs_autoencoder_forward.1} parent=0 // loop_footer
    %s16 = sadd.s32 1, %s12
  $region7: #{fs_autoencoder_forward.1} parent=0 // loop_footer_branch
    %11 = sbr.rel target = $region3
  $region8: #{fs_autoencoder_forward.1} parent=0 // loop_exit
    _

</llo_original>
